<compile_context>
chip_gen: v7x
topology: tpu7x:2x2x1
jax: 0.10.0
libtpu: 0.0.40
codegen_flags: <defaults>
</compile_context>

<pallas_src>
import functools

import jax
import jax.numpy as jnp
from jax.experimental import pallas as pl
from jax.experimental.pallas import tpu as pltpu

NEG_SLOPE = 0.01  # torch.nn.LeakyReLU default


# ----------------------------------------------------------------------------
# Pallas kernel: fused  out^T = W^T @ patches^T + bias [+ identity] [-> LeakyReLU]
# ----------------------------------------------------------------------------
def _fused_convT_kernel(p_ref, w_ref, b_ref, *rest, relu, residual):
    if residual:
        id_ref, o_ref = rest
    else:
        (o_ref,) = rest

    # (Cout, K) @ (K, M_tile) -> (Cout, M_tile); bf16 operands, f32 accumulate.
    acc = jnp.dot(w_ref[...], p_ref[...], preferred_element_type=jnp.float32)
    acc = acc + b_ref[...]                       # (Cout, 1) broadcast over lanes
    if residual:
        acc = acc + id_ref[...]
    if relu:
        acc = jnp.maximum(acc, NEG_SLOPE * acc)  # LeakyReLU
    o_ref[...] = acc.astype(o_ref.dtype)


def fused_convT(patchesT, w_t, bias, identityT=None, *, relu):
    """patchesT: (K, M) bf16, w_t: (Cout, K) bf16, bias: (Cout, 1) f32,
    identityT: (Cout, M) f32 or None.  Returns (Cout, M) f32 (lane-dense)."""
    K, M = patchesT.shape
    Cout = w_t.shape[0]
    residual = identityT is not None

    # Whole-M tiles.  2-way "parallel" split along M (128-aligned halves) so
    # v7x's two TensorCores share the work; single step on odd-sized M.
    grid_m = 2 if (M % 256 == 0) else 1
    TM = M // grid_m

    in_specs = [
        pl.BlockSpec((K, TM), lambda i: (0, i)),     # patches^T, M in lanes
        pl.BlockSpec((Cout, K), lambda i: (0, 0)),   # weight: constant -> VMEM resident
        pl.BlockSpec((Cout, 1), lambda i: (0, 0)),   # bias:   constant -> VMEM resident
    ]
    args = [patchesT, w_t, bias]
    if residual:
        in_specs.append(pl.BlockSpec((Cout, TM), lambda i: (0, i)))
        args.append(identityT)

    kernel = functools.partial(_fused_convT_kernel, relu=relu, residual=residual)

    return pl.pallas_call(
        kernel,
        out_shape=jax.ShapeDtypeStruct((Cout, M), jnp.float32),
        grid=(grid_m,),
        in_specs=in_specs,
        out_specs=pl.BlockSpec((Cout, TM), lambda i: (0, i)),
        compiler_params=pltpu.CompilerParams(
            dimension_semantics=("parallel",),
            vmem_limit_bytes=32 * 1024 * 1024,
        ),
    )(*args)


# ----------------------------------------------------------------------------
# JAX glue: transposed im2col + conv wrapper (layout only; compute is in kernel)
# ----------------------------------------------------------------------------
def _im2colT(x_cnhw, kh, kw, stride, padding):
    """x_cnhw: (C, N, H, W).  Returns patches^T of shape (K=kh*kw*C, M),
    rows ordered (dy, dx, c); columns (M) ordered (n, y, x)."""
    c, n, h, w = x_cnhw.shape
    xp = jnp.pad(x_cnhw, ((0, 0), (0, 0), (padding, padding), (padding, padding)))
    h_out = (h + 2 * padding - kh) // stride + 1
    w_out = (w + 2 * padding - kw) // stride + 1
    rows = []
    for dy in range(kh):
        for dx in range(kw):
            v = xp[:, :, dy:dy + stride * h_out:stride, dx:dx + stride * w_out:stride]
            rows.append(v.reshape(c, n * h_out * w_out))
    return jnp.concatenate(rows, axis=0), (n, h_out, w_out)


def conv2dT(x_cnhw, w_oihw, bias, *, stride, padding, relu, identity_cnhw=None):
    """Convolution on channel-major activations.
    x_cnhw: (Cin, N, H, W) f32.  w_oihw: PyTorch layout (Cout, Cin, KH, KW).
    Returns (Cout, N, H_out, W_out) f32."""
    cout, cin, kh, kw = w_oihw.shape
    patchesT, (n, h_out, w_out) = _im2colT(x_cnhw, kh, kw, stride, padding)
    # (Cout, Cin, KH, KW) -> (Cout, KH, KW, Cin) -> (Cout, KH*KW*Cin):
    # matches the (dy, dx, c) row ordering of patches^T.
    w_t = jnp.transpose(w_oihw, (0, 2, 3, 1)).reshape(cout, kh * kw * cin)
    idT = None
    if identity_cnhw is not None:
        idT = identity_cnhw.reshape(cout, -1)        # residual kept in f32
    outT = fused_convT(
        patchesT.astype(jnp.bfloat16),               # MXU-native, halves A bytes
        w_t.astype(jnp.bfloat16),
        bias.reshape(cout, 1).astype(jnp.float32),
        idT,
        relu=relu,
    )
    return outT.reshape(cout, n, h_out, w_out)


# ----------------------------------------------------------------------------
# Parameter init (deterministic, synthetic) + spectral norm
# ----------------------------------------------------------------------------
def _spectral_normalize(w_oihw, iters=50):
    wm = w_oihw.reshape(w_oihw.shape[0], -1)
    v = jnp.ones((wm.shape[1],), jnp.float32) / jnp.sqrt(float(wm.shape[1]))
    u = jnp.ones((wm.shape[0],), jnp.float32) / jnp.sqrt(float(wm.shape[0]))
    for _ in range(iters):
        u = wm @ v
        u = u / (jnp.linalg.norm(u) + 1e-12)
        v = wm.T @ u
        v = v / (jnp.linalg.norm(v) + 1e-12)
    sigma = u @ (wm @ v)
    return w_oihw / sigma


def _conv_init(key, cin, cout, k, scale=0.1):
    kw_, kb_ = jax.random.split(key)
    w = jax.random.normal(kw_, (cout, cin, k, k), jnp.float32) * scale
    b = jax.random.normal(kb_, (cout,), jnp.float32) * scale
    return w, b


def _block_init(key, channels, k=3):
    k1, k2, k3 = jax.random.split(key, 3)
    w1, b1 = _conv_init(k1, channels, channels, k)
    w2, b2 = _conv_init(k2, channels, channels, k)
    ws, bs = _conv_init(k3, channels, channels, k)
    return {
        "w1": _spectral_normalize(w1), "b1": b1,   # spectral_norm(conv1)
        "w2": _spectral_normalize(w2), "b2": b2,   # spectral_norm(conv2)
        "ws": ws, "bs": bs,                        # conv_stride (no SN)
    }


def init_params(key, channels, num_classes):
    k0, k1, k2, k3, k4 = jax.random.split(key, 5)
    conv1_w, conv1_b = _conv_init(k0, 3, channels, 3)
    top_w = jax.random.normal(k4, (num_classes, channels * 6 * 6), jnp.float32) * 0.05
    top_b = jax.random.normal(jax.random.fold_in(k4, 1), (num_classes,), jnp.float32) * 0.05
    return {
        "conv1_w": conv1_w, "conv1_b": conv1_b,
        "layer1": _block_init(k1, channels),
        "layer1_2": _block_init(k2, channels),
        "layer2": _block_init(k3, channels),
        # layer3 / layer4 exist in the PyTorch module but are unused in forward().
        "top_w": top_w, "top_b": top_b,
    }


# ----------------------------------------------------------------------------
# Forward pass (mirrors CustomResNet.forward / CustomBlock.forward)
# ----------------------------------------------------------------------------
def custom_block(x, p, *, stride, padding):
    identity = x
    y = conv2dT(x, p["w1"], p["b1"], stride=1, padding=1, relu=True)
    # conv2 -> add identity -> LeakyReLU, fused in one kernel call
    y = conv2dT(y, p["w2"], p["b2"], stride=1, padding=1, relu=True,
                identity_cnhw=identity)
    y = conv2dT(y, p["ws"], p["bs"], stride=stride, padding=padding, relu=True)
    return y


def custom_resnet_forward(params, x_nchw):
    x = jnp.transpose(x_nchw, (1, 0, 2, 3))                 # NCHW -> (C, N, H, W)
    x = conv2dT(x, params["conv1_w"], params["conv1_b"],
                stride=1, padding=1, relu=True)
    x = custom_block(x, params["layer1"], stride=2, padding=0)    # 32 -> 15
    x = custom_block(x, params["layer1_2"], stride=1, padding=0)  # 15 -> 13
    x = custom_block(x, params["layer2"], stride=2, padding=0)    # 13 -> 6
    # torch.flatten(x, 1) on an NCHW tensor:
    n = x.shape[1]
    flat = jnp.transpose(x, (1, 0, 2, 3)).reshape(n, -1)    # (N, C*6*6)
    # (2, 288) @ (288, 10): a dedicated pallas_call is pure launch/DMA
    # overhead -> plain XLA dot per perf review.
    logits = jnp.dot(flat, params["top_w"].T) + params["top_b"]
    return logits


# ----------------------------------------------------------------------------
if __name__ == "__main__":
    channels, num_classes = 8, 10
    key = jax.random.PRNGKey(0)
    params = init_params(key, channels, num_classes)

    # Spatial size must be 32x32 so that the final feature map is 6x6,
    # matching Linear(channels * 6 * 6, num_classes).
    x_nchw = jax.random.normal(jax.random.fold_in(key, 123),
                               (2, 3, 32, 32), jnp.float32)

    fwd = jax.jit(custom_resnet_forward)
    logits = fwd(params, x_nchw)
    jax.block_until_ready(logits)

    assert logits.shape == (2, num_classes), logits.shape
    assert bool(jnp.all(jnp.isfinite(logits)))
    print("KERNEL_OK")
</pallas_src>

<mosaic_0001>
module attributes {stable_mosaic.version = 11 : i64} {
  func.func @_fused_convT_kernel(%arg0: i32, %arg1: memref<27x1024xbf16, #tpu.memory_space<vmem>>, %arg2: memref<8x27xbf16, #tpu.memory_space<vmem>>, %arg3: memref<8x1xf32, #tpu.memory_space<vmem>>, %arg4: memref<8x1024xf32, #tpu.memory_space<vmem>>) attributes {dimension_semantics = [#tpu.dimension_semantics<parallel>], iteration_bounds = array<i64: 2>, scalar_prefetch = 0 : i64, scratch_operands = 0 : i64, tpu.core_type = #tpu.core_type<tc>, window_params = [{transform_indices = @transform_0, window_bounds = array<i64: 27, 1024>}, {pipeline_mode = #tpu.pipeline_mode<synchronous>, transform_indices = @transform_1, window_bounds = array<i64: 8, 27>}, {pipeline_mode = #tpu.pipeline_mode<synchronous>, transform_indices = @transform_2, window_bounds = array<i64: 8, 1>}, {transform_indices = @transform_3, window_bounds = array<i64: 8, 1024>}]} {
    %c0 = arith.constant 0 : index
    %c0_0 = arith.constant 0 : index
    %0 = vector.load %arg2[%c0, %c0_0] : memref<8x27xbf16, #tpu.memory_space<vmem>>, vector<8x27xbf16>
    %c0_1 = arith.constant 0 : index
    %c0_2 = arith.constant 0 : index
    %1 = vector.load %arg1[%c0_1, %c0_2] : memref<27x1024xbf16, #tpu.memory_space<vmem>>, vector<27x1024xbf16>
    %cst = arith.constant dense<0.000000e+00> : vector<8x1024xf32>
    %2 = tpu.matmul %0, %1, %cst {dimension_numbers = #tpu.dot_dimension_numbers<[1], [0], [0], [1], [0, 0, 1, 1], [], []>} : vector<8x27xbf16>, vector<27x1024xbf16>, vector<8x1024xf32> -> vector<8x1024xf32>
    %c0_3 = arith.constant 0 : index
    %c0_4 = arith.constant 0 : index
    %3 = vector.load %arg3[%c0_3, %c0_4] : memref<8x1xf32, #tpu.memory_space<vmem>>, vector<8x1xf32>
    %4 = vector.broadcast %3 : vector<8x1xf32> to vector<8x1024xf32>
    %5 = arith.addf %2, %4 : vector<8x1024xf32>
    %cst_5 = arith.constant 0.00999999977 : f32
    %6 = vector.broadcast %cst_5 : f32 to vector<8x1024xf32>
    %7 = arith.mulf %6, %5 : vector<8x1024xf32>
    %8 = arith.maximumf %5, %7 : vector<8x1024xf32>
    %c0_6 = arith.constant 0 : index
    %c0_7 = arith.constant 0 : index
    %9 = vector.load %arg4[%c0_6, %c0_7] : memref<8x1024xf32, #tpu.memory_space<vmem>>, vector<8x1024xf32>
    tpu.vector_store %arg4[%c0_6, %c0_7], %8 {strides = array<i32>} : memref<8x1024xf32, #tpu.memory_space<vmem>>, vector<8x1024xf32>,
    return
  }
  func.func @transform_0(%arg0: i32) -> (i32, i32) {
    %c0_i32 = arith.constant 0 : i32
    %c0_i32_0 = arith.constant 0 : i32
    return %c0_i32, %arg0 : i32, i32
  }
  func.func @transform_1(%arg0: i32) -> (i32, i32) {
    %c0_i32 = arith.constant 0 : i32
    %c0_i32_0 = arith.constant 0 : i32
    %c0_i32_1 = arith.constant 0 : i32
    return %c0_i32, %c0_i32_0 : i32, i32
  }
  func.func @transform_2(%arg0: i32) -> (i32, i32) {
    %c0_i32 = arith.constant 0 : i32
    %c0_i32_0 = arith.constant 0 : i32
    %c0_i32_1 = arith.constant 0 : i32
    return %c0_i32, %c0_i32_0 : i32, i32
  }
  func.func @transform_3(%arg0: i32) -> (i32, i32) {
    %c0_i32 = arith.constant 0 : i32
    %c0_i32_0 = arith.constant 0 : i32
    return %c0_i32, %arg0 : i32, i32
  }
}

module attributes {stable_mosaic.version = 11 : i64} {
  func.func @_fused_convT_kernel(%arg0: i32, %arg1: memref<72x1024xbf16, #tpu.memory_space<vmem>>, %arg2: memref<8x72xbf16, #tpu.memory_space<vmem>>, %arg3: memref<8x1xf32, #tpu.memory_space<vmem>>, %arg4: memref<8x1024xf32, #tpu.memory_space<vmem>>, %arg5: memref<8x1024xf32, #tpu.memory_space<vmem>>) attributes {dimension_semantics = [#tpu.dimension_semantics<parallel>], iteration_bounds = array<i64: 2>, scalar_prefetch = 0 : i64, scratch_operands = 0 : i64, tpu.core_type = #tpu.core_type<tc>, window_params = [{transform_indices = @transform_0, window_bounds = array<i64: 72, 1024>}, {pipeline_mode = #tpu.pipeline_mode<synchronous>, transform_indices = @transform_1, window_bounds = array<i64: 8, 72>}, {pipeline_mode = #tpu.pipeline_mode<synchronous>, transform_indices = @transform_2, window_bounds = array<i64: 8, 1>}, {transform_indices = @transform_3, window_bounds = array<i64: 8, 1024>}, {transform_indices = @transform_4, window_bounds = array<i64: 8, 1024>}]} {
    %c0 = arith.constant 0 : index
    %c0_0 = arith.constant 0 : index
    %0 = vector.load %arg2[%c0, %c0_0] : memref<8x72xbf16, #tpu.memory_space<vmem>>, vector<8x72xbf16>
    %c0_1 = arith.constant 0 : index
    %c0_2 = arith.constant 0 : index
    %1 = vector.load %arg1[%c0_1, %c0_2] : memref<72x1024xbf16, #tpu.memory_space<vmem>>, vector<72x1024xbf16>
    %cst = arith.constant dense<0.000000e+00> : vector<8x1024xf32>
    %2 = tpu.matmul %0, %1, %cst {dimension_numbers = #tpu.dot_dimension_numbers<[1], [0], [0], [1], [0, 0, 1, 1], [], []>} : vector<8x72xbf16>, vector<72x1024xbf16>, vector<8x1024xf32> -> vector<8x1024xf32>
    %c0_3 = arith.constant 0 : index
    %c0_4 = arith.constant 0 : index
    %3 = vector.load %arg3[%c0_3, %c0_4] : memref<8x1xf32, #tpu.memory_space<vmem>>, vector<8x1xf32>
    %4 = vector.broadcast %3 : vector<8x1xf32> to vector<8x1024xf32>
    %5 = arith.addf %2, %4 : vector<8x1024xf32>
    %c0_5 = arith.constant 0 : index
    %c0_6 = arith.constant 0 : index
    %6 = vector.load %arg4[%c0_5, %c0_6] : memref<8x1024xf32, #tpu.memory_space<vmem>>, vector<8x1024xf32>
    %7 = arith.addf %5, %6 : vector<8x1024xf32>
    %cst_7 = arith.constant 0.00999999977 : f32
    %8 = vector.broadcast %cst_7 : f32 to vector<8x1024xf32>
    %9 = arith.mulf %8, %7 : vector<8x1024xf32>
    %10 = arith.maximumf %7, %9 : vector<8x1024xf32>
    %c0_8 = arith.constant 0 : index
    %c0_9 = arith.constant 0 : index
    %11 = vector.load %arg5[%c0_8, %c0_9] : memref<8x1024xf32, #tpu.memory_space<vmem>>, vector<8x1024xf32>
    tpu.vector_store %arg5[%c0_8, %c0_9], %10 {strides = array<i32>} : memref<8x1024xf32, #tpu.memory_space<vmem>>, vector<8x1024xf32>,
    return
  }
  func.func @transform_0(%arg0: i32) -> (i32, i32) {
    %c0_i32 = arith.constant 0 : i32
    %c0_i32_0 = arith.constant 0 : i32
    return %c0_i32, %arg0 : i32, i32
  }
  func.func @transform_1(%arg0: i32) -> (i32, i32) {
    %c0_i32 = arith.constant 0 : i32
    %c0_i32_0 = arith.constant 0 : i32
    %c0_i32_1 = arith.constant 0 : i32
    return %c0_i32, %c0_i32_0 : i32, i32
  }
  func.func @transform_2(%arg0: i32) -> (i32, i32) {
    %c0_i32 = arith.constant 0 : i32
    %c0_i32_0 = arith.constant 0 : i32
    %c0_i32_1 = arith.constant 0 : i32
    return %c0_i32, %c0_i32_0 : i32, i32
  }
  func.func @transform_3(%arg0: i32) -> (i32, i32) {
    %c0_i32 = arith.constant 0 : i32
    %c0_i32_0 = arith.constant 0 : i32
    return %c0_i32, %arg0 : i32, i32
  }
  func.func @transform_4(%arg0: i32) -> (i32, i32) {
    %c0_i32 = arith.constant 0 : i32
    %c0_i32_0 = arith.constant 0 : i32
    return %c0_i32, %arg0 : i32, i32
  }
}

module attributes {stable_mosaic.version = 11 : i64} {
  func.func @_fused_convT_kernel(%arg0: i32, %arg1: memref<72x1024xbf16, #tpu.memory_space<vmem>>, %arg2: memref<8x72xbf16, #tpu.memory_space<vmem>>, %arg3: memref<8x1xf32, #tpu.memory_space<vmem>>, %arg4: memref<8x1024xf32, #tpu.memory_space<vmem>>) attributes {dimension_semantics = [#tpu.dimension_semantics<parallel>], iteration_bounds = array<i64: 2>, scalar_prefetch = 0 : i64, scratch_operands = 0 : i64, tpu.core_type = #tpu.core_type<tc>, window_params = [{transform_indices = @transform_0, window_bounds = array<i64: 72, 1024>}, {pipeline_mode = #tpu.pipeline_mode<synchronous>, transform_indices = @transform_1, window_bounds = array<i64: 8, 72>}, {pipeline_mode = #tpu.pipeline_mode<synchronous>, transform_indices = @transform_2, window_bounds = array<i64: 8, 1>}, {transform_indices = @transform_3, window_bounds = array<i64: 8, 1024>}]} {
    %c0 = arith.constant 0 : index
    %c0_0 = arith.constant 0 : index
    %0 = vector.load %arg2[%c0, %c0_0] : memref<8x72xbf16, #tpu.memory_space<vmem>>, vector<8x72xbf16>
    %c0_1 = arith.constant 0 : index
    %c0_2 = arith.constant 0 : index
    %1 = vector.load %arg1[%c0_1, %c0_2] : memref<72x1024xbf16, #tpu.memory_space<vmem>>, vector<72x1024xbf16>
    %cst = arith.constant dense<0.000000e+00> : vector<8x1024xf32>
    %2 = tpu.matmul %0, %1, %cst {dimension_numbers = #tpu.dot_dimension_numbers<[1], [0], [0], [1], [0, 0, 1, 1], [], []>} : vector<8x72xbf16>, vector<72x1024xbf16>, vector<8x1024xf32> -> vector<8x1024xf32>
    %c0_3 = arith.constant 0 : index
    %c0_4 = arith.constant 0 : index
    %3 = vector.load %arg3[%c0_3, %c0_4] : memref<8x1xf32, #tpu.memory_space<vmem>>, vector<8x1xf32>
    %4 = vector.broadcast %3 : vector<8x1xf32> to vector<8x1024xf32>
    %5 = arith.addf %2, %4 : vector<8x1024xf32>
    %cst_5 = arith.constant 0.00999999977 : f32
    %6 = vector.broadcast %cst_5 : f32 to vector<8x1024xf32>
    %7 = arith.mulf %6, %5 : vector<8x1024xf32>
    %8 = arith.maximumf %5, %7 : vector<8x1024xf32>
    %c0_6 = arith.constant 0 : index
    %c0_7 = arith.constant 0 : index
    %9 = vector.load %arg4[%c0_6, %c0_7] : memref<8x1024xf32, #tpu.memory_space<vmem>>, vector<8x1024xf32>
    tpu.vector_store %arg4[%c0_6, %c0_7], %8 {strides = array<i32>} : memref<8x1024xf32, #tpu.memory_space<vmem>>, vector<8x1024xf32>,
    return
  }
  func.func @transform_0(%arg0: i32) -> (i32, i32) {
    %c0_i32 = arith.constant 0 : i32
    %c0_i32_0 = arith.constant 0 : i32
    return %c0_i32, %arg0 : i32, i32
  }
  func.func @transform_1(%arg0: i32) -> (i32, i32) {
    %c0_i32 = arith.constant 0 : i32
    %c0_i32_0 = arith.constant 0 : i32
    %c0_i32_1 = arith.constant 0 : i32
    return %c0_i32, %c0_i32_0 : i32, i32
  }
  func.func @transform_2(%arg0: i32) -> (i32, i32) {
    %c0_i32 = arith.constant 0 : i32
    %c0_i32_0 = arith.constant 0 : i32
    %c0_i32_1 = arith.constant 0 : i32
    return %c0_i32, %c0_i32_0 : i32, i32
  }
  func.func @transform_3(%arg0: i32) -> (i32, i32) {
    %c0_i32 = arith.constant 0 : i32
    %c0_i32_0 = arith.constant 0 : i32
    return %c0_i32, %arg0 : i32, i32
  }
}

module attributes {stable_mosaic.version = 11 : i64} {
  func.func @_fused_convT_kernel(%arg0: i32, %arg1: memref<72x450xbf16, #tpu.memory_space<vmem>>, %arg2: memref<8x72xbf16, #tpu.memory_space<vmem>>, %arg3: memref<8x1xf32, #tpu.memory_space<vmem>>, %arg4: memref<8x450xf32, #tpu.memory_space<vmem>>) attributes {dimension_semantics = [#tpu.dimension_semantics<parallel>], iteration_bounds = array<i64: 1>, scalar_prefetch = 0 : i64, scratch_operands = 0 : i64, tpu.core_type = #tpu.core_type<tc>, window_params = [{transform_indices = @transform_0, window_bounds = array<i64: 72, 450>}, {pipeline_mode = #tpu.pipeline_mode<synchronous>, transform_indices = @transform_1, window_bounds = array<i64: 8, 72>}, {pipeline_mode = #tpu.pipeline_mode<synchronous>, transform_indices = @transform_2, window_bounds = array<i64: 8, 1>}, {transform_indices = @transform_3, window_bounds = array<i64: 8, 450>}]} {
    %c0 = arith.constant 0 : index
    %c0_0 = arith.constant 0 : index
    %0 = vector.load %arg2[%c0, %c0_0] : memref<8x72xbf16, #tpu.memory_space<vmem>>, vector<8x72xbf16>
    %c0_1 = arith.constant 0 : index
    %c0_2 = arith.constant 0 : index
    %1 = vector.load %arg1[%c0_1, %c0_2] : memref<72x450xbf16, #tpu.memory_space<vmem>>, vector<72x450xbf16>
    %cst = arith.constant dense<0.000000e+00> : vector<8x450xf32>
    %2 = tpu.matmul %0, %1, %cst {dimension_numbers = #tpu.dot_dimension_numbers<[1], [0], [0], [1], [0, 0, 1, 1], [], []>} : vector<8x72xbf16>, vector<72x450xbf16>, vector<8x450xf32> -> vector<8x450xf32>
    %c0_3 = arith.constant 0 : index
    %c0_4 = arith.constant 0 : index
    %3 = vector.load %arg3[%c0_3, %c0_4] : memref<8x1xf32, #tpu.memory_space<vmem>>, vector<8x1xf32>
    %4 = vector.broadcast %3 : vector<8x1xf32> to vector<8x450xf32>
    %5 = arith.addf %2, %4 : vector<8x450xf32>
    %cst_5 = arith.constant 0.00999999977 : f32
    %6 = vector.broadcast %cst_5 : f32 to vector<8x450xf32>
    %7 = arith.mulf %6, %5 : vector<8x450xf32>
    %8 = arith.maximumf %5, %7 : vector<8x450xf32>
    %c0_6 = arith.constant 0 : index
    %c0_7 = arith.constant 0 : index
    %9 = vector.load %arg4[%c0_6, %c0_7] : memref<8x450xf32, #tpu.memory_space<vmem>>, vector<8x450xf32>
    tpu.vector_store %arg4[%c0_6, %c0_7], %8 {strides = array<i32>} : memref<8x450xf32, #tpu.memory_space<vmem>>, vector<8x450xf32>,
    return
  }
  func.func @transform_0(%arg0: i32) -> (i32, i32) {
    %c0_i32 = arith.constant 0 : i32
    %c0_i32_0 = arith.constant 0 : i32
    return %c0_i32, %arg0 : i32, i32
  }
  func.func @transform_1(%arg0: i32) -> (i32, i32) {
    %c0_i32 = arith.constant 0 : i32
    %c0_i32_0 = arith.constant 0 : i32
    %c0_i32_1 = arith.constant 0 : i32
    return %c0_i32, %c0_i32_0 : i32, i32
  }
  func.func @transform_2(%arg0: i32) -> (i32, i32) {
    %c0_i32 = arith.constant 0 : i32
    %c0_i32_0 = arith.constant 0 : i32
    %c0_i32_1 = arith.constant 0 : i32
    return %c0_i32, %c0_i32_0 : i32, i32
  }
  func.func @transform_3(%arg0: i32) -> (i32, i32) {
    %c0_i32 = arith.constant 0 : i32
    %c0_i32_0 = arith.constant 0 : i32
    return %c0_i32, %arg0 : i32, i32
  }
}

module attributes {stable_mosaic.version = 11 : i64} {
  func.func @_fused_convT_kernel(%arg0: i32, %arg1: memref<72x450xbf16, #tpu.memory_space<vmem>>, %arg2: memref<8x72xbf16, #tpu.memory_space<vmem>>, %arg3: memref<8x1xf32, #tpu.memory_space<vmem>>, %arg4: memref<8x450xf32, #tpu.memory_space<vmem>>, %arg5: memref<8x450xf32, #tpu.memory_space<vmem>>) attributes {dimension_semantics = [#tpu.dimension_semantics<parallel>], iteration_bounds = array<i64: 1>, scalar_prefetch = 0 : i64, scratch_operands = 0 : i64, tpu.core_type = #tpu.core_type<tc>, window_params = [{transform_indices = @transform_0, window_bounds = array<i64: 72, 450>}, {pipeline_mode = #tpu.pipeline_mode<synchronous>, transform_indices = @transform_1, window_bounds = array<i64: 8, 72>}, {pipeline_mode = #tpu.pipeline_mode<synchronous>, transform_indices = @transform_2, window_bounds = array<i64: 8, 1>}, {transform_indices = @transform_3, window_bounds = array<i64: 8, 450>}, {transform_indices = @transform_4, window_bounds = array<i64: 8, 450>}]} {
    %c0 = arith.constant 0 : index
    %c0_0 = arith.constant 0 : index
    %0 = vector.load %arg2[%c0, %c0_0] : memref<8x72xbf16, #tpu.memory_space<vmem>>, vector<8x72xbf16>
    %c0_1 = arith.constant 0 : index
    %c0_2 = arith.constant 0 : index
    %1 = vector.load %arg1[%c0_1, %c0_2] : memref<72x450xbf16, #tpu.memory_space<vmem>>, vector<72x450xbf16>
    %cst = arith.constant dense<0.000000e+00> : vector<8x450xf32>
    %2 = tpu.matmul %0, %1, %cst {dimension_numbers = #tpu.dot_dimension_numbers<[1], [0], [0], [1], [0, 0, 1, 1], [], []>} : vector<8x72xbf16>, vector<72x450xbf16>, vector<8x450xf32> -> vector<8x450xf32>
    %c0_3 = arith.constant 0 : index
    %c0_4 = arith.constant 0 : index
    %3 = vector.load %arg3[%c0_3, %c0_4] : memref<8x1xf32, #tpu.memory_space<vmem>>, vector<8x1xf32>
    %4 = vector.broadcast %3 : vector<8x1xf32> to vector<8x450xf32>
    %5 = arith.addf %2, %4 : vector<8x450xf32>
    %c0_5 = arith.constant 0 : index
    %c0_6 = arith.constant 0 : index
    %6 = vector.load %arg4[%c0_5, %c0_6] : memref<8x450xf32, #tpu.memory_space<vmem>>, vector<8x450xf32>
    %7 = arith.addf %5, %6 : vector<8x450xf32>
    %cst_7 = arith.constant 0.00999999977 : f32
    %8 = vector.broadcast %cst_7 : f32 to vector<8x450xf32>
    %9 = arith.mulf %8, %7 : vector<8x450xf32>
    %10 = arith.maximumf %7, %9 : vector<8x450xf32>
    %c0_8 = arith.constant 0 : index
    %c0_9 = arith.constant 0 : index
    %11 = vector.load %arg5[%c0_8, %c0_9] : memref<8x450xf32, #tpu.memory_space<vmem>>, vector<8x450xf32>
    tpu.vector_store %arg5[%c0_8, %c0_9], %10 {strides = array<i32>} : memref<8x450xf32, #tpu.memory_space<vmem>>, vector<8x450xf32>,
    return
  }
  func.func @transform_0(%arg0: i32) -> (i32, i32) {
    %c0_i32 = arith.constant 0 : i32
    %c0_i32_0 = arith.constant 0 : i32
    return %c0_i32, %arg0 : i32, i32
  }
  func.func @transform_1(%arg0: i32) -> (i32, i32) {
    %c0_i32 = arith.constant 0 : i32
    %c0_i32_0 = arith.constant 0 : i32
    %c0_i32_1 = arith.constant 0 : i32
    return %c0_i32, %c0_i32_0 : i32, i32
  }
  func.func @transform_2(%arg0: i32) -> (i32, i32) {
    %c0_i32 = arith.constant 0 : i32
    %c0_i32_0 = arith.constant 0 : i32
    %c0_i32_1 = arith.constant 0 : i32
    return %c0_i32, %c0_i32_0 : i32, i32
  }
  func.func @transform_3(%arg0: i32) -> (i32, i32) {
    %c0_i32 = arith.constant 0 : i32
    %c0_i32_0 = arith.constant 0 : i32
    return %c0_i32, %arg0 : i32, i32
  }
  func.func @transform_4(%arg0: i32) -> (i32, i32) {
    %c0_i32 = arith.constant 0 : i32
    %c0_i32_0 = arith.constant 0 : i32
    return %c0_i32, %arg0 : i32, i32
  }
}

module attributes {stable_mosaic.version = 11 : i64} {
  func.func @_fused_convT_kernel(%arg0: i32, %arg1: memref<72x338xbf16, #tpu.memory_space<vmem>>, %arg2: memref<8x72xbf16, #tpu.memory_space<vmem>>, %arg3: memref<8x1xf32, #tpu.memory_space<vmem>>, %arg4: memref<8x338xf32, #tpu.memory_space<vmem>>) attributes {dimension_semantics = [#tpu.dimension_semantics<parallel>], iteration_bounds = array<i64: 1>, scalar_prefetch = 0 : i64, scratch_operands = 0 : i64, tpu.core_type = #tpu.core_type<tc>, window_params = [{transform_indices = @transform_0, window_bounds = array<i64: 72, 338>}, {pipeline_mode = #tpu.pipeline_mode<synchronous>, transform_indices = @transform_1, window_bounds = array<i64: 8, 72>}, {pipeline_mode = #tpu.pipeline_mode<synchronous>, transform_indices = @transform_2, window_bounds = array<i64: 8, 1>}, {transform_indices = @transform_3, window_bounds = array<i64: 8, 338>}]} {
    %c0 = arith.constant 0 : index
    %c0_0 = arith.constant 0 : index
    %0 = vector.load %arg2[%c0, %c0_0] : memref<8x72xbf16, #tpu.memory_space<vmem>>, vector<8x72xbf16>
    %c0_1 = arith.constant 0 : index
    %c0_2 = arith.constant 0 : index
    %1 = vector.load %arg1[%c0_1, %c0_2] : memref<72x338xbf16, #tpu.memory_space<vmem>>, vector<72x338xbf16>
    %cst = arith.constant dense<0.000000e+00> : vector<8x338xf32>
    %2 = tpu.matmul %0, %1, %cst {dimension_numbers = #tpu.dot_dimension_numbers<[1], [0], [0], [1], [0, 0, 1, 1], [], []>} : vector<8x72xbf16>, vector<72x338xbf16>, vector<8x338xf32> -> vector<8x338xf32>
    %c0_3 = arith.constant 0 : index
    %c0_4 = arith.constant 0 : index
    %3 = vector.load %arg3[%c0_3, %c0_4] : memref<8x1xf32, #tpu.memory_space<vmem>>, vector<8x1xf32>
    %4 = vector.broadcast %3 : vector<8x1xf32> to vector<8x338xf32>
    %5 = arith.addf %2, %4 : vector<8x338xf32>
    %cst_5 = arith.constant 0.00999999977 : f32
    %6 = vector.broadcast %cst_5 : f32 to vector<8x338xf32>
    %7 = arith.mulf %6, %5 : vector<8x338xf32>
    %8 = arith.maximumf %5, %7 : vector<8x338xf32>
    %c0_6 = arith.constant 0 : index
    %c0_7 = arith.constant 0 : index
    %9 = vector.load %arg4[%c0_6, %c0_7] : memref<8x338xf32, #tpu.memory_space<vmem>>, vector<8x338xf32>
    tpu.vector_store %arg4[%c0_6, %c0_7], %8 {strides = array<i32>} : memref<8x338xf32, #tpu.memory_space<vmem>>, vector<8x338xf32>,
    return
  }
  func.func @transform_0(%arg0: i32) -> (i32, i32) {
    %c0_i32 = arith.constant 0 : i32
    %c0_i32_0 = arith.constant 0 : i32
    return %c0_i32, %arg0 : i32, i32
  }
  func.func @transform_1(%arg0: i32) -> (i32, i32) {
    %c0_i32 = arith.constant 0 : i32
    %c0_i32_0 = arith.constant 0 : i32
    %c0_i32_1 = arith.constant 0 : i32
    return %c0_i32, %c0_i32_0 : i32, i32
  }
  func.func @transform_2(%arg0: i32) -> (i32, i32) {
    %c0_i32 = arith.constant 0 : i32
    %c0_i32_0 = arith.constant 0 : i32
    %c0_i32_1 = arith.constant 0 : i32
    return %c0_i32, %c0_i32_0 : i32, i32
  }
  func.func @transform_3(%arg0: i32) -> (i32, i32) {
    %c0_i32 = arith.constant 0 : i32
    %c0_i32_0 = arith.constant 0 : i32
    return %c0_i32, %arg0 : i32, i32
  }
}

module attributes {stable_mosaic.version = 11 : i64} {
  func.func @_fused_convT_kernel(%arg0: i32, %arg1: memref<72x338xbf16, #tpu.memory_space<vmem>>, %arg2: memref<8x72xbf16, #tpu.memory_space<vmem>>, %arg3: memref<8x1xf32, #tpu.memory_space<vmem>>, %arg4: memref<8x338xf32, #tpu.memory_space<vmem>>, %arg5: memref<8x338xf32, #tpu.memory_space<vmem>>) attributes {dimension_semantics = [#tpu.dimension_semantics<parallel>], iteration_bounds = array<i64: 1>, scalar_prefetch = 0 : i64, scratch_operands = 0 : i64, tpu.core_type = #tpu.core_type<tc>, window_params = [{transform_indices = @transform_0, window_bounds = array<i64: 72, 338>}, {pipeline_mode = #tpu.pipeline_mode<synchronous>, transform_indices = @transform_1, window_bounds = array<i64: 8, 72>}, {pipeline_mode = #tpu.pipeline_mode<synchronous>, transform_indices = @transform_2, window_bounds = array<i64: 8, 1>}, {transform_indices = @transform_3, window_bounds = array<i64: 8, 338>}, {transform_indices = @transform_4, window_bounds = array<i64: 8, 338>}]} {
    %c0 = arith.constant 0 : index
    %c0_0 = arith.constant 0 : index
    %0 = vector.load %arg2[%c0, %c0_0] : memref<8x72xbf16, #tpu.memory_space<vmem>>, vector<8x72xbf16>
    %c0_1 = arith.constant 0 : index
    %c0_2 = arith.constant 0 : index
    %1 = vector.load %arg1[%c0_1, %c0_2] : memref<72x338xbf16, #tpu.memory_space<vmem>>, vector<72x338xbf16>
    %cst = arith.constant dense<0.000000e+00> : vector<8x338xf32>
    %2 = tpu.matmul %0, %1, %cst {dimension_numbers = #tpu.dot_dimension_numbers<[1], [0], [0], [1], [0, 0, 1, 1], [], []>} : vector<8x72xbf16>, vector<72x338xbf16>, vector<8x338xf32> -> vector<8x338xf32>
    %c0_3 = arith.constant 0 : index
    %c0_4 = arith.constant 0 : index
    %3 = vector.load %arg3[%c0_3, %c0_4] : memref<8x1xf32, #tpu.memory_space<vmem>>, vector<8x1xf32>
    %4 = vector.broadcast %3 : vector<8x1xf32> to vector<8x338xf32>
    %5 = arith.addf %2, %4 : vector<8x338xf32>
    %c0_5 = arith.constant 0 : index
    %c0_6 = arith.constant 0 : index
    %6 = vector.load %arg4[%c0_5, %c0_6] : memref<8x338xf32, #tpu.memory_space<vmem>>, vector<8x338xf32>
    %7 = arith.addf %5, %6 : vector<8x338xf32>
    %cst_7 = arith.constant 0.00999999977 : f32
    %8 = vector.broadcast %cst_7 : f32 to vector<8x338xf32>
    %9 = arith.mulf %8, %7 : vector<8x338xf32>
    %10 = arith.maximumf %7, %9 : vector<8x338xf32>
    %c0_8 = arith.constant 0 : index
    %c0_9 = arith.constant 0 : index
    %11 = vector.load %arg5[%c0_8, %c0_9] : memref<8x338xf32, #tpu.memory_space<vmem>>, vector<8x338xf32>
    tpu.vector_store %arg5[%c0_8, %c0_9], %10 {strides = array<i32>} : memref<8x338xf32, #tpu.memory_space<vmem>>, vector<8x338xf32>,
    return
  }
  func.func @transform_0(%arg0: i32) -> (i32, i32) {
    %c0_i32 = arith.constant 0 : i32
    %c0_i32_0 = arith.constant 0 : i32
    return %c0_i32, %arg0 : i32, i32
  }
  func.func @transform_1(%arg0: i32) -> (i32, i32) {
    %c0_i32 = arith.constant 0 : i32
    %c0_i32_0 = arith.constant 0 : i32
    %c0_i32_1 = arith.constant 0 : i32
    return %c0_i32, %c0_i32_0 : i32, i32
  }
  func.func @transform_2(%arg0: i32) -> (i32, i32) {
    %c0_i32 = arith.constant 0 : i32
    %c0_i32_0 = arith.constant 0 : i32
    %c0_i32_1 = arith.constant 0 : i32
    return %c0_i32, %c0_i32_0 : i32, i32
  }
  func.func @transform_3(%arg0: i32) -> (i32, i32) {
    %c0_i32 = arith.constant 0 : i32
    %c0_i32_0 = arith.constant 0 : i32
    return %c0_i32, %arg0 : i32, i32
  }
  func.func @transform_4(%arg0: i32) -> (i32, i32) {
    %c0_i32 = arith.constant 0 : i32
    %c0_i32_0 = arith.constant 0 : i32
    return %c0_i32, %arg0 : i32, i32
  }
}

module attributes {stable_mosaic.version = 11 : i64} {
  func.func @_fused_convT_kernel(%arg0: i32, %arg1: memref<72x72xbf16, #tpu.memory_space<vmem>>, %arg2: memref<8x72xbf16, #tpu.memory_space<vmem>>, %arg3: memref<8x1xf32, #tpu.memory_space<vmem>>, %arg4: memref<8x72xf32, #tpu.memory_space<vmem>>) attributes {dimension_semantics = [#tpu.dimension_semantics<parallel>], iteration_bounds = array<i64: 1>, scalar_prefetch = 0 : i64, scratch_operands = 0 : i64, tpu.core_type = #tpu.core_type<tc>, window_params = [{transform_indices = @transform_0, window_bounds = array<i64: 72, 72>}, {pipeline_mode = #tpu.pipeline_mode<synchronous>, transform_indices = @transform_1, window_bounds = array<i64: 8, 72>}, {pipeline_mode = #tpu.pipeline_mode<synchronous>, transform_indices = @transform_2, window_bounds = array<i64: 8, 1>}, {transform_indices = @transform_3, window_bounds = array<i64: 8, 72>}]} {
    %c0 = arith.constant 0 : index
    %c0_0 = arith.constant 0 : index
    %0 = vector.load %arg2[%c0, %c0_0] : memref<8x72xbf16, #tpu.memory_space<vmem>>, vector<8x72xbf16>
    %c0_1 = arith.constant 0 : index
    %c0_2 = arith.constant 0 : index
    %1 = vector.load %arg1[%c0_1, %c0_2] : memref<72x72xbf16, #tpu.memory_space<vmem>>, vector<72x72xbf16>
    %cst = arith.constant dense<0.000000e+00> : vector<8x72xf32>
    %2 = tpu.matmul %0, %1, %cst {dimension_numbers = #tpu.dot_dimension_numbers<[1], [0], [0], [1], [0, 0, 1, 1], [], []>} : vector<8x72xbf16>, vector<72x72xbf16>, vector<8x72xf32> -> vector<8x72xf32>
    %c0_3 = arith.constant 0 : index
    %c0_4 = arith.constant 0 : index
    %3 = vector.load %arg3[%c0_3, %c0_4] : memref<8x1xf32, #tpu.memory_space<vmem>>, vector<8x1xf32>
    %4 = vector.broadcast %3 : vector<8x1xf32> to vector<8x72xf32>
    %5 = arith.addf %2, %4 : vector<8x72xf32>
    %cst_5 = arith.constant 0.00999999977 : f32
    %6 = vector.broadcast %cst_5 : f32 to vector<8x72xf32>
    %7 = arith.mulf %6, %5 : vector<8x72xf32>
    %8 = arith.maximumf %5, %7 : vector<8x72xf32>
    %c0_6 = arith.constant 0 : index
    %c0_7 = arith.constant 0 : index
    %9 = vector.load %arg4[%c0_6, %c0_7] : memref<8x72xf32, #tpu.memory_space<vmem>>, vector<8x72xf32>
    tpu.vector_store %arg4[%c0_6, %c0_7], %8 {strides = array<i32>} : memref<8x72xf32, #tpu.memory_space<vmem>>, vector<8x72xf32>,
    return
  }
  func.func @transform_0(%arg0: i32) -> (i32, i32) {
    %c0_i32 = arith.constant 0 : i32
    %c0_i32_0 = arith.constant 0 : i32
    return %c0_i32, %arg0 : i32, i32
  }
  func.func @transform_1(%arg0: i32) -> (i32, i32) {
    %c0_i32 = arith.constant 0 : i32
    %c0_i32_0 = arith.constant 0 : i32
    %c0_i32_1 = arith.constant 0 : i32
    return %c0_i32, %c0_i32_0 : i32, i32
  }
  func.func @transform_2(%arg0: i32) -> (i32, i32) {
    %c0_i32 = arith.constant 0 : i32
    %c0_i32_0 = arith.constant 0 : i32
    %c0_i32_1 = arith.constant 0 : i32
    return %c0_i32, %c0_i32_0 : i32, i32
  }
  func.func @transform_3(%arg0: i32) -> (i32, i32) {
    %c0_i32 = arith.constant 0 : i32
    %c0_i32_0 = arith.constant 0 : i32
    return %c0_i32, %arg0 : i32, i32
  }
}

</mosaic_0001>

<llo_original>
// kernel: custom_resnet_forward.10
$region0: #{custom_resnet_forward.10}
  #allocation0 [shape = 'u32[]', space=smem, size = 0x4, offset = 0x4, fixed_abs, tag = 'smem constant byte address 0x4 - core index']
  #allocation1 [shape = 'u32[144,128]{1,0:T(1,128)}', space=vmem, size = 0x12000, scoped, tag = 'internal scratch']
  %s0 = inlined_call_operand.vmem [shape: bf16[27,2048], index: 0, kind: input, shape index: {}]
  %s1 = inlined_call_operand.vmem [shape: bf16[8,27], index: 1, kind: input, shape index: {}]
  %s2 = inlined_call_operand.vmem [shape: f32[8,1], index: 2, kind: input, shape index: {}]
  %s3 = inlined_call_operand.vmem [shape: f32[8,2048], index: 3, kind: output, shape index: {}]
  %s4 = sld [smem:[#allocation0]]
  $region68: #{custom_resnet_forward.10} parent=0
    _
  %s6 = ssub.s32 1, %s4
  %s7 = scalar_select 0, %s6, %s4
  $region1: #{custom_resnet_forward.10} parent=0
    #allocation2 [shape = 'u8[131072]{0}', space=vmem, size = 0x20000, scoped, tag = 'input window, operand 0']
    loop: start=0, step=1, limit=4
    $region2: #{custom_resnet_forward.10} parent=1 // loop_pre_header
      _
    $region3: #{custom_resnet_forward.10} parent=1 // loop_header
      %s9 = sphi 0, %s13
      %p10 = scmp.ge.s32.totalorder %s9, 4
      %s19 = sphi 0, %s21
      %s22 = sphi 0, %s19
      %s23 = sphi 0, %s22
      %s39 = sphi 0, %s23
      %s43 = sphi 0, %s43
      %s45 = sphi 0, %s43
      %s46 = sphi 0, %s45
      %s60 = sphi 0, %s46
      %s64 = sphi 0, %s64
      %s66 = sphi 0, %s64
      %s67 = sphi 0, %s66
      %s81 = sphi 0, %s67
      %s87 = sphi 0, %s89
      %s90 = sphi 0, %s87
      %s91 = sphi 0, %s90
      %s107 = sphi 0, %s91
    $region4: #{custom_resnet_forward.10} parent=1 // loop_header_branch
      %12 = sbr.rel (%p10) target = $region8
    $region5: #{custom_resnet_forward.10} parent=1 // loop_body
      %s14 = ssub.s32 %s9, 1
      %s15 = ssub.s32 %s9, 2
      %s16 = sadd.s32 %s9, 1
      %s17 = ssub.s32 %s9, %s16
      %p18 = scmp.eq.s32.totalorder %s17, 0
      %s20 = sadd.s32 %s19, 1
      %s21 = scalar_select %p18, %s19, %s20
      %p24 = pneg %p18
      %p25 = scmp.eq.s32.totalorder %s9, 1
      %p26 = por %p24, %p25
      %p27 = scmp.ne.s32.totalorder %s19, %s22
      %p28 = scmp.eq.s32.totalorder %s9, 0
      %p29 = por %p27, %p28
      %p30 = scmp.ne.s32.totalorder %s19, %s22
      %p31 = scmp.eq.s32.totalorder %s14, 1
      %p32 = por %p30, %p31
      %p33 = scmp.ne.s32.totalorder %s22, %s23
      %p34 = scmp.eq.s32.totalorder %s14, 0
      %p35 = por %p33, %p34
      %p36 = scmp.ne.s32.totalorder %s22, %s23
      %p37 = scmp.eq.s32.totalorder %s15, 1
      %p38 = por %p36, %p37
      %p40 = scmp.ne.s32.totalorder %s23, %s39
      %p41 = scmp.eq.s32.totalorder %s15, 0
      %p42 = por %p40, %p41
      %s44 = sadd.s32 %s43, 1
      %p47 = scmp.eq.s32.totalorder %s9, 1
      %p48 = scmp.ne.s32.totalorder %s43, %s45
      %p49 = scmp.eq.s32.totalorder %s9, 0
      %p50 = por %p48, %p49
      %p51 = scmp.ne.s32.totalorder %s43, %s45
      %p52 = scmp.eq.s32.totalorder %s14, 1
      %p53 = por %p51, %p52
      %p54 = scmp.ne.s32.totalorder %s45, %s46
      %p55 = scmp.eq.s32.totalorder %s14, 0
      %p56 = por %p54, %p55
      %p57 = scmp.ne.s32.totalorder %s45, %s46
      %p58 = scmp.eq.s32.totalorder %s15, 1
      %p59 = por %p57, %p58
      %p61 = scmp.ne.s32.totalorder %s46, %s60
      %p62 = scmp.eq.s32.totalorder %s15, 0
      %p63 = por %p61, %p62
      %s65 = sadd.s32 %s64, 1
      %p68 = scmp.eq.s32.totalorder %s9, 1
      %p69 = scmp.ne.s32.totalorder %s64, %s66
      %p70 = scmp.eq.s32.totalorder %s9, 0
      %p71 = por %p69, %p70
      %p72 = scmp.ne.s32.totalorder %s64, %s66
      %p73 = scmp.eq.s32.totalorder %s14, 1
      %p74 = por %p72, %p73
      %p75 = scmp.ne.s32.totalorder %s66, %s67
      %p76 = scmp.eq.s32.totalorder %s14, 0
      %p77 = por %p75, %p76
      %p78 = scmp.ne.s32.totalorder %s66, %s67
      %p79 = scmp.eq.s32.totalorder %s15, 1
      %p80 = por %p78, %p79
      %p82 = scmp.ne.s32.totalorder %s67, %s81
      %p83 = scmp.eq.s32.totalorder %s15, 0
      %p84 = por %p82, %p83
      %s85 = ssub.s32 %s9, %s16
      %p86 = scmp.eq.s32.totalorder %s85, 0
      %s88 = sadd.s32 %s87, 1
      %s89 = scalar_select %p86, %s87, %s88
      %p92 = pneg %p86
      %p93 = scmp.eq.s32.totalorder %s9, 1
      %p94 = por %p92, %p93
      %p95 = scmp.ne.s32.totalorder %s87, %s90
      %p96 = scmp.eq.s32.totalorder %s9, 0
      %p97 = por %p95, %p96
      %p98 = scmp.ne.s32.totalorder %s87, %s90
      %p99 = scmp.eq.s32.totalorder %s14, 1
      %p100 = por %p98, %p99
      %p101 = scmp.ne.s32.totalorder %s90, %s91
      %p102 = scmp.eq.s32.totalorder %s14, 0
      %p103 = por %p101, %p102
      %p104 = scmp.ne.s32.totalorder %s90, %s91
      %p105 = scmp.eq.s32.totalorder %s15, 1
      %p106 = por %p104, %p105
      %p108 = scmp.ne.s32.totalorder %s91, %s107
      %p109 = scmp.eq.s32.totalorder %s15, 0
      %p110 = por %p108, %p109
      %p111 = scmp.le.s32.totalorder 1, %s9
      %p112 = scmp.lt.s32.totalorder %s9, 3
      %p113 = pnand %p111, %p112
      %p114 = pneg %p113
      // Predicated region
      $region9: #{custom_resnet_forward.10} parent=5 // pred_check
        _
      $region10: #{custom_resnet_forward.10} parent=5 // pred_check_branch
        %116 = sbr.rel (%p113) target = $region12
      $region11: #{custom_resnet_forward.10} parent=5 // pred_region
        %s117 = ssub.s32 %s9, 1
        // Predicated region
        $region13: #{custom_resnet_forward.10} parent=11 // pred_check
          %p118 = pneg %p56
        $region14: #{custom_resnet_forward.10} parent=11 // pred_check_branch
          %120 = sbr.rel (%p118) target = $region16
        $region15: #{custom_resnet_forward.10} parent=11 // pred_region
          _
        $region16: #{custom_resnet_forward.10} parent=11 // pred_fallthru
          _
        // Predicated region
        $region17: #{custom_resnet_forward.10} parent=11 // pred_check
          %p121 = pneg %p77
        $region18: #{custom_resnet_forward.10} parent=11 // pred_check_branch
          %123 = sbr.rel (%p121) target = $region20
        $region19: #{custom_resnet_forward.10} parent=11 // pred_region
          _
        $region20: #{custom_resnet_forward.10} parent=11 // pred_fallthru
          _
      $region12: #{custom_resnet_forward.10} parent=5 // pred_fallthru
        _
      %p124 = scmp.lt.s32.totalorder %s9, 2
      // Predicated region
      $region21: #{custom_resnet_forward.10} parent=5 // pred_check
        %p125 = pneg %p124
      $region22: #{custom_resnet_forward.10} parent=5 // pred_check_branch
        %127 = sbr.rel (%p125) target = $region24
      $region23: #{custom_resnet_forward.10} parent=5 // pred_region
        // Predicated region
        $region25: #{custom_resnet_forward.10} parent=23 // pred_check
          %p128 = pneg %p29
        $region26: #{custom_resnet_forward.10} parent=23 // pred_check_branch
          %130 = sbr.rel (%p128) target = $region28
        $region27: #{custom_resnet_forward.10} parent=23 // pred_region
          %s131 = sand.u32 %s19, 1
          %s132 = sand.u32 %s19, 1
          %s133 = smul.addr %s132, 128
          %s134 = scalar_lea.vmem [#allocation2], %s133
          %s135 = smul.u32 8, %s9
          %s136 = smul.addr %s135, 4
          %s137 = scalar_lea.vmem %s0, %s136
          // Predicated region
          $region29: #{custom_resnet_forward.10} parent=27 // pred_check
            _
          $region30: #{custom_resnet_forward.10} parent=27 // pred_check_branch
            %139 = sbr.rel (0) target = $region32
          $region31: #{custom_resnet_forward.10} parent=27 // pred_region
            // Predicated region
            $region33: #{custom_resnet_forward.10} parent=31 // pred_check
              _
            $region34: #{custom_resnet_forward.10} parent=31 // pred_check_branch
              %141 = sbr.rel (0) target = $region36
            $region35: #{custom_resnet_forward.10} parent=31 // pred_region
              loop: start=0, step=1, limit=1
              $region37: #{custom_resnet_forward.10} parent=35 // loop_pre_header
                _
              $region38: #{custom_resnet_forward.10} parent=35 // loop_header
                %s143 = sphi 0, %s147
                %p144 = scmp.ge.s32.totalorder %s143, 1
                %s148 = sphi %s137, %s137
                %s149 = sphi %s134, %s134
              $region39: #{custom_resnet_forward.10} parent=35 // loop_header_branch
                %146 = sbr.rel (%p144) target = $region43
              $region40: #{custom_resnet_forward.10} parent=35 // loop_body
                %v150 = vld [vmem:[%s148] sm:$0xff]
                %151 = vst [vmem:[%s149] sm:$0xff] %v150
                %v152 = vld [vmem:[%s148 + $0x8] sm:$0xff]
                %153 = vst [vmem:[%s149 + $0x8] sm:$0xff] %v152
                %v154 = vld [vmem:[%s148 + $0x10] sm:$0xff]
                %155 = vst [vmem:[%s149 + $0x10] sm:$0xff] %v154
                %v156 = vld [vmem:[%s148 + $0x18] sm:$0xff]
                %157 = vst [vmem:[%s149 + $0x18] sm:$0xff] %v156
                %v158 = vld [vmem:[%s148 + $0x40] sm:$0xff]
                %159 = vst [vmem:[%s149 + $0x20] sm:$0xff] %v158
                %v160 = vld [vmem:[%s148 + $0x48] sm:$0xff]
                %161 = vst [vmem:[%s149 + $0x28] sm:$0xff] %v160
                %v162 = vld [vmem:[%s148 + $0x50] sm:$0xff]
                %163 = vst [vmem:[%s149 + $0x30] sm:$0xff] %v162
                %v164 = vld [vmem:[%s148 + $0x58] sm:$0xff]
                %165 = vst [vmem:[%s149 + $0x38] sm:$0xff] %v164
                %v166 = vld [vmem:[%s148 + $0x80] sm:$0xff]
                %167 = vst [vmem:[%s149 + $0x40] sm:$0xff] %v166
                %v168 = vld [vmem:[%s148 + $0x88] sm:$0xff]
                %169 = vst [vmem:[%s149 + $0x48] sm:$0xff] %v168
                %v170 = vld [vmem:[%s148 + $0x90] sm:$0xff]
                %171 = vst [vmem:[%s149 + $0x50] sm:$0xff] %v170
                %v172 = vld [vmem:[%s148 + $0x98] sm:$0xff]
                %173 = vst [vmem:[%s149 + $0x58] sm:$0xff] %v172
                %v174 = vld [vmem:[%s148 + $0xc0] sm:$0xff]
                %175 = vst [vmem:[%s149 + $0x60] sm:$0xff] %v174
                %v176 = vld [vmem:[%s148 + $0xc8] sm:$0xff]
                %177 = vst [vmem:[%s149 + $0x68] sm:$0xff] %v176
                %v178 = vld [vmem:[%s148 + $0xd0] sm:$0xff]
                %179 = vst [vmem:[%s149 + $0x70] sm:$0xff] %v178
                %v180 = vld [vmem:[%s148 + $0xd8] sm:$0xff]
                %181 = vst [vmem:[%s149 + $0x78] sm:$0xff] %v180
              $region41: #{custom_resnet_forward.10} parent=35 // loop_footer
                %s147 = sadd.s32 1, %s143
              $region42: #{custom_resnet_forward.10} parent=35 // loop_footer_branch
                %142 = sbr.rel target = $region38
              $region43: #{custom_resnet_forward.10} parent=35 // loop_exit
                _
            $region36: #{custom_resnet_forward.10} parent=31 // pred_fallthru
              _
            // Predicated region
            $region44: #{custom_resnet_forward.10} parent=31 // pred_check
              _
            $region45: #{custom_resnet_forward.10} parent=31 // pred_check_branch
              %183 = sbr.rel target = $region47
            $region46: #{custom_resnet_forward.10} parent=31 // pred_region
              _
            $region47: #{custom_resnet_forward.10} parent=31 // pred_fallthru
              _
          $region32: #{custom_resnet_forward.10} parent=27 // pred_fallthru
            _
          %184 = vnop
        $region28: #{custom_resnet_forward.10} parent=23 // pred_fallthru
          _
      $region24: #{custom_resnet_forward.10} parent=5 // pred_fallthru
        _
      %p185 = scmp.le.s32.totalorder 1, %s9
      %p186 = scmp.lt.s32.totalorder %s9, 3
      %p187 = pnand %p185, %p186
      %p188 = pneg %p187
      // Predicated region
      $region48: #{custom_resnet_forward.10} parent=5 // pred_check
        _
      $region49: #{custom_resnet_forward.10} parent=5 // pred_check_branch
        %190 = sbr.rel (%p187) target = $region51
      $region50: #{custom_resnet_forward.10} parent=5 // pred_region
        %s191 = ssub.s32 %s9, 1
        %s192 = sand.u32 %s22, 1
        %s193 = sand.u32 %s22, 1
        %s194 = smul.addr %s193, 128
        %s195 = scalar_lea.vmem [#allocation2], %s194
        // Predicated region
        $region52: #{custom_resnet_forward.10} parent=50 // pred_check
          %p196 = pneg %p35
        $region53: #{custom_resnet_forward.10} parent=50 // pred_check_branch
          %198 = sbr.rel (%p196) target = $region55
        $region54: #{custom_resnet_forward.10} parent=50 // pred_region
          _
        $region55: #{custom_resnet_forward.10} parent=50 // pred_fallthru
          _
        %s199 = sand.u32 %s22, 1
        %s200 = sand.u32 %s22, 1
        %s201 = smul.addr %s200, 128
        %s202 = scalar_lea.vmem [#allocation2], %s201
        %p203 = pneg %p35
        %p204 = pneg %p32
        %p205 = pneg %p56
        %p206 = pneg %p53
        %p207 = pneg %p77
        %p208 = pneg %p74
        %p209 = pneg %p103
        %p210 = pneg %p100
        %s211 = smul.u32 8, %s14
        %p212 = scmp.lt.s32.totalorder %s211, 15
        %s213 = scalar_select %p212, %s211, 15
        %s214 = smul.addr %s213, 8
        %s215 = scalar_lea.vmem %s3, %s214
        %s216 = smul.u32 8, %s14
        %s217 = smul.u32 8, %s14
        %p218 = scmp.lt.s32.totalorder %s217, 15
        %s219 = scalar_select %p218, %s217, 15
        %s220 = smul.addr %s219, 8
        %s221 = scalar_lea.vmem %s3, %s220
        %s222 = smul.u32 8, %s14
        %v224 = vld [vmem:[%s1] sm:$0xf]
        %v225 = vld [vmem:[%s195] sm:$0xff]
        %v226 = vld [vmem:[%s195 + $0x8] sm:$0xff]
        %v227 = vld [vmem:[%s195 + $0x10] sm:$0xff]
        %v228 = vld [vmem:[%s195 + $0x18] sm:$0xff]
        %v229 = vld [vmem:[%s195 + $0x20] sm:$0xff]
        %v230 = vld [vmem:[%s195 + $0x28] sm:$0xff]
        %v231 = vld [vmem:[%s195 + $0x30] sm:$0xff]
        %v232 = vld [vmem:[%s195 + $0x38] sm:$0xff]
        %v233 = vld [vmem:[%s195 + $0x40] sm:$0xff]
        %v234 = vld [vmem:[%s195 + $0x48] sm:$0xff]
        %v235 = vld [vmem:[%s195 + $0x50] sm:$0xff]
        %v236 = vld [vmem:[%s195 + $0x58] sm:$0xff]
        %v237 = vld [vmem:[%s195 + $0x60] sm:$0x33]
        %v238 = vld [vmem:[%s195 + $0x68] sm:$0x33]
        %v239 = vld [vmem:[%s195 + $0x70] sm:$0x33]
        %v240 = vld [vmem:[%s195 + $0x78] sm:$0x33]
        %v241 = vld [vmem:[%s2] sm:$0xff]
        %243 = vset.pattern.permute.xlu0 0
        %244 = vperm.xlu0 %243, %v241
        %v245 = vpop.permute.xlu0 %244
        %v263 = vunpack.c.l.b16 %v225
        %v264 = vunpack.c.h.b16 %v225
        %v265 = vunpack.c.l.b16 %v226
        %v266 = vunpack.c.h.b16 %v226
        %v267 = vunpack.c.l.b16 %v227
        %v268 = vunpack.c.h.b16 %v227
        %v269 = vunpack.c.l.b16 %v228
        %v270 = vunpack.c.h.b16 %v228
        %v271 = vunpack.c.l.b16 %v229
        %v272 = vunpack.c.h.b16 %v229
        %v273 = vunpack.c.l.b16 %v230
        %v274 = vunpack.c.h.b16 %v230
        %v275 = vunpack.c.l.b16 %v231
        %v276 = vunpack.c.h.b16 %v231
        %v277 = vunpack.c.l.b16 %v232
        %v278 = vunpack.c.h.b16 %v232
        %v279 = vunpack.c.l.b16 %v233
        %v280 = vunpack.c.h.b16 %v233
        %v281 = vunpack.c.l.b16 %v234
        %v282 = vunpack.c.h.b16 %v234
        %v283 = vunpack.c.l.b16 %v235
        %v284 = vunpack.c.h.b16 %v235
        %v285 = vunpack.c.l.b16 %v236
        %v286 = vunpack.c.h.b16 %v236
        %v287 = vunpack.c.l.b16 %v237
        %v288 = vunpack.c.h.b16 %v237
        %v289 = vunpack.c.l.b16 %v238
        %v290 = vunpack.c.h.b16 %v238
        %v291 = vunpack.c.l.b16 %v239
        %v292 = vunpack.c.h.b16 %v239
        %v293 = vunpack.c.l.b16 %v240
        %v294 = vunpack.c.h.b16 %v240
        %v295 = vpack.c.b16 %v271, %v263
        %v296 = vpack.c.b16 %v272, %v264
        %v297 = vpack.c.b16 %v273, %v265
        %v298 = vpack.c.b16 %v274, %v266
        %v299 = vpack.c.b16 %v275, %v267
        %v300 = vpack.c.b16 %v276, %v268
        %v301 = vpack.c.b16 %v277, %v269
        %v302 = vpack.c.b16 %v278, %v270
        %v303 = vpack.c.b16 %v287, %v279
        %v304 = vpack.c.b16 %v288, %v280
        %v305 = vpack.c.b16 %v289, %v281
        %v306 = vpack.c.b16 %v290, %v282
        %v307 = vpack.c.b16 %v291, %v283
        %v308 = vpack.c.b16 %v292, %v284
        %v309 = vpack.c.b16 %v293, %v285
        %v310 = vpack.c.b16 %v294, %v286
        %vm319 = vcmask 220160
        %v321 = vsel %vm319, %v224, 0
        %vm323 = vcmask 1044480
        %vm324 = vcmask 1045504
        %v325 = vsel %vm323, 4294967295, 65535
        %v326 = vsel %vm324, %v325, 0
        %v328 = vand.u32 %v303, %v326
        %v331 = vand.u32 %v304, %v326
        %v334 = vand.u32 %v305, %v326
        %v337 = vand.u32 %v306, %v326
        %v340 = vand.u32 %v307, %v326
        %v343 = vand.u32 %v308, %v326
        %v346 = vand.u32 %v309, %v326
        %v349 = vand.u32 %v310, %v326
        %351 = vmatprep.subr.bf16.mxu0 %v296
        %352 = vmatpush1.bf16.msra.mxu0 %v295
        %353 = vmatprep.subr.bf16.mxu0 %v331
        %354 = vmatpush1.bf16.msra.mxu0 %v328
        %355 = vmatprep.subr.bf16.mxu0 0
        %356 = vmatpush1.bf16.msra.mxu0 0
        %357 = vmatprep.subr.bf16.mxu0 0
        %358 = vmatpush1.bf16.msra.mxu0 0
        %359 = vmatprep.subr.bf16.mxu0 0
        %360 = vmatpush1.bf16.msra.mxu0 0
        %361 = vmatprep.subr.bf16.mxu0 0
        %362 = vmatpush1.bf16.msra.mxu0 0
        %363 = vmatprep.subr.bf16.mxu0 0
        %364 = vmatpush1.bf16.msra.mxu0 0
        %365 = vmatprep.subr.bf16.mxu0 0
        %366 = vmatpush1.bf16.msra.mxu0 0
        %367 = vmatprep.subr.bf16.mxu0 0
        %368 = vmatpush1.bf16.msra.mxu0 0
        %369 = vmatprep.subr.bf16.mxu0 0
        %370 = vmatpush1.bf16.msra.mxu0 0
        %371 = vmatprep.subr.bf16.mxu0 0
        %372 = vmatpush1.bf16.msra.mxu0 0
        %373 = vmatprep.subr.bf16.mxu0 0
        %374 = vmatpush1.bf16.msra.mxu0 0
        %375 = vmatprep.subr.bf16.mxu0 0
        %376 = vmatpush1.bf16.msra.mxu0 0
        %377 = vmatprep.subr.bf16.mxu0 0
        %378 = vmatpush1.bf16.msra.mxu0 0
        %379 = vmatprep.subr.bf16.mxu0 0
        %380 = vmatpush1.bf16.msra.mxu0 0
        %381 = vmatprep.subr.bf16.mxu0 0
        %382 = vmatpush1.bf16.msra.mxu0 0
        %383 = vmatprep.mubr.bf16.mxu0 0
        %384 = vmatmul.mubr.bf16.gmra.mrb[0].mxu0 %v321
        %v385 = vpop.f32.mrb[0].mxu0
        %v386 = vadd.f32 %v245, %v385
        %v387 = vpop.f32.mrb[0].mxu0
        %v388 = vadd.f32 %v245, %v387
        %v389 = vpop.f32.mrb[0].mxu0
        %v390 = vpop.f32.mrb[0].mxu0
        %391 = vdwg.mxu0
        %392 = vmatprep.subr.bf16.mxu0 %v298
        %393 = vmatpush1.bf16.msra.mxu0 %v297
        %394 = vmatprep.subr.bf16.mxu0 %v337
        %395 = vmatpush1.bf16.msra.mxu0 %v334
        %396 = vmatprep.subr.bf16.mxu0 0
        %397 = vmatpush1.bf16.msra.mxu0 0
        %398 = vmatprep.subr.bf16.mxu0 0
        %399 = vmatpush1.bf16.msra.mxu0 0
        %400 = vmatprep.subr.bf16.mxu0 0
        %401 = vmatpush1.bf16.msra.mxu0 0
        %402 = vmatprep.subr.bf16.mxu0 0
        %403 = vmatpush1.bf16.msra.mxu0 0
        %404 = vmatprep.subr.bf16.mxu0 0
        %405 = vmatpush1.bf16.msra.mxu0 0
        %406 = vmatprep.subr.bf16.mxu0 0
        %407 = vmatpush1.bf16.msra.mxu0 0
        %408 = vmatprep.subr.bf16.mxu0 0
        %409 = vmatpush1.bf16.msra.mxu0 0
        %410 = vmatprep.subr.bf16.mxu0 0
        %411 = vmatpush1.bf16.msra.mxu0 0
        %412 = vmatprep.subr.bf16.mxu0 0
        %413 = vmatpush1.bf16.msra.mxu0 0
        %414 = vmatprep.subr.bf16.mxu0 0
        %415 = vmatpush1.bf16.msra.mxu0 0
        %416 = vmatprep.subr.bf16.mxu0 0
        %417 = vmatpush1.bf16.msra.mxu0 0
        %418 = vmatprep.subr.bf16.mxu0 0
        %419 = vmatpush1.bf16.msra.mxu0 0
        %420 = vmatprep.subr.bf16.mxu0 0
        %421 = vmatpush1.bf16.msra.mxu0 0
        %422 = vmatprep.subr.bf16.mxu0 0
        %423 = vmatpush1.bf16.msra.mxu0 0
        %424 = vmatprep.mubr.bf16.mxu0 0
        %425 = vmatmul.mubr.bf16.gmra.mrb[0].mxu0 %v321
        %v426 = vpop.f32.mrb[0].mxu0
        %v427 = vadd.f32 %v245, %v426
        %v428 = vpop.f32.mrb[0].mxu0
        %v429 = vadd.f32 %v245, %v428
        %v430 = vpop.f32.mrb[0].mxu0
        %v431 = vpop.f32.mrb[0].mxu0
        %432 = vdwg.mxu0
        %433 = vmatprep.subr.bf16.mxu0 %v300
        %434 = vmatpush1.bf16.msra.mxu0 %v299
        %435 = vmatprep.subr.bf16.mxu0 %v343
        %436 = vmatpush1.bf16.msra.mxu0 %v340
        %437 = vmatprep.subr.bf16.mxu0 0
        %438 = vmatpush1.bf16.msra.mxu0 0
        %439 = vmatprep.subr.bf16.mxu0 0
        %440 = vmatpush1.bf16.msra.mxu0 0
        %441 = vmatprep.subr.bf16.mxu0 0
        %442 = vmatpush1.bf16.msra.mxu0 0
        %443 = vmatprep.subr.bf16.mxu0 0
        %444 = vmatpush1.bf16.msra.mxu0 0
        %445 = vmatprep.subr.bf16.mxu0 0
        %446 = vmatpush1.bf16.msra.mxu0 0
        %447 = vmatprep.subr.bf16.mxu0 0
        %448 = vmatpush1.bf16.msra.mxu0 0
        %449 = vmatprep.subr.bf16.mxu0 0
        %450 = vmatpush1.bf16.msra.mxu0 0
        %451 = vmatprep.subr.bf16.mxu0 0
        %452 = vmatpush1.bf16.msra.mxu0 0
        %453 = vmatprep.subr.bf16.mxu0 0
        %454 = vmatpush1.bf16.msra.mxu0 0
        %455 = vmatprep.subr.bf16.mxu0 0
        %456 = vmatpush1.bf16.msra.mxu0 0
        %457 = vmatprep.subr.bf16.mxu0 0
        %458 = vmatpush1.bf16.msra.mxu0 0
        %459 = vmatprep.subr.bf16.mxu0 0
        %460 = vmatpush1.bf16.msra.mxu0 0
        %461 = vmatprep.subr.bf16.mxu0 0
        %462 = vmatpush1.bf16.msra.mxu0 0
        %463 = vmatprep.subr.bf16.mxu0 0
        %464 = vmatpush1.bf16.msra.mxu0 0
        %465 = vmatprep.mubr.bf16.mxu0 0
        %466 = vmatmul.mubr.bf16.gmra.mrb[0].mxu0 %v321
        %v467 = vpop.f32.mrb[0].mxu0
        %v468 = vadd.f32 %v245, %v467
        %v469 = vpop.f32.mrb[0].mxu0
        %v470 = vadd.f32 %v245, %v469
        %v471 = vpop.f32.mrb[0].mxu0
        %v472 = vpop.f32.mrb[0].mxu0
        %473 = vdwg.mxu0
        %474 = vmatprep.subr.bf16.mxu0 %v302
        %475 = vmatpush1.bf16.msra.mxu0 %v301
        %476 = vmatprep.subr.bf16.mxu0 %v349
        %477 = vmatpush1.bf16.msra.mxu0 %v346
        %478 = vmatprep.subr.bf16.mxu0 0
        %479 = vmatpush1.bf16.msra.mxu0 0
        %480 = vmatprep.subr.bf16.mxu0 0
        %481 = vmatpush1.bf16.msra.mxu0 0
        %482 = vmatprep.subr.bf16.mxu0 0
        %483 = vmatpush1.bf16.msra.mxu0 0
        %484 = vmatprep.subr.bf16.mxu0 0
        %485 = vmatpush1.bf16.msra.mxu0 0
        %486 = vmatprep.subr.bf16.mxu0 0
        %487 = vmatpush1.bf16.msra.mxu0 0
        %488 = vmatprep.subr.bf16.mxu0 0
        %489 = vmatpush1.bf16.msra.mxu0 0
        %490 = vmatprep.subr.bf16.mxu0 0
        %491 = vmatpush1.bf16.msra.mxu0 0
        %492 = vmatprep.subr.bf16.mxu0 0
        %493 = vmatpush1.bf16.msra.mxu0 0
        %494 = vmatprep.subr.bf16.mxu0 0
        %495 = vmatpush1.bf16.msra.mxu0 0
        %496 = vmatprep.subr.bf16.mxu0 0
        %497 = vmatpush1.bf16.msra.mxu0 0
        %498 = vmatprep.subr.bf16.mxu0 0
        %499 = vmatpush1.bf16.msra.mxu0 0
        %500 = vmatprep.subr.bf16.mxu0 0
        %501 = vmatpush1.bf16.msra.mxu0 0
        %502 = vmatprep.subr.bf16.mxu0 0
        %503 = vmatpush1.bf16.msra.mxu0 0
        %504 = vmatprep.subr.bf16.mxu0 0
        %505 = vmatpush1.bf16.msra.mxu0 0
        %506 = vmatprep.mubr.bf16.mxu0 0
        %507 = vmatmul.mubr.bf16.gmra.mrb[0].mxu0 %v321
        %v508 = vpop.f32.mrb[0].mxu0
        %v509 = vadd.f32 %v245, %v508
        %v510 = vpop.f32.mrb[0].mxu0
        %v511 = vadd.f32 %v245, %v510
        %v512 = vpop.f32.mrb[0].mxu0
        %v513 = vpop.f32.mrb[0].mxu0
        %514 = vdwg.mxu0
        %v515 = vmul.f32 %v386, 0.01
        %v516 = vmul.f32 %v388, 0.01
        %v517 = vmul.f32 %v427, 0.01
        %v518 = vmul.f32 %v429, 0.01
        %v519 = vmul.f32 %v468, 0.01
        %v520 = vmul.f32 %v470, 0.01
        %v521 = vmul.f32 %v509, 0.01
        %v522 = vmul.f32 %v511, 0.01
        %v523 = vmax.f32 %v386, %v515
        %v524 = vmax.f32 %v388, %v516
        %v525 = vmax.f32 %v427, %v517
        %v526 = vmax.f32 %v429, %v518
        %v527 = vmax.f32 %v468, %v519
        %v528 = vmax.f32 %v470, %v520
        %v529 = vmax.f32 %v509, %v521
        %v530 = vmax.f32 %v511, %v522
        %531 = vst [vmem:[%s221] sm:$0xff] %v523
        %532 = vst [vmem:[%s221 + $0x8] sm:$0xff] %v524
        %533 = vst [vmem:[%s221 + $0x10] sm:$0xff] %v525
        %534 = vst [vmem:[%s221 + $0x18] sm:$0xff] %v526
        %535 = vst [vmem:[%s221 + $0x20] sm:$0xff] %v527
        %536 = vst [vmem:[%s221 + $0x28] sm:$0xff] %v528
        %537 = vst [vmem:[%s221 + $0x30] sm:$0xff] %v529
        %538 = vst [vmem:[%s221 + $0x38] sm:$0xff] %v530
        %s539 = smul.u32 8, %s14
        %p540 = scmp.lt.s32.totalorder %s539, 15
        %s541 = scalar_select %p540, %s539, 15
        %s542 = smul.addr %s541, 8
        %s543 = scalar_lea.vmem %s3, %s542
        // Predicated region
        $region56: #{custom_resnet_forward.10} parent=50 // pred_check
          %p544 = pneg %p100
        $region57: #{custom_resnet_forward.10} parent=50 // pred_check_branch
          %546 = sbr.rel (%p544) target = $region59
        $region58: #{custom_resnet_forward.10} parent=50 // pred_region
          %s547 = smul.u32 8, %s14
        $region59: #{custom_resnet_forward.10} parent=50 // pred_fallthru
          _
      $region51: #{custom_resnet_forward.10} parent=5 // pred_fallthru
        _
      %p548 = scmp.le.s32.totalorder 2, %s9
      // Predicated region
      $region60: #{custom_resnet_forward.10} parent=5 // pred_check
        %p549 = pneg %p548
      $region61: #{custom_resnet_forward.10} parent=5 // pred_check_branch
        %551 = sbr.rel (%p549) target = $region63
      $region62: #{custom_resnet_forward.10} parent=5 // pred_region
        %s552 = ssub.s32 %s9, 2
        // Predicated region
        $region64: #{custom_resnet_forward.10} parent=62 // pred_check
          %p553 = pneg %p106
        $region65: #{custom_resnet_forward.10} parent=62 // pred_check_branch
          %555 = sbr.rel (%p553) target = $region67
        $region66: #{custom_resnet_forward.10} parent=62 // pred_region
          %s556 = smul.u32 8, %s15
          %p557 = scmp.lt.s32.totalorder %s556, 15
          %s558 = scalar_select %p557, %s556, 15
          %s559 = smul.addr %s558, 8
          %s560 = scalar_lea.vmem %s3, %s559
        $region67: #{custom_resnet_forward.10} parent=62 // pred_fallthru
          _
      $region63: #{custom_resnet_forward.10} parent=5 // pred_fallthru
        _
    $region6: #{custom_resnet_forward.10} parent=1 // loop_footer
      %s13 = sadd.s32 1, %s9
    $region7: #{custom_resnet_forward.10} parent=1 // loop_footer_branch
      %8 = sbr.rel target = $region3
    $region8: #{custom_resnet_forward.10} parent=1 // loop_exit
      _

// kernel: custom_resnet_forward.11
$region0: #{custom_resnet_forward.11}
  #allocation0 [shape = 'u32[]', space=smem, size = 0x4, offset = 0x4, fixed_abs, tag = 'smem constant byte address 0x4 - core index']
  #allocation1 [shape = 'u32[144,128]{1,0:T(1,128)}', space=vmem, size = 0x12000, scoped, tag = 'internal scratch']
  %s0 = inlined_call_operand.vmem [shape: bf16[72,2048], index: 0, kind: input, shape index: {}]
  %s1 = inlined_call_operand.vmem [shape: bf16[8,72], index: 1, kind: input, shape index: {}]
  %s2 = inlined_call_operand.vmem [shape: f32[8,1], index: 2, kind: input, shape index: {}]
  %s3 = inlined_call_operand.vmem [shape: f32[8,2048], index: 3, kind: output, shape index: {}]
  %s4 = sld [smem:[#allocation0]]
  $region68: #{custom_resnet_forward.11} parent=0
    _
  %s6 = ssub.s32 1, %s4
  %s7 = scalar_select 0, %s6, %s4
  $region1: #{custom_resnet_forward.11} parent=0
    #allocation2 [shape = 'u8[294912]{0}', space=vmem, size = 0x48000, scoped, tag = 'input window, operand 0']
    loop: start=0, step=1, limit=4
    $region2: #{custom_resnet_forward.11} parent=1 // loop_pre_header
      _
    $region3: #{custom_resnet_forward.11} parent=1 // loop_header
      %s9 = sphi 0, %s13
      %p10 = scmp.ge.s32.totalorder %s9, 4
      %s19 = sphi 0, %s21
      %s22 = sphi 0, %s19
      %s23 = sphi 0, %s22
      %s39 = sphi 0, %s23
      %s43 = sphi 0, %s43
      %s45 = sphi 0, %s43
      %s46 = sphi 0, %s45
      %s60 = sphi 0, %s46
      %s64 = sphi 0, %s64
      %s66 = sphi 0, %s64
      %s67 = sphi 0, %s66
      %s81 = sphi 0, %s67
      %s87 = sphi 0, %s89
      %s90 = sphi 0, %s87
      %s91 = sphi 0, %s90
      %s107 = sphi 0, %s91
    $region4: #{custom_resnet_forward.11} parent=1 // loop_header_branch
      %12 = sbr.rel (%p10) target = $region8
    $region5: #{custom_resnet_forward.11} parent=1 // loop_body
      %s14 = ssub.s32 %s9, 1
      %s15 = ssub.s32 %s9, 2
      %s16 = sadd.s32 %s9, 1
      %s17 = ssub.s32 %s9, %s16
      %p18 = scmp.eq.s32.totalorder %s17, 0
      %s20 = sadd.s32 %s19, 1
      %s21 = scalar_select %p18, %s19, %s20
      %p24 = pneg %p18
      %p25 = scmp.eq.s32.totalorder %s9, 1
      %p26 = por %p24, %p25
      %p27 = scmp.ne.s32.totalorder %s19, %s22
      %p28 = scmp.eq.s32.totalorder %s9, 0
      %p29 = por %p27, %p28
      %p30 = scmp.ne.s32.totalorder %s19, %s22
      %p31 = scmp.eq.s32.totalorder %s14, 1
      %p32 = por %p30, %p31
      %p33 = scmp.ne.s32.totalorder %s22, %s23
      %p34 = scmp.eq.s32.totalorder %s14, 0
      %p35 = por %p33, %p34
      %p36 = scmp.ne.s32.totalorder %s22, %s23
      %p37 = scmp.eq.s32.totalorder %s15, 1
      %p38 = por %p36, %p37
      %p40 = scmp.ne.s32.totalorder %s23, %s39
      %p41 = scmp.eq.s32.totalorder %s15, 0
      %p42 = por %p40, %p41
      %s44 = sadd.s32 %s43, 1
      %p47 = scmp.eq.s32.totalorder %s9, 1
      %p48 = scmp.ne.s32.totalorder %s43, %s45
      %p49 = scmp.eq.s32.totalorder %s9, 0
      %p50 = por %p48, %p49
      %p51 = scmp.ne.s32.totalorder %s43, %s45
      %p52 = scmp.eq.s32.totalorder %s14, 1
      %p53 = por %p51, %p52
      %p54 = scmp.ne.s32.totalorder %s45, %s46
      %p55 = scmp.eq.s32.totalorder %s14, 0
      %p56 = por %p54, %p55
      %p57 = scmp.ne.s32.totalorder %s45, %s46
      %p58 = scmp.eq.s32.totalorder %s15, 1
      %p59 = por %p57, %p58
      %p61 = scmp.ne.s32.totalorder %s46, %s60
      %p62 = scmp.eq.s32.totalorder %s15, 0
      %p63 = por %p61, %p62
      %s65 = sadd.s32 %s64, 1
      %p68 = scmp.eq.s32.totalorder %s9, 1
      %p69 = scmp.ne.s32.totalorder %s64, %s66
      %p70 = scmp.eq.s32.totalorder %s9, 0
      %p71 = por %p69, %p70
      %p72 = scmp.ne.s32.totalorder %s64, %s66
      %p73 = scmp.eq.s32.totalorder %s14, 1
      %p74 = por %p72, %p73
      %p75 = scmp.ne.s32.totalorder %s66, %s67
      %p76 = scmp.eq.s32.totalorder %s14, 0
      %p77 = por %p75, %p76
      %p78 = scmp.ne.s32.totalorder %s66, %s67
      %p79 = scmp.eq.s32.totalorder %s15, 1
      %p80 = por %p78, %p79
      %p82 = scmp.ne.s32.totalorder %s67, %s81
      %p83 = scmp.eq.s32.totalorder %s15, 0
      %p84 = por %p82, %p83
      %s85 = ssub.s32 %s9, %s16
      %p86 = scmp.eq.s32.totalorder %s85, 0
      %s88 = sadd.s32 %s87, 1
      %s89 = scalar_select %p86, %s87, %s88
      %p92 = pneg %p86
      %p93 = scmp.eq.s32.totalorder %s9, 1
      %p94 = por %p92, %p93
      %p95 = scmp.ne.s32.totalorder %s87, %s90
      %p96 = scmp.eq.s32.totalorder %s9, 0
      %p97 = por %p95, %p96
      %p98 = scmp.ne.s32.totalorder %s87, %s90
      %p99 = scmp.eq.s32.totalorder %s14, 1
      %p100 = por %p98, %p99
      %p101 = scmp.ne.s32.totalorder %s90, %s91
      %p102 = scmp.eq.s32.totalorder %s14, 0
      %p103 = por %p101, %p102
      %p104 = scmp.ne.s32.totalorder %s90, %s91
      %p105 = scmp.eq.s32.totalorder %s15, 1
      %p106 = por %p104, %p105
      %p108 = scmp.ne.s32.totalorder %s91, %s107
      %p109 = scmp.eq.s32.totalorder %s15, 0
      %p110 = por %p108, %p109
      %p111 = scmp.le.s32.totalorder 1, %s9
      %p112 = scmp.lt.s32.totalorder %s9, 3
      %p113 = pnand %p111, %p112
      %p114 = pneg %p113
      // Predicated region
      $region9: #{custom_resnet_forward.11} parent=5 // pred_check
        _
      $region10: #{custom_resnet_forward.11} parent=5 // pred_check_branch
        %116 = sbr.rel (%p113) target = $region12
      $region11: #{custom_resnet_forward.11} parent=5 // pred_region
        %s117 = ssub.s32 %s9, 1
        // Predicated region
        $region13: #{custom_resnet_forward.11} parent=11 // pred_check
          %p118 = pneg %p56
        $region14: #{custom_resnet_forward.11} parent=11 // pred_check_branch
          %120 = sbr.rel (%p118) target = $region16
        $region15: #{custom_resnet_forward.11} parent=11 // pred_region
          _
        $region16: #{custom_resnet_forward.11} parent=11 // pred_fallthru
          _
        // Predicated region
        $region17: #{custom_resnet_forward.11} parent=11 // pred_check
          %p121 = pneg %p77
        $region18: #{custom_resnet_forward.11} parent=11 // pred_check_branch
          %123 = sbr.rel (%p121) target = $region20
        $region19: #{custom_resnet_forward.11} parent=11 // pred_region
          _
        $region20: #{custom_resnet_forward.11} parent=11 // pred_fallthru
          _
      $region12: #{custom_resnet_forward.11} parent=5 // pred_fallthru
        _
      %p124 = scmp.lt.s32.totalorder %s9, 2
      // Predicated region
      $region21: #{custom_resnet_forward.11} parent=5 // pred_check
        %p125 = pneg %p124
      $region22: #{custom_resnet_forward.11} parent=5 // pred_check_branch
        %127 = sbr.rel (%p125) target = $region24
      $region23: #{custom_resnet_forward.11} parent=5 // pred_region
        // Predicated region
        $region25: #{custom_resnet_forward.11} parent=23 // pred_check
          %p128 = pneg %p29
        $region26: #{custom_resnet_forward.11} parent=23 // pred_check_branch
          %130 = sbr.rel (%p128) target = $region28
        $region27: #{custom_resnet_forward.11} parent=23 // pred_region
          %s131 = sand.u32 %s19, 1
          %s132 = sand.u32 %s19, 1
          %s133 = smul.addr %s132, 288
          %s134 = scalar_lea.vmem [#allocation2], %s133
          %s135 = smul.u32 8, %s9
          %s136 = smul.addr %s135, 4
          %s137 = scalar_lea.vmem %s0, %s136
          // Predicated region
          $region29: #{custom_resnet_forward.11} parent=27 // pred_check
            _
          $region30: #{custom_resnet_forward.11} parent=27 // pred_check_branch
            %139 = sbr.rel (0) target = $region32
          $region31: #{custom_resnet_forward.11} parent=27 // pred_region
            // Predicated region
            $region33: #{custom_resnet_forward.11} parent=31 // pred_check
              _
            $region34: #{custom_resnet_forward.11} parent=31 // pred_check_branch
              %141 = sbr.rel (0) target = $region36
            $region35: #{custom_resnet_forward.11} parent=31 // pred_region
              loop: start=0, step=1, limit=1
              $region37: #{custom_resnet_forward.11} parent=35 // loop_pre_header
                _
              $region38: #{custom_resnet_forward.11} parent=35 // loop_header
                %s143 = sphi 0, %s147
                %p144 = scmp.ge.s32.totalorder %s143, 1
                %s148 = sphi %s137, %s137
                %s149 = sphi %s134, %s134
              $region39: #{custom_resnet_forward.11} parent=35 // loop_header_branch
                %146 = sbr.rel (%p144) target = $region43
              $region40: #{custom_resnet_forward.11} parent=35 // loop_body
                %v150 = vld [vmem:[%s148] sm:$0xff]
                %151 = vst [vmem:[%s149] sm:$0xff] %v150
                %v152 = vld [vmem:[%s148 + $0x8] sm:$0xff]
                %153 = vst [vmem:[%s149 + $0x8] sm:$0xff] %v152
                %v154 = vld [vmem:[%s148 + $0x10] sm:$0xff]
                %155 = vst [vmem:[%s149 + $0x10] sm:$0xff] %v154
                %v156 = vld [vmem:[%s148 + $0x18] sm:$0xff]
                %157 = vst [vmem:[%s149 + $0x18] sm:$0xff] %v156
                %v158 = vld [vmem:[%s148 + $0x40] sm:$0xff]
                %159 = vst [vmem:[%s149 + $0x20] sm:$0xff] %v158
                %v160 = vld [vmem:[%s148 + $0x48] sm:$0xff]
                %161 = vst [vmem:[%s149 + $0x28] sm:$0xff] %v160
                %v162 = vld [vmem:[%s148 + $0x50] sm:$0xff]
                %163 = vst [vmem:[%s149 + $0x30] sm:$0xff] %v162
                %v164 = vld [vmem:[%s148 + $0x58] sm:$0xff]
                %165 = vst [vmem:[%s149 + $0x38] sm:$0xff] %v164
                %v166 = vld [vmem:[%s148 + $0x80] sm:$0xff]
                %167 = vst [vmem:[%s149 + $0x40] sm:$0xff] %v166
                %v168 = vld [vmem:[%s148 + $0x88] sm:$0xff]
                %169 = vst [vmem:[%s149 + $0x48] sm:$0xff] %v168
                %v170 = vld [vmem:[%s148 + $0x90] sm:$0xff]
                %171 = vst [vmem:[%s149 + $0x50] sm:$0xff] %v170
                %v172 = vld [vmem:[%s148 + $0x98] sm:$0xff]
                %173 = vst [vmem:[%s149 + $0x58] sm:$0xff] %v172
                %v174 = vld [vmem:[%s148 + $0xc0] sm:$0xff]
                %175 = vst [vmem:[%s149 + $0x60] sm:$0xff] %v174
                %v176 = vld [vmem:[%s148 + $0xc8] sm:$0xff]
                %177 = vst [vmem:[%s149 + $0x68] sm:$0xff] %v176
                %v178 = vld [vmem:[%s148 + $0xd0] sm:$0xff]
                %179 = vst [vmem:[%s149 + $0x70] sm:$0xff] %v178
                %v180 = vld [vmem:[%s148 + $0xd8] sm:$0xff]
                %181 = vst [vmem:[%s149 + $0x78] sm:$0xff] %v180
                %v182 = vld [vmem:[%s148 + $0x100] sm:$0xff]
                %183 = vst [vmem:[%s149 + $0x80] sm:$0xff] %v182
                %v184 = vld [vmem:[%s148 + $0x108] sm:$0xff]
                %185 = vst [vmem:[%s149 + $0x88] sm:$0xff] %v184
                %v186 = vld [vmem:[%s148 + $0x110] sm:$0xff]
                %187 = vst [vmem:[%s149 + $0x90] sm:$0xff] %v186
                %v188 = vld [vmem:[%s148 + $0x118] sm:$0xff]
                %189 = vst [vmem:[%s149 + $0x98] sm:$0xff] %v188
                %v190 = vld [vmem:[%s148 + $0x140] sm:$0xff]
                %191 = vst [vmem:[%s149 + $0xa0] sm:$0xff] %v190
                %v192 = vld [vmem:[%s148 + $0x148] sm:$0xff]
                %193 = vst [vmem:[%s149 + $0xa8] sm:$0xff] %v192
                %v194 = vld [vmem:[%s148 + $0x150] sm:$0xff]
                %195 = vst [vmem:[%s149 + $0xb0] sm:$0xff] %v194
                %v196 = vld [vmem:[%s148 + $0x158] sm:$0xff]
                %197 = vst [vmem:[%s149 + $0xb8] sm:$0xff] %v196
                %v198 = vld [vmem:[%s148 + $0x180] sm:$0xff]
                %199 = vst [vmem:[%s149 + $0xc0] sm:$0xff] %v198
                %v200 = vld [vmem:[%s148 + $0x188] sm:$0xff]
                %201 = vst [vmem:[%s149 + $0xc8] sm:$0xff] %v200
                %v202 = vld [vmem:[%s148 + $0x190] sm:$0xff]
                %203 = vst [vmem:[%s149 + $0xd0] sm:$0xff] %v202
                %v204 = vld [vmem:[%s148 + $0x198] sm:$0xff]
                %205 = vst [vmem:[%s149 + $0xd8] sm:$0xff] %v204
                %v206 = vld [vmem:[%s148 + $0x1c0] sm:$0xff]
                %207 = vst [vmem:[%s149 + $0xe0] sm:$0xff] %v206
                %v208 = vld [vmem:[%s148 + $0x1c8] sm:$0xff]
                %209 = vst [vmem:[%s149 + $0xe8] sm:$0xff] %v208
                %v210 = vld [vmem:[%s148 + $0x1d0] sm:$0xff]
                %211 = vst [vmem:[%s149 + $0xf0] sm:$0xff] %v210
                %v212 = vld [vmem:[%s148 + $0x1d8] sm:$0xff]
                %213 = vst [vmem:[%s149 + $0xf8] sm:$0xff] %v212
                %v214 = vld [vmem:[%s148 + $0x200] sm:$0xff]
                %215 = vst [vmem:[%s149 + $0x100] sm:$0xff] %v214
                %v216 = vld [vmem:[%s148 + $0x208] sm:$0xff]
                %217 = vst [vmem:[%s149 + $0x108] sm:$0xff] %v216
                %v218 = vld [vmem:[%s148 + $0x210] sm:$0xff]
                %219 = vst [vmem:[%s149 + $0x110] sm:$0xff] %v218
                %v220 = vld [vmem:[%s148 + $0x218] sm:$0xff]
                %221 = vst [vmem:[%s149 + $0x118] sm:$0xff] %v220
              $region41: #{custom_resnet_forward.11} parent=35 // loop_footer
                %s147 = sadd.s32 1, %s143
              $region42: #{custom_resnet_forward.11} parent=35 // loop_footer_branch
                %142 = sbr.rel target = $region38
              $region43: #{custom_resnet_forward.11} parent=35 // loop_exit
                _
            $region36: #{custom_resnet_forward.11} parent=31 // pred_fallthru
              _
            // Predicated region
            $region44: #{custom_resnet_forward.11} parent=31 // pred_check
              _
            $region45: #{custom_resnet_forward.11} parent=31 // pred_check_branch
              %223 = sbr.rel target = $region47
            $region46: #{custom_resnet_forward.11} parent=31 // pred_region
              _
            $region47: #{custom_resnet_forward.11} parent=31 // pred_fallthru
              _
          $region32: #{custom_resnet_forward.11} parent=27 // pred_fallthru
            _
          %224 = vnop
        $region28: #{custom_resnet_forward.11} parent=23 // pred_fallthru
          _
      $region24: #{custom_resnet_forward.11} parent=5 // pred_fallthru
        _
      %p225 = scmp.le.s32.totalorder 1, %s9
      %p226 = scmp.lt.s32.totalorder %s9, 3
      %p227 = pnand %p225, %p226
      %p228 = pneg %p227
      // Predicated region
      $region48: #{custom_resnet_forward.11} parent=5 // pred_check
        _
      $region49: #{custom_resnet_forward.11} parent=5 // pred_check_branch
        %230 = sbr.rel (%p227) target = $region51
      $region50: #{custom_resnet_forward.11} parent=5 // pred_region
        %s231 = ssub.s32 %s9, 1
        %s232 = sand.u32 %s22, 1
        %s233 = sand.u32 %s22, 1
        %s234 = smul.addr %s233, 288
        %s235 = scalar_lea.vmem [#allocation2], %s234
        // Predicated region
        $region52: #{custom_resnet_forward.11} parent=50 // pred_check
          %p236 = pneg %p35
        $region53: #{custom_resnet_forward.11} parent=50 // pred_check_branch
          %238 = sbr.rel (%p236) target = $region55
        $region54: #{custom_resnet_forward.11} parent=50 // pred_region
          _
        $region55: #{custom_resnet_forward.11} parent=50 // pred_fallthru
          _
        %s239 = sand.u32 %s22, 1
        %s240 = sand.u32 %s22, 1
        %s241 = smul.addr %s240, 288
        %s242 = scalar_lea.vmem [#allocation2], %s241
        %p243 = pneg %p35
        %p244 = pneg %p32
        %p245 = pneg %p56
        %p246 = pneg %p53
        %p247 = pneg %p77
        %p248 = pneg %p74
        %p249 = pneg %p103
        %p250 = pneg %p100
        %s251 = smul.u32 8, %s14
        %p252 = scmp.lt.s32.totalorder %s251, 15
        %s253 = scalar_select %p252, %s251, 15
        %s254 = smul.addr %s253, 8
        %s255 = scalar_lea.vmem %s3, %s254
        %s256 = smul.u32 8, %s14
        %s257 = smul.u32 8, %s14
        %p258 = scmp.lt.s32.totalorder %s257, 15
        %s259 = scalar_select %p258, %s257, 15
        %s260 = smul.addr %s259, 8
        %s261 = scalar_lea.vmem %s3, %s260
        %s262 = smul.u32 8, %s14
        %v264 = vld [vmem:[%s1] sm:$0xf]
        %v265 = vld [vmem:[%s235] sm:$0xff]
        %v266 = vld [vmem:[%s235 + $0x8] sm:$0xff]
        %v267 = vld [vmem:[%s235 + $0x10] sm:$0xff]
        %v268 = vld [vmem:[%s235 + $0x18] sm:$0xff]
        %v269 = vld [vmem:[%s235 + $0x20] sm:$0xff]
        %v270 = vld [vmem:[%s235 + $0x28] sm:$0xff]
        %v271 = vld [vmem:[%s235 + $0x30] sm:$0xff]
        %v272 = vld [vmem:[%s235 + $0x38] sm:$0xff]
        %v273 = vld [vmem:[%s235 + $0x40] sm:$0xff]
        %v274 = vld [vmem:[%s235 + $0x48] sm:$0xff]
        %v275 = vld [vmem:[%s235 + $0x50] sm:$0xff]
        %v276 = vld [vmem:[%s235 + $0x58] sm:$0xff]
        %v277 = vld [vmem:[%s235 + $0x60] sm:$0xff]
        %v278 = vld [vmem:[%s235 + $0x68] sm:$0xff]
        %v279 = vld [vmem:[%s235 + $0x70] sm:$0xff]
        %v280 = vld [vmem:[%s235 + $0x78] sm:$0xff]
        %v281 = vld [vmem:[%s235 + $0x80] sm:$0xff]
        %v282 = vld [vmem:[%s235 + $0x88] sm:$0xff]
        %v283 = vld [vmem:[%s235 + $0x90] sm:$0xff]
        %v284 = vld [vmem:[%s235 + $0x98] sm:$0xff]
        %v285 = vld [vmem:[%s235 + $0xa0] sm:$0xff]
        %v286 = vld [vmem:[%s235 + $0xa8] sm:$0xff]
        %v287 = vld [vmem:[%s235 + $0xb0] sm:$0xff]
        %v288 = vld [vmem:[%s235 + $0xb8] sm:$0xff]
        %v289 = vld [vmem:[%s235 + $0xc0] sm:$0xff]
        %v290 = vld [vmem:[%s235 + $0xc8] sm:$0xff]
        %v291 = vld [vmem:[%s235 + $0xd0] sm:$0xff]
        %v292 = vld [vmem:[%s235 + $0xd8] sm:$0xff]
        %v293 = vld [vmem:[%s235 + $0xe0] sm:$0xff]
        %v294 = vld [vmem:[%s235 + $0xe8] sm:$0xff]
        %v295 = vld [vmem:[%s235 + $0xf0] sm:$0xff]
        %v296 = vld [vmem:[%s235 + $0xf8] sm:$0xff]
        %v297 = vld [vmem:[%s235 + $0x100] sm:$0xff]
        %v298 = vld [vmem:[%s235 + $0x108] sm:$0xff]
        %v299 = vld [vmem:[%s235 + $0x110] sm:$0xff]
        %v300 = vld [vmem:[%s235 + $0x118] sm:$0xff]
        %v301 = vld [vmem:[%s2] sm:$0xff]
        %303 = vset.pattern.permute.xlu0 0
        %304 = vperm.xlu0 %303, %v301
        %v305 = vpop.permute.xlu0 %304
        %v343 = vunpack.c.l.b16 %v265
        %v344 = vunpack.c.h.b16 %v265
        %v345 = vunpack.c.l.b16 %v266
        %v346 = vunpack.c.h.b16 %v266
        %v347 = vunpack.c.l.b16 %v267
        %v348 = vunpack.c.h.b16 %v267
        %v349 = vunpack.c.l.b16 %v268
        %v350 = vunpack.c.h.b16 %v268
        %v351 = vunpack.c.l.b16 %v269
        %v352 = vunpack.c.h.b16 %v269
        %v353 = vunpack.c.l.b16 %v270
        %v354 = vunpack.c.h.b16 %v270
        %v355 = vunpack.c.l.b16 %v271
        %v356 = vunpack.c.h.b16 %v271
        %v357 = vunpack.c.l.b16 %v272
        %v358 = vunpack.c.h.b16 %v272
        %v359 = vunpack.c.l.b16 %v273
        %v360 = vunpack.c.h.b16 %v273
        %v361 = vunpack.c.l.b16 %v274
        %v362 = vunpack.c.h.b16 %v274
        %v363 = vunpack.c.l.b16 %v275
        %v364 = vunpack.c.h.b16 %v275
        %v365 = vunpack.c.l.b16 %v276
        %v366 = vunpack.c.h.b16 %v276
        %v367 = vunpack.c.l.b16 %v277
        %v368 = vunpack.c.h.b16 %v277
        %v369 = vunpack.c.l.b16 %v278
        %v370 = vunpack.c.h.b16 %v278
        %v371 = vunpack.c.l.b16 %v279
        %v372 = vunpack.c.h.b16 %v279
        %v373 = vunpack.c.l.b16 %v280
        %v374 = vunpack.c.h.b16 %v280
        %v375 = vunpack.c.l.b16 %v281
        %v376 = vunpack.c.h.b16 %v281
        %v377 = vunpack.c.l.b16 %v282
        %v378 = vunpack.c.h.b16 %v282
        %v379 = vunpack.c.l.b16 %v283
        %v380 = vunpack.c.h.b16 %v283
        %v381 = vunpack.c.l.b16 %v284
        %v382 = vunpack.c.h.b16 %v284
        %v383 = vunpack.c.l.b16 %v285
        %v384 = vunpack.c.h.b16 %v285
        %v385 = vunpack.c.l.b16 %v286
        %v386 = vunpack.c.h.b16 %v286
        %v387 = vunpack.c.l.b16 %v287
        %v388 = vunpack.c.h.b16 %v287
        %v389 = vunpack.c.l.b16 %v288
        %v390 = vunpack.c.h.b16 %v288
        %v391 = vunpack.c.l.b16 %v289
        %v392 = vunpack.c.h.b16 %v289
        %v393 = vunpack.c.l.b16 %v290
        %v394 = vunpack.c.h.b16 %v290
        %v395 = vunpack.c.l.b16 %v291
        %v396 = vunpack.c.h.b16 %v291
        %v397 = vunpack.c.l.b16 %v292
        %v398 = vunpack.c.h.b16 %v292
        %v399 = vunpack.c.l.b16 %v293
        %v400 = vunpack.c.h.b16 %v293
        %v401 = vunpack.c.l.b16 %v294
        %v402 = vunpack.c.h.b16 %v294
        %v403 = vunpack.c.l.b16 %v295
        %v404 = vunpack.c.h.b16 %v295
        %v405 = vunpack.c.l.b16 %v296
        %v406 = vunpack.c.h.b16 %v296
        %v407 = vunpack.c.l.b16 %v297
        %v408 = vunpack.c.h.b16 %v297
        %v409 = vunpack.c.l.b16 %v298
        %v410 = vunpack.c.h.b16 %v298
        %v411 = vunpack.c.l.b16 %v299
        %v412 = vunpack.c.h.b16 %v299
        %v413 = vunpack.c.l.b16 %v300
        %v414 = vunpack.c.h.b16 %v300
        %v415 = vpack.c.b16 %v351, %v343
        %v416 = vpack.c.b16 %v352, %v344
        %v417 = vpack.c.b16 %v353, %v345
        %v418 = vpack.c.b16 %v354, %v346
        %v419 = vpack.c.b16 %v355, %v347
        %v420 = vpack.c.b16 %v356, %v348
        %v421 = vpack.c.b16 %v357, %v349
        %v422 = vpack.c.b16 %v358, %v350
        %v423 = vpack.c.b16 %v367, %v359
        %v424 = vpack.c.b16 %v368, %v360
        %v425 = vpack.c.b16 %v369, %v361
        %v426 = vpack.c.b16 %v370, %v362
        %v427 = vpack.c.b16 %v371, %v363
        %v428 = vpack.c.b16 %v372, %v364
        %v429 = vpack.c.b16 %v373, %v365
        %v430 = vpack.c.b16 %v374, %v366
        %v431 = vpack.c.b16 %v383, %v375
        %v432 = vpack.c.b16 %v384, %v376
        %v433 = vpack.c.b16 %v385, %v377
        %v434 = vpack.c.b16 %v386, %v378
        %v435 = vpack.c.b16 %v387, %v379
        %v436 = vpack.c.b16 %v388, %v380
        %v437 = vpack.c.b16 %v389, %v381
        %v438 = vpack.c.b16 %v390, %v382
        %v439 = vpack.c.b16 %v399, %v391
        %v440 = vpack.c.b16 %v400, %v392
        %v441 = vpack.c.b16 %v401, %v393
        %v442 = vpack.c.b16 %v402, %v394
        %v443 = vpack.c.b16 %v403, %v395
        %v444 = vpack.c.b16 %v404, %v396
        %v445 = vpack.c.b16 %v405, %v397
        %v446 = vpack.c.b16 %v406, %v398
        %v447 = vpack.c.b16 %v407, %v407
        %v448 = vpack.c.b16 %v408, %v408
        %v449 = vpack.c.b16 %v409, %v409
        %v450 = vpack.c.b16 %v410, %v410
        %v451 = vpack.c.b16 %v411, %v411
        %v452 = vpack.c.b16 %v412, %v412
        %v453 = vpack.c.b16 %v413, %v413
        %v454 = vpack.c.b16 %v414, %v414
        %vm487 = vcmask 588800
        %v489 = vsel %vm487, %v264, 0
        %vm491 = vcmask 1043456
        %v493 = vsel %vm491, %v447, 0
        %v496 = vsel %vm491, %v448, 0
        %v499 = vsel %vm491, %v449, 0
        %v502 = vsel %vm491, %v450, 0
        %v505 = vsel %vm491, %v451, 0
        %v508 = vsel %vm491, %v452, 0
        %v511 = vsel %vm491, %v453, 0
        %v514 = vsel %vm491, %v454, 0
        %516 = vmatprep.subr.bf16.mxu0 %v416
        %517 = vmatpush1.bf16.msra.mxu0 %v415
        %518 = vmatprep.subr.bf16.mxu0 %v424
        %519 = vmatpush1.bf16.msra.mxu0 %v423
        %520 = vmatprep.subr.bf16.mxu0 %v432
        %521 = vmatpush1.bf16.msra.mxu0 %v431
        %522 = vmatprep.subr.bf16.mxu0 %v440
        %523 = vmatpush1.bf16.msra.mxu0 %v439
        %524 = vmatprep.subr.bf16.mxu0 %v496
        %525 = vmatpush1.bf16.msra.mxu0 %v493
        %526 = vmatprep.subr.bf16.mxu0 0
        %527 = vmatpush1.bf16.msra.mxu0 0
        %528 = vmatprep.subr.bf16.mxu0 0
        %529 = vmatpush1.bf16.msra.mxu0 0
        %530 = vmatprep.subr.bf16.mxu0 0
        %531 = vmatpush1.bf16.msra.mxu0 0
        %532 = vmatprep.subr.bf16.mxu0 0
        %533 = vmatpush1.bf16.msra.mxu0 0
        %534 = vmatprep.subr.bf16.mxu0 0
        %535 = vmatpush1.bf16.msra.mxu0 0
        %536 = vmatprep.subr.bf16.mxu0 0
        %537 = vmatpush1.bf16.msra.mxu0 0
        %538 = vmatprep.subr.bf16.mxu0 0
        %539 = vmatpush1.bf16.msra.mxu0 0
        %540 = vmatprep.subr.bf16.mxu0 0
        %541 = vmatpush1.bf16.msra.mxu0 0
        %542 = vmatprep.subr.bf16.mxu0 0
        %543 = vmatpush1.bf16.msra.mxu0 0
        %544 = vmatprep.subr.bf16.mxu0 0
        %545 = vmatpush1.bf16.msra.mxu0 0
        %546 = vmatprep.subr.bf16.mxu0 0
        %547 = vmatpush1.bf16.msra.mxu0 0
        %548 = vmatprep.mubr.bf16.mxu0 0
        %549 = vmatmul.mubr.bf16.gmra.mrb[0].mxu0 %v489
        %v550 = vpop.f32.mrb[0].mxu0
        %v551 = vadd.f32 %v305, %v550
        %v552 = vpop.f32.mrb[0].mxu0
        %v553 = vadd.f32 %v305, %v552
        %v554 = vpop.f32.mrb[0].mxu0
        %v555 = vpop.f32.mrb[0].mxu0
        %556 = vdwg.mxu0
        %557 = vmatprep.subr.bf16.mxu0 %v418
        %558 = vmatpush1.bf16.msra.mxu0 %v417
        %559 = vmatprep.subr.bf16.mxu0 %v426
        %560 = vmatpush1.bf16.msra.mxu0 %v425
        %561 = vmatprep.subr.bf16.mxu0 %v434
        %562 = vmatpush1.bf16.msra.mxu0 %v433
        %563 = vmatprep.subr.bf16.mxu0 %v442
        %564 = vmatpush1.bf16.msra.mxu0 %v441
        %565 = vmatprep.subr.bf16.mxu0 %v502
        %566 = vmatpush1.bf16.msra.mxu0 %v499
        %567 = vmatprep.subr.bf16.mxu0 0
        %568 = vmatpush1.bf16.msra.mxu0 0
        %569 = vmatprep.subr.bf16.mxu0 0
        %570 = vmatpush1.bf16.msra.mxu0 0
        %571 = vmatprep.subr.bf16.mxu0 0
        %572 = vmatpush1.bf16.msra.mxu0 0
        %573 = vmatprep.subr.bf16.mxu0 0
        %574 = vmatpush1.bf16.msra.mxu0 0
        %575 = vmatprep.subr.bf16.mxu0 0
        %576 = vmatpush1.bf16.msra.mxu0 0
        %577 = vmatprep.subr.bf16.mxu0 0
        %578 = vmatpush1.bf16.msra.mxu0 0
        %579 = vmatprep.subr.bf16.mxu0 0
        %580 = vmatpush1.bf16.msra.mxu0 0
        %581 = vmatprep.subr.bf16.mxu0 0
        %582 = vmatpush1.bf16.msra.mxu0 0
        %583 = vmatprep.subr.bf16.mxu0 0
        %584 = vmatpush1.bf16.msra.mxu0 0
        %585 = vmatprep.subr.bf16.mxu0 0
        %586 = vmatpush1.bf16.msra.mxu0 0
        %587 = vmatprep.subr.bf16.mxu0 0
        %588 = vmatpush1.bf16.msra.mxu0 0
        %589 = vmatprep.mubr.bf16.mxu0 0
        %590 = vmatmul.mubr.bf16.gmra.mrb[0].mxu0 %v489
        %v591 = vpop.f32.mrb[0].mxu0
        %v592 = vadd.f32 %v305, %v591
        %v593 = vpop.f32.mrb[0].mxu0
        %v594 = vadd.f32 %v305, %v593
        %v595 = vpop.f32.mrb[0].mxu0
        %v596 = vpop.f32.mrb[0].mxu0
        %597 = vdwg.mxu0
        %598 = vmatprep.subr.bf16.mxu0 %v420
        %599 = vmatpush1.bf16.msra.mxu0 %v419
        %600 = vmatprep.subr.bf16.mxu0 %v428
        %601 = vmatpush1.bf16.msra.mxu0 %v427
        %602 = vmatprep.subr.bf16.mxu0 %v436
        %603 = vmatpush1.bf16.msra.mxu0 %v435
        %604 = vmatprep.subr.bf16.mxu0 %v444
        %605 = vmatpush1.bf16.msra.mxu0 %v443
        %606 = vmatprep.subr.bf16.mxu0 %v508
        %607 = vmatpush1.bf16.msra.mxu0 %v505
        %608 = vmatprep.subr.bf16.mxu0 0
        %609 = vmatpush1.bf16.msra.mxu0 0
        %610 = vmatprep.subr.bf16.mxu0 0
        %611 = vmatpush1.bf16.msra.mxu0 0
        %612 = vmatprep.subr.bf16.mxu0 0
        %613 = vmatpush1.bf16.msra.mxu0 0
        %614 = vmatprep.subr.bf16.mxu0 0
        %615 = vmatpush1.bf16.msra.mxu0 0
        %616 = vmatprep.subr.bf16.mxu0 0
        %617 = vmatpush1.bf16.msra.mxu0 0
        %618 = vmatprep.subr.bf16.mxu0 0
        %619 = vmatpush1.bf16.msra.mxu0 0
        %620 = vmatprep.subr.bf16.mxu0 0
        %621 = vmatpush1.bf16.msra.mxu0 0
        %622 = vmatprep.subr.bf16.mxu0 0
        %623 = vmatpush1.bf16.msra.mxu0 0
        %624 = vmatprep.subr.bf16.mxu0 0
        %625 = vmatpush1.bf16.msra.mxu0 0
        %626 = vmatprep.subr.bf16.mxu0 0
        %627 = vmatpush1.bf16.msra.mxu0 0
        %628 = vmatprep.subr.bf16.mxu0 0
        %629 = vmatpush1.bf16.msra.mxu0 0
        %630 = vmatprep.mubr.bf16.mxu0 0
        %631 = vmatmul.mubr.bf16.gmra.mrb[0].mxu0 %v489
        %v632 = vpop.f32.mrb[0].mxu0
        %v633 = vadd.f32 %v305, %v632
        %v634 = vpop.f32.mrb[0].mxu0
        %v635 = vadd.f32 %v305, %v634
        %v636 = vpop.f32.mrb[0].mxu0
        %v637 = vpop.f32.mrb[0].mxu0
        %638 = vdwg.mxu0
        %639 = vmatprep.subr.bf16.mxu0 %v422
        %640 = vmatpush1.bf16.msra.mxu0 %v421
        %641 = vmatprep.subr.bf16.mxu0 %v430
        %642 = vmatpush1.bf16.msra.mxu0 %v429
        %643 = vmatprep.subr.bf16.mxu0 %v438
        %644 = vmatpush1.bf16.msra.mxu0 %v437
        %645 = vmatprep.subr.bf16.mxu0 %v446
        %646 = vmatpush1.bf16.msra.mxu0 %v445
        %647 = vmatprep.subr.bf16.mxu0 %v514
        %648 = vmatpush1.bf16.msra.mxu0 %v511
        %649 = vmatprep.subr.bf16.mxu0 0
        %650 = vmatpush1.bf16.msra.mxu0 0
        %651 = vmatprep.subr.bf16.mxu0 0
        %652 = vmatpush1.bf16.msra.mxu0 0
        %653 = vmatprep.subr.bf16.mxu0 0
        %654 = vmatpush1.bf16.msra.mxu0 0
        %655 = vmatprep.subr.bf16.mxu0 0
        %656 = vmatpush1.bf16.msra.mxu0 0
        %657 = vmatprep.subr.bf16.mxu0 0
        %658 = vmatpush1.bf16.msra.mxu0 0
        %659 = vmatprep.subr.bf16.mxu0 0
        %660 = vmatpush1.bf16.msra.mxu0 0
        %661 = vmatprep.subr.bf16.mxu0 0
        %662 = vmatpush1.bf16.msra.mxu0 0
        %663 = vmatprep.subr.bf16.mxu0 0
        %664 = vmatpush1.bf16.msra.mxu0 0
        %665 = vmatprep.subr.bf16.mxu0 0
        %666 = vmatpush1.bf16.msra.mxu0 0
        %667 = vmatprep.subr.bf16.mxu0 0
        %668 = vmatpush1.bf16.msra.mxu0 0
        %669 = vmatprep.subr.bf16.mxu0 0
        %670 = vmatpush1.bf16.msra.mxu0 0
        %671 = vmatprep.mubr.bf16.mxu0 0
        %672 = vmatmul.mubr.bf16.gmra.mrb[0].mxu0 %v489
        %v673 = vpop.f32.mrb[0].mxu0
        %v674 = vadd.f32 %v305, %v673
        %v675 = vpop.f32.mrb[0].mxu0
        %v676 = vadd.f32 %v305, %v675
        %v677 = vpop.f32.mrb[0].mxu0
        %v678 = vpop.f32.mrb[0].mxu0
        %679 = vdwg.mxu0
        %v680 = vmul.f32 %v551, 0.01
        %v681 = vmul.f32 %v553, 0.01
        %v682 = vmul.f32 %v592, 0.01
        %v683 = vmul.f32 %v594, 0.01
        %v684 = vmul.f32 %v633, 0.01
        %v685 = vmul.f32 %v635, 0.01
        %v686 = vmul.f32 %v674, 0.01
        %v687 = vmul.f32 %v676, 0.01
        %v688 = vmax.f32 %v551, %v680
        %v689 = vmax.f32 %v553, %v681
        %v690 = vmax.f32 %v592, %v682
        %v691 = vmax.f32 %v594, %v683
        %v692 = vmax.f32 %v633, %v684
        %v693 = vmax.f32 %v635, %v685
        %v694 = vmax.f32 %v674, %v686
        %v695 = vmax.f32 %v676, %v687
        %696 = vst [vmem:[%s261] sm:$0xff] %v688
        %697 = vst [vmem:[%s261 + $0x8] sm:$0xff] %v689
        %698 = vst [vmem:[%s261 + $0x10] sm:$0xff] %v690
        %699 = vst [vmem:[%s261 + $0x18] sm:$0xff] %v691
        %700 = vst [vmem:[%s261 + $0x20] sm:$0xff] %v692
        %701 = vst [vmem:[%s261 + $0x28] sm:$0xff] %v693
        %702 = vst [vmem:[%s261 + $0x30] sm:$0xff] %v694
        %703 = vst [vmem:[%s261 + $0x38] sm:$0xff] %v695
        %s704 = smul.u32 8, %s14
        %p705 = scmp.lt.s32.totalorder %s704, 15
        %s706 = scalar_select %p705, %s704, 15
        %s707 = smul.addr %s706, 8
        %s708 = scalar_lea.vmem %s3, %s707
        // Predicated region
        $region56: #{custom_resnet_forward.11} parent=50 // pred_check
          %p709 = pneg %p100
        $region57: #{custom_resnet_forward.11} parent=50 // pred_check_branch
          %711 = sbr.rel (%p709) target = $region59
        $region58: #{custom_resnet_forward.11} parent=50 // pred_region
          %s712 = smul.u32 8, %s14
        $region59: #{custom_resnet_forward.11} parent=50 // pred_fallthru
          _
      $region51: #{custom_resnet_forward.11} parent=5 // pred_fallthru
        _
      %p713 = scmp.le.s32.totalorder 2, %s9
      // Predicated region
      $region60: #{custom_resnet_forward.11} parent=5 // pred_check
        %p714 = pneg %p713
      $region61: #{custom_resnet_forward.11} parent=5 // pred_check_branch
        %716 = sbr.rel (%p714) target = $region63
      $region62: #{custom_resnet_forward.11} parent=5 // pred_region
        %s717 = ssub.s32 %s9, 2
        // Predicated region
        $region64: #{custom_resnet_forward.11} parent=62 // pred_check
          %p718 = pneg %p106
        $region65: #{custom_resnet_forward.11} parent=62 // pred_check_branch
          %720 = sbr.rel (%p718) target = $region67
        $region66: #{custom_resnet_forward.11} parent=62 // pred_region
          %s721 = smul.u32 8, %s15
          %p722 = scmp.lt.s32.totalorder %s721, 15
          %s723 = scalar_select %p722, %s721, 15
          %s724 = smul.addr %s723, 8
          %s725 = scalar_lea.vmem %s3, %s724
        $region67: #{custom_resnet_forward.11} parent=62 // pred_fallthru
          _
      $region63: #{custom_resnet_forward.11} parent=5 // pred_fallthru
        _
    $region6: #{custom_resnet_forward.11} parent=1 // loop_footer
      %s13 = sadd.s32 1, %s9
    $region7: #{custom_resnet_forward.11} parent=1 // loop_footer_branch
      %8 = sbr.rel target = $region3
    $region8: #{custom_resnet_forward.11} parent=1 // loop_exit
      _

// kernel: custom_resnet_forward.12
$region0: #{custom_resnet_forward.12}
  #allocation0 [shape = 'u32[]', space=smem, size = 0x4, offset = 0x4, fixed_abs, tag = 'smem constant byte address 0x4 - core index']
  #allocation1 [shape = 'u32[144,128]{1,0:T(1,128)}', space=vmem, size = 0x12000, scoped, tag = 'internal scratch']
  %s0 = inlined_call_operand.vmem [shape: bf16[72,2048], index: 0, kind: input, shape index: {}]
  %s1 = inlined_call_operand.vmem [shape: bf16[8,72], index: 1, kind: input, shape index: {}]
  %s2 = inlined_call_operand.vmem [shape: f32[8,1], index: 2, kind: input, shape index: {}]
  %s3 = inlined_call_operand.vmem [shape: f32[8,2048], index: 3, kind: input, shape index: {}]
  %s4 = inlined_call_operand.vmem [shape: f32[8,2048], index: 4, kind: output, shape index: {}]
  %s5 = sld [smem:[#allocation0]]
  $region72: #{custom_resnet_forward.12} parent=0
    _
  %s7 = ssub.s32 1, %s5
  %s8 = scalar_select 0, %s7, %s5
  $region1: #{custom_resnet_forward.12} parent=0
    #allocation2 [shape = 'u8[294912]{0}', space=vmem, size = 0x48000, scoped, tag = 'input window, operand 0']
    loop: start=0, step=1, limit=4
    $region2: #{custom_resnet_forward.12} parent=1 // loop_pre_header
      _
    $region3: #{custom_resnet_forward.12} parent=1 // loop_header
      %s10 = sphi 0, %s14
      %p11 = scmp.ge.s32.totalorder %s10, 4
      %s20 = sphi 0, %s22
      %s23 = sphi 0, %s20
      %s24 = sphi 0, %s23
      %s40 = sphi 0, %s24
      %s44 = sphi 0, %s44
      %s46 = sphi 0, %s44
      %s47 = sphi 0, %s46
      %s61 = sphi 0, %s47
      %s65 = sphi 0, %s65
      %s67 = sphi 0, %s65
      %s68 = sphi 0, %s67
      %s82 = sphi 0, %s68
      %s88 = sphi 0, %s90
      %s91 = sphi 0, %s88
      %s92 = sphi 0, %s91
      %s108 = sphi 0, %s92
      %s114 = sphi 0, %s116
      %s117 = sphi 0, %s114
      %s118 = sphi 0, %s117
      %s134 = sphi 0, %s118
    $region4: #{custom_resnet_forward.12} parent=1 // loop_header_branch
      %13 = sbr.rel (%p11) target = $region8
    $region5: #{custom_resnet_forward.12} parent=1 // loop_body
      %s15 = ssub.s32 %s10, 1
      %s16 = ssub.s32 %s10, 2
      %s17 = sadd.s32 %s10, 1
      %s18 = ssub.s32 %s10, %s17
      %p19 = scmp.eq.s32.totalorder %s18, 0
      %s21 = sadd.s32 %s20, 1
      %s22 = scalar_select %p19, %s20, %s21
      %p25 = pneg %p19
      %p26 = scmp.eq.s32.totalorder %s10, 1
      %p27 = por %p25, %p26
      %p28 = scmp.ne.s32.totalorder %s20, %s23
      %p29 = scmp.eq.s32.totalorder %s10, 0
      %p30 = por %p28, %p29
      %p31 = scmp.ne.s32.totalorder %s20, %s23
      %p32 = scmp.eq.s32.totalorder %s15, 1
      %p33 = por %p31, %p32
      %p34 = scmp.ne.s32.totalorder %s23, %s24
      %p35 = scmp.eq.s32.totalorder %s15, 0
      %p36 = por %p34, %p35
      %p37 = scmp.ne.s32.totalorder %s23, %s24
      %p38 = scmp.eq.s32.totalorder %s16, 1
      %p39 = por %p37, %p38
      %p41 = scmp.ne.s32.totalorder %s24, %s40
      %p42 = scmp.eq.s32.totalorder %s16, 0
      %p43 = por %p41, %p42
      %s45 = sadd.s32 %s44, 1
      %p48 = scmp.eq.s32.totalorder %s10, 1
      %p49 = scmp.ne.s32.totalorder %s44, %s46
      %p50 = scmp.eq.s32.totalorder %s10, 0
      %p51 = por %p49, %p50
      %p52 = scmp.ne.s32.totalorder %s44, %s46
      %p53 = scmp.eq.s32.totalorder %s15, 1
      %p54 = por %p52, %p53
      %p55 = scmp.ne.s32.totalorder %s46, %s47
      %p56 = scmp.eq.s32.totalorder %s15, 0
      %p57 = por %p55, %p56
      %p58 = scmp.ne.s32.totalorder %s46, %s47
      %p59 = scmp.eq.s32.totalorder %s16, 1
      %p60 = por %p58, %p59
      %p62 = scmp.ne.s32.totalorder %s47, %s61
      %p63 = scmp.eq.s32.totalorder %s16, 0
      %p64 = por %p62, %p63
      %s66 = sadd.s32 %s65, 1
      %p69 = scmp.eq.s32.totalorder %s10, 1
      %p70 = scmp.ne.s32.totalorder %s65, %s67
      %p71 = scmp.eq.s32.totalorder %s10, 0
      %p72 = por %p70, %p71
      %p73 = scmp.ne.s32.totalorder %s65, %s67
      %p74 = scmp.eq.s32.totalorder %s15, 1
      %p75 = por %p73, %p74
      %p76 = scmp.ne.s32.totalorder %s67, %s68
      %p77 = scmp.eq.s32.totalorder %s15, 0
      %p78 = por %p76, %p77
      %p79 = scmp.ne.s32.totalorder %s67, %s68
      %p80 = scmp.eq.s32.totalorder %s16, 1
      %p81 = por %p79, %p80
      %p83 = scmp.ne.s32.totalorder %s68, %s82
      %p84 = scmp.eq.s32.totalorder %s16, 0
      %p85 = por %p83, %p84
      %s86 = ssub.s32 %s10, %s17
      %p87 = scmp.eq.s32.totalorder %s86, 0
      %s89 = sadd.s32 %s88, 1
      %s90 = scalar_select %p87, %s88, %s89
      %p93 = pneg %p87
      %p94 = scmp.eq.s32.totalorder %s10, 1
      %p95 = por %p93, %p94
      %p96 = scmp.ne.s32.totalorder %s88, %s91
      %p97 = scmp.eq.s32.totalorder %s10, 0
      %p98 = por %p96, %p97
      %p99 = scmp.ne.s32.totalorder %s88, %s91
      %p100 = scmp.eq.s32.totalorder %s15, 1
      %p101 = por %p99, %p100
      %p102 = scmp.ne.s32.totalorder %s91, %s92
      %p103 = scmp.eq.s32.totalorder %s15, 0
      %p104 = por %p102, %p103
      %p105 = scmp.ne.s32.totalorder %s91, %s92
      %p106 = scmp.eq.s32.totalorder %s16, 1
      %p107 = por %p105, %p106
      %p109 = scmp.ne.s32.totalorder %s92, %s108
      %p110 = scmp.eq.s32.totalorder %s16, 0
      %p111 = por %p109, %p110
      %s112 = ssub.s32 %s10, %s17
      %p113 = scmp.eq.s32.totalorder %s112, 0
      %s115 = sadd.s32 %s114, 1
      %s116 = scalar_select %p113, %s114, %s115
      %p119 = pneg %p113
      %p120 = scmp.eq.s32.totalorder %s10, 1
      %p121 = por %p119, %p120
      %p122 = scmp.ne.s32.totalorder %s114, %s117
      %p123 = scmp.eq.s32.totalorder %s10, 0
      %p124 = por %p122, %p123
      %p125 = scmp.ne.s32.totalorder %s114, %s117
      %p126 = scmp.eq.s32.totalorder %s15, 1
      %p127 = por %p125, %p126
      %p128 = scmp.ne.s32.totalorder %s117, %s118
      %p129 = scmp.eq.s32.totalorder %s15, 0
      %p130 = por %p128, %p129
      %p131 = scmp.ne.s32.totalorder %s117, %s118
      %p132 = scmp.eq.s32.totalorder %s16, 1
      %p133 = por %p131, %p132
      %p135 = scmp.ne.s32.totalorder %s118, %s134
      %p136 = scmp.eq.s32.totalorder %s16, 0
      %p137 = por %p135, %p136
      %p138 = scmp.le.s32.totalorder 1, %s10
      %p139 = scmp.lt.s32.totalorder %s10, 3
      %p140 = pnand %p138, %p139
      %p141 = pneg %p140
      // Predicated region
      $region9: #{custom_resnet_forward.12} parent=5 // pred_check
        _
      $region10: #{custom_resnet_forward.12} parent=5 // pred_check_branch
        %143 = sbr.rel (%p140) target = $region12
      $region11: #{custom_resnet_forward.12} parent=5 // pred_region
        %s144 = ssub.s32 %s10, 1
        // Predicated region
        $region13: #{custom_resnet_forward.12} parent=11 // pred_check
          %p145 = pneg %p57
        $region14: #{custom_resnet_forward.12} parent=11 // pred_check_branch
          %147 = sbr.rel (%p145) target = $region16
        $region15: #{custom_resnet_forward.12} parent=11 // pred_region
          _
        $region16: #{custom_resnet_forward.12} parent=11 // pred_fallthru
          _
        // Predicated region
        $region17: #{custom_resnet_forward.12} parent=11 // pred_check
          %p148 = pneg %p78
        $region18: #{custom_resnet_forward.12} parent=11 // pred_check_branch
          %150 = sbr.rel (%p148) target = $region20
        $region19: #{custom_resnet_forward.12} parent=11 // pred_region
          _
        $region20: #{custom_resnet_forward.12} parent=11 // pred_fallthru
          _
      $region12: #{custom_resnet_forward.12} parent=5 // pred_fallthru
        _
      %p151 = scmp.lt.s32.totalorder %s10, 2
      // Predicated region
      $region21: #{custom_resnet_forward.12} parent=5 // pred_check
        %p152 = pneg %p151
      $region22: #{custom_resnet_forward.12} parent=5 // pred_check_branch
        %154 = sbr.rel (%p152) target = $region24
      $region23: #{custom_resnet_forward.12} parent=5 // pred_region
        // Predicated region
        $region25: #{custom_resnet_forward.12} parent=23 // pred_check
          %p155 = pneg %p30
        $region26: #{custom_resnet_forward.12} parent=23 // pred_check_branch
          %157 = sbr.rel (%p155) target = $region28
        $region27: #{custom_resnet_forward.12} parent=23 // pred_region
          %s158 = sand.u32 %s20, 1
          %s159 = sand.u32 %s20, 1
          %s160 = smul.addr %s159, 288
          %s161 = scalar_lea.vmem [#allocation2], %s160
          %s162 = smul.u32 8, %s10
          %s163 = smul.addr %s162, 4
          %s164 = scalar_lea.vmem %s0, %s163
          // Predicated region
          $region29: #{custom_resnet_forward.12} parent=27 // pred_check
            _
          $region30: #{custom_resnet_forward.12} parent=27 // pred_check_branch
            %166 = sbr.rel (0) target = $region32
          $region31: #{custom_resnet_forward.12} parent=27 // pred_region
            // Predicated region
            $region33: #{custom_resnet_forward.12} parent=31 // pred_check
              _
            $region34: #{custom_resnet_forward.12} parent=31 // pred_check_branch
              %168 = sbr.rel (0) target = $region36
            $region35: #{custom_resnet_forward.12} parent=31 // pred_region
              loop: start=0, step=1, limit=1
              $region37: #{custom_resnet_forward.12} parent=35 // loop_pre_header
                _
              $region38: #{custom_resnet_forward.12} parent=35 // loop_header
                %s170 = sphi 0, %s174
                %p171 = scmp.ge.s32.totalorder %s170, 1
                %s175 = sphi %s164, %s164
                %s176 = sphi %s161, %s161
              $region39: #{custom_resnet_forward.12} parent=35 // loop_header_branch
                %173 = sbr.rel (%p171) target = $region43
              $region40: #{custom_resnet_forward.12} parent=35 // loop_body
                %v177 = vld [vmem:[%s175] sm:$0xff]
                %178 = vst [vmem:[%s176] sm:$0xff] %v177
                %v179 = vld [vmem:[%s175 + $0x8] sm:$0xff]
                %180 = vst [vmem:[%s176 + $0x8] sm:$0xff] %v179
                %v181 = vld [vmem:[%s175 + $0x10] sm:$0xff]
                %182 = vst [vmem:[%s176 + $0x10] sm:$0xff] %v181
                %v183 = vld [vmem:[%s175 + $0x18] sm:$0xff]
                %184 = vst [vmem:[%s176 + $0x18] sm:$0xff] %v183
                %v185 = vld [vmem:[%s175 + $0x40] sm:$0xff]
                %186 = vst [vmem:[%s176 + $0x20] sm:$0xff] %v185
                %v187 = vld [vmem:[%s175 + $0x48] sm:$0xff]
                %188 = vst [vmem:[%s176 + $0x28] sm:$0xff] %v187
                %v189 = vld [vmem:[%s175 + $0x50] sm:$0xff]
                %190 = vst [vmem:[%s176 + $0x30] sm:$0xff] %v189
                %v191 = vld [vmem:[%s175 + $0x58] sm:$0xff]
                %192 = vst [vmem:[%s176 + $0x38] sm:$0xff] %v191
                %v193 = vld [vmem:[%s175 + $0x80] sm:$0xff]
                %194 = vst [vmem:[%s176 + $0x40] sm:$0xff] %v193
                %v195 = vld [vmem:[%s175 + $0x88] sm:$0xff]
                %196 = vst [vmem:[%s176 + $0x48] sm:$0xff] %v195
                %v197 = vld [vmem:[%s175 + $0x90] sm:$0xff]
                %198 = vst [vmem:[%s176 + $0x50] sm:$0xff] %v197
                %v199 = vld [vmem:[%s175 + $0x98] sm:$0xff]
                %200 = vst [vmem:[%s176 + $0x58] sm:$0xff] %v199
                %v201 = vld [vmem:[%s175 + $0xc0] sm:$0xff]
                %202 = vst [vmem:[%s176 + $0x60] sm:$0xff] %v201
                %v203 = vld [vmem:[%s175 + $0xc8] sm:$0xff]
                %204 = vst [vmem:[%s176 + $0x68] sm:$0xff] %v203
                %v205 = vld [vmem:[%s175 + $0xd0] sm:$0xff]
                %206 = vst [vmem:[%s176 + $0x70] sm:$0xff] %v205
                %v207 = vld [vmem:[%s175 + $0xd8] sm:$0xff]
                %208 = vst [vmem:[%s176 + $0x78] sm:$0xff] %v207
                %v209 = vld [vmem:[%s175 + $0x100] sm:$0xff]
                %210 = vst [vmem:[%s176 + $0x80] sm:$0xff] %v209
                %v211 = vld [vmem:[%s175 + $0x108] sm:$0xff]
                %212 = vst [vmem:[%s176 + $0x88] sm:$0xff] %v211
                %v213 = vld [vmem:[%s175 + $0x110] sm:$0xff]
                %214 = vst [vmem:[%s176 + $0x90] sm:$0xff] %v213
                %v215 = vld [vmem:[%s175 + $0x118] sm:$0xff]
                %216 = vst [vmem:[%s176 + $0x98] sm:$0xff] %v215
                %v217 = vld [vmem:[%s175 + $0x140] sm:$0xff]
                %218 = vst [vmem:[%s176 + $0xa0] sm:$0xff] %v217
                %v219 = vld [vmem:[%s175 + $0x148] sm:$0xff]
                %220 = vst [vmem:[%s176 + $0xa8] sm:$0xff] %v219
                %v221 = vld [vmem:[%s175 + $0x150] sm:$0xff]
                %222 = vst [vmem:[%s176 + $0xb0] sm:$0xff] %v221
                %v223 = vld [vmem:[%s175 + $0x158] sm:$0xff]
                %224 = vst [vmem:[%s176 + $0xb8] sm:$0xff] %v223
                %v225 = vld [vmem:[%s175 + $0x180] sm:$0xff]
                %226 = vst [vmem:[%s176 + $0xc0] sm:$0xff] %v225
                %v227 = vld [vmem:[%s175 + $0x188] sm:$0xff]
                %228 = vst [vmem:[%s176 + $0xc8] sm:$0xff] %v227
                %v229 = vld [vmem:[%s175 + $0x190] sm:$0xff]
                %230 = vst [vmem:[%s176 + $0xd0] sm:$0xff] %v229
                %v231 = vld [vmem:[%s175 + $0x198] sm:$0xff]
                %232 = vst [vmem:[%s176 + $0xd8] sm:$0xff] %v231
                %v233 = vld [vmem:[%s175 + $0x1c0] sm:$0xff]
                %234 = vst [vmem:[%s176 + $0xe0] sm:$0xff] %v233
                %v235 = vld [vmem:[%s175 + $0x1c8] sm:$0xff]
                %236 = vst [vmem:[%s176 + $0xe8] sm:$0xff] %v235
                %v237 = vld [vmem:[%s175 + $0x1d0] sm:$0xff]
                %238 = vst [vmem:[%s176 + $0xf0] sm:$0xff] %v237
                %v239 = vld [vmem:[%s175 + $0x1d8] sm:$0xff]
                %240 = vst [vmem:[%s176 + $0xf8] sm:$0xff] %v239
                %v241 = vld [vmem:[%s175 + $0x200] sm:$0xff]
                %242 = vst [vmem:[%s176 + $0x100] sm:$0xff] %v241
                %v243 = vld [vmem:[%s175 + $0x208] sm:$0xff]
                %244 = vst [vmem:[%s176 + $0x108] sm:$0xff] %v243
                %v245 = vld [vmem:[%s175 + $0x210] sm:$0xff]
                %246 = vst [vmem:[%s176 + $0x110] sm:$0xff] %v245
                %v247 = vld [vmem:[%s175 + $0x218] sm:$0xff]
                %248 = vst [vmem:[%s176 + $0x118] sm:$0xff] %v247
              $region41: #{custom_resnet_forward.12} parent=35 // loop_footer
                %s174 = sadd.s32 1, %s170
              $region42: #{custom_resnet_forward.12} parent=35 // loop_footer_branch
                %169 = sbr.rel target = $region38
              $region43: #{custom_resnet_forward.12} parent=35 // loop_exit
                _
            $region36: #{custom_resnet_forward.12} parent=31 // pred_fallthru
              _
            // Predicated region
            $region44: #{custom_resnet_forward.12} parent=31 // pred_check
              _
            $region45: #{custom_resnet_forward.12} parent=31 // pred_check_branch
              %250 = sbr.rel target = $region47
            $region46: #{custom_resnet_forward.12} parent=31 // pred_region
              _
            $region47: #{custom_resnet_forward.12} parent=31 // pred_fallthru
              _
          $region32: #{custom_resnet_forward.12} parent=27 // pred_fallthru
            _
          %251 = vnop
        $region28: #{custom_resnet_forward.12} parent=23 // pred_fallthru
          _
        // Predicated region
        $region48: #{custom_resnet_forward.12} parent=23 // pred_check
          %p252 = pneg %p98
        $region49: #{custom_resnet_forward.12} parent=23 // pred_check_branch
          %254 = sbr.rel (%p252) target = $region51
        $region50: #{custom_resnet_forward.12} parent=23 // pred_region
          %s255 = smul.u32 8, %s10
          %p256 = scmp.lt.s32.totalorder %s255, 15
          %s257 = scalar_select %p256, %s255, 15
          %s258 = smul.addr %s257, 8
          %s259 = scalar_lea.vmem %s3, %s258
          %s260 = smul.u32 8, %s10
        $region51: #{custom_resnet_forward.12} parent=23 // pred_fallthru
          _
      $region24: #{custom_resnet_forward.12} parent=5 // pred_fallthru
        _
      %p261 = scmp.le.s32.totalorder 1, %s10
      %p262 = scmp.lt.s32.totalorder %s10, 3
      %p263 = pnand %p261, %p262
      %p264 = pneg %p263
      // Predicated region
      $region52: #{custom_resnet_forward.12} parent=5 // pred_check
        _
      $region53: #{custom_resnet_forward.12} parent=5 // pred_check_branch
        %266 = sbr.rel (%p263) target = $region55
      $region54: #{custom_resnet_forward.12} parent=5 // pred_region
        %s267 = ssub.s32 %s10, 1
        %s268 = sand.u32 %s23, 1
        %s269 = sand.u32 %s23, 1
        %s270 = smul.addr %s269, 288
        %s271 = scalar_lea.vmem [#allocation2], %s270
        // Predicated region
        $region56: #{custom_resnet_forward.12} parent=54 // pred_check
          %p272 = pneg %p36
        $region57: #{custom_resnet_forward.12} parent=54 // pred_check_branch
          %274 = sbr.rel (%p272) target = $region59
        $region58: #{custom_resnet_forward.12} parent=54 // pred_region
          _
        $region59: #{custom_resnet_forward.12} parent=54 // pred_fallthru
          _
        %s275 = sand.u32 %s23, 1
        %s276 = sand.u32 %s23, 1
        %s277 = smul.addr %s276, 288
        %s278 = scalar_lea.vmem [#allocation2], %s277
        %p279 = pneg %p36
        %p280 = pneg %p33
        %p281 = pneg %p57
        %p282 = pneg %p54
        %p283 = pneg %p78
        %p284 = pneg %p75
        %s285 = smul.u32 8, %s15
        %p286 = scmp.lt.s32.totalorder %s285, 15
        %s287 = scalar_select %p286, %s285, 15
        %s288 = smul.addr %s287, 8
        %s289 = scalar_lea.vmem %s3, %s288
        %p290 = pneg %p104
        %p291 = pneg %p101
        %p292 = pneg %p130
        %p293 = pneg %p127
        %s294 = smul.u32 8, %s15
        %p295 = scmp.lt.s32.totalorder %s294, 15
        %s296 = scalar_select %p295, %s294, 15
        %s297 = smul.addr %s296, 8
        %s298 = scalar_lea.vmem %s4, %s297
        %s299 = smul.u32 8, %s15
        %s300 = smul.u32 8, %s15
        %p301 = scmp.lt.s32.totalorder %s300, 15
        %s302 = scalar_select %p301, %s300, 15
        %s303 = smul.addr %s302, 8
        %s304 = scalar_lea.vmem %s3, %s303
        %s305 = smul.u32 8, %s15
        %s306 = smul.u32 8, %s15
        %p307 = scmp.lt.s32.totalorder %s306, 15
        %s308 = scalar_select %p307, %s306, 15
        %s309 = smul.addr %s308, 8
        %s310 = scalar_lea.vmem %s4, %s309
        %s311 = smul.u32 8, %s15
        %v313 = vld [vmem:[%s1] sm:$0xf]
        %v314 = vld [vmem:[%s271] sm:$0xff]
        %v315 = vld [vmem:[%s271 + $0x8] sm:$0xff]
        %v316 = vld [vmem:[%s271 + $0x10] sm:$0xff]
        %v317 = vld [vmem:[%s271 + $0x18] sm:$0xff]
        %v318 = vld [vmem:[%s271 + $0x20] sm:$0xff]
        %v319 = vld [vmem:[%s271 + $0x28] sm:$0xff]
        %v320 = vld [vmem:[%s271 + $0x30] sm:$0xff]
        %v321 = vld [vmem:[%s271 + $0x38] sm:$0xff]
        %v322 = vld [vmem:[%s271 + $0x40] sm:$0xff]
        %v323 = vld [vmem:[%s271 + $0x48] sm:$0xff]
        %v324 = vld [vmem:[%s271 + $0x50] sm:$0xff]
        %v325 = vld [vmem:[%s271 + $0x58] sm:$0xff]
        %v326 = vld [vmem:[%s271 + $0x60] sm:$0xff]
        %v327 = vld [vmem:[%s271 + $0x68] sm:$0xff]
        %v328 = vld [vmem:[%s271 + $0x70] sm:$0xff]
        %v329 = vld [vmem:[%s271 + $0x78] sm:$0xff]
        %v330 = vld [vmem:[%s271 + $0x80] sm:$0xff]
        %v331 = vld [vmem:[%s271 + $0x88] sm:$0xff]
        %v332 = vld [vmem:[%s271 + $0x90] sm:$0xff]
        %v333 = vld [vmem:[%s271 + $0x98] sm:$0xff]
        %v334 = vld [vmem:[%s271 + $0xa0] sm:$0xff]
        %v335 = vld [vmem:[%s271 + $0xa8] sm:$0xff]
        %v336 = vld [vmem:[%s271 + $0xb0] sm:$0xff]
        %v337 = vld [vmem:[%s271 + $0xb8] sm:$0xff]
        %v338 = vld [vmem:[%s271 + $0xc0] sm:$0xff]
        %v339 = vld [vmem:[%s271 + $0xc8] sm:$0xff]
        %v340 = vld [vmem:[%s271 + $0xd0] sm:$0xff]
        %v341 = vld [vmem:[%s271 + $0xd8] sm:$0xff]
        %v342 = vld [vmem:[%s271 + $0xe0] sm:$0xff]
        %v343 = vld [vmem:[%s271 + $0xe8] sm:$0xff]
        %v344 = vld [vmem:[%s271 + $0xf0] sm:$0xff]
        %v345 = vld [vmem:[%s271 + $0xf8] sm:$0xff]
        %v346 = vld [vmem:[%s271 + $0x100] sm:$0xff]
        %v347 = vld [vmem:[%s271 + $0x108] sm:$0xff]
        %v348 = vld [vmem:[%s271 + $0x110] sm:$0xff]
        %v349 = vld [vmem:[%s271 + $0x118] sm:$0xff]
        %v350 = vld [vmem:[%s2] sm:$0xff]
        %352 = vset.pattern.permute.xlu0 0
        %353 = vperm.xlu0 %352, %v350
        %v354 = vpop.permute.xlu0 %353
        %v392 = vunpack.c.l.b16 %v314
        %v393 = vunpack.c.h.b16 %v314
        %v394 = vunpack.c.l.b16 %v315
        %v395 = vunpack.c.h.b16 %v315
        %v396 = vunpack.c.l.b16 %v316
        %v397 = vunpack.c.h.b16 %v316
        %v398 = vunpack.c.l.b16 %v317
        %v399 = vunpack.c.h.b16 %v317
        %v400 = vunpack.c.l.b16 %v318
        %v401 = vunpack.c.h.b16 %v318
        %v402 = vunpack.c.l.b16 %v319
        %v403 = vunpack.c.h.b16 %v319
        %v404 = vunpack.c.l.b16 %v320
        %v405 = vunpack.c.h.b16 %v320
        %v406 = vunpack.c.l.b16 %v321
        %v407 = vunpack.c.h.b16 %v321
        %v408 = vunpack.c.l.b16 %v322
        %v409 = vunpack.c.h.b16 %v322
        %v410 = vunpack.c.l.b16 %v323
        %v411 = vunpack.c.h.b16 %v323
        %v412 = vunpack.c.l.b16 %v324
        %v413 = vunpack.c.h.b16 %v324
        %v414 = vunpack.c.l.b16 %v325
        %v415 = vunpack.c.h.b16 %v325
        %v416 = vunpack.c.l.b16 %v326
        %v417 = vunpack.c.h.b16 %v326
        %v418 = vunpack.c.l.b16 %v327
        %v419 = vunpack.c.h.b16 %v327
        %v420 = vunpack.c.l.b16 %v328
        %v421 = vunpack.c.h.b16 %v328
        %v422 = vunpack.c.l.b16 %v329
        %v423 = vunpack.c.h.b16 %v329
        %v424 = vunpack.c.l.b16 %v330
        %v425 = vunpack.c.h.b16 %v330
        %v426 = vunpack.c.l.b16 %v331
        %v427 = vunpack.c.h.b16 %v331
        %v428 = vunpack.c.l.b16 %v332
        %v429 = vunpack.c.h.b16 %v332
        %v430 = vunpack.c.l.b16 %v333
        %v431 = vunpack.c.h.b16 %v333
        %v432 = vunpack.c.l.b16 %v334
        %v433 = vunpack.c.h.b16 %v334
        %v434 = vunpack.c.l.b16 %v335
        %v435 = vunpack.c.h.b16 %v335
        %v436 = vunpack.c.l.b16 %v336
        %v437 = vunpack.c.h.b16 %v336
        %v438 = vunpack.c.l.b16 %v337
        %v439 = vunpack.c.h.b16 %v337
        %v440 = vunpack.c.l.b16 %v338
        %v441 = vunpack.c.h.b16 %v338
        %v442 = vunpack.c.l.b16 %v339
        %v443 = vunpack.c.h.b16 %v339
        %v444 = vunpack.c.l.b16 %v340
        %v445 = vunpack.c.h.b16 %v340
        %v446 = vunpack.c.l.b16 %v341
        %v447 = vunpack.c.h.b16 %v341
        %v448 = vunpack.c.l.b16 %v342
        %v449 = vunpack.c.h.b16 %v342
        %v450 = vunpack.c.l.b16 %v343
        %v451 = vunpack.c.h.b16 %v343
        %v452 = vunpack.c.l.b16 %v344
        %v453 = vunpack.c.h.b16 %v344
        %v454 = vunpack.c.l.b16 %v345
        %v455 = vunpack.c.h.b16 %v345
        %v456 = vunpack.c.l.b16 %v346
        %v457 = vunpack.c.h.b16 %v346
        %v458 = vunpack.c.l.b16 %v347
        %v459 = vunpack.c.h.b16 %v347
        %v460 = vunpack.c.l.b16 %v348
        %v461 = vunpack.c.h.b16 %v348
        %v462 = vunpack.c.l.b16 %v349
        %v463 = vunpack.c.h.b16 %v349
        %v464 = vpack.c.b16 %v400, %v392
        %v465 = vpack.c.b16 %v401, %v393
        %v466 = vpack.c.b16 %v402, %v394
        %v467 = vpack.c.b16 %v403, %v395
        %v468 = vpack.c.b16 %v404, %v396
        %v469 = vpack.c.b16 %v405, %v397
        %v470 = vpack.c.b16 %v406, %v398
        %v471 = vpack.c.b16 %v407, %v399
        %v472 = vpack.c.b16 %v416, %v408
        %v473 = vpack.c.b16 %v417, %v409
        %v474 = vpack.c.b16 %v418, %v410
        %v475 = vpack.c.b16 %v419, %v411
        %v476 = vpack.c.b16 %v420, %v412
        %v477 = vpack.c.b16 %v421, %v413
        %v478 = vpack.c.b16 %v422, %v414
        %v479 = vpack.c.b16 %v423, %v415
        %v480 = vpack.c.b16 %v432, %v424
        %v481 = vpack.c.b16 %v433, %v425
        %v482 = vpack.c.b16 %v434, %v426
        %v483 = vpack.c.b16 %v435, %v427
        %v484 = vpack.c.b16 %v436, %v428
        %v485 = vpack.c.b16 %v437, %v429
        %v486 = vpack.c.b16 %v438, %v430
        %v487 = vpack.c.b16 %v439, %v431
        %v488 = vpack.c.b16 %v448, %v440
        %v489 = vpack.c.b16 %v449, %v441
        %v490 = vpack.c.b16 %v450, %v442
        %v491 = vpack.c.b16 %v451, %v443
        %v492 = vpack.c.b16 %v452, %v444
        %v493 = vpack.c.b16 %v453, %v445
        %v494 = vpack.c.b16 %v454, %v446
        %v495 = vpack.c.b16 %v455, %v447
        %v496 = vpack.c.b16 %v456, %v456
        %v497 = vpack.c.b16 %v457, %v457
        %v498 = vpack.c.b16 %v458, %v458
        %v499 = vpack.c.b16 %v459, %v459
        %v500 = vpack.c.b16 %v460, %v460
        %v501 = vpack.c.b16 %v461, %v461
        %v502 = vpack.c.b16 %v462, %v462
        %v503 = vpack.c.b16 %v463, %v463
        %vm536 = vcmask 588800
        %v538 = vsel %vm536, %v313, 0
        %vm540 = vcmask 1043456
        %v542 = vsel %vm540, %v496, 0
        %v545 = vsel %vm540, %v497, 0
        %v548 = vsel %vm540, %v498, 0
        %v551 = vsel %vm540, %v499, 0
        %v554 = vsel %vm540, %v500, 0
        %v557 = vsel %vm540, %v501, 0
        %v560 = vsel %vm540, %v502, 0
        %v563 = vsel %vm540, %v503, 0
        %565 = vmatprep.subr.bf16.mxu0 %v465
        %566 = vmatpush1.bf16.msra.mxu0 %v464
        %567 = vmatprep.subr.bf16.mxu0 %v473
        %568 = vmatpush1.bf16.msra.mxu0 %v472
        %569 = vmatprep.subr.bf16.mxu0 %v481
        %570 = vmatpush1.bf16.msra.mxu0 %v480
        %571 = vmatprep.subr.bf16.mxu0 %v489
        %572 = vmatpush1.bf16.msra.mxu0 %v488
        %573 = vmatprep.subr.bf16.mxu0 %v545
        %574 = vmatpush1.bf16.msra.mxu0 %v542
        %575 = vmatprep.subr.bf16.mxu0 0
        %576 = vmatpush1.bf16.msra.mxu0 0
        %577 = vmatprep.subr.bf16.mxu0 0
        %578 = vmatpush1.bf16.msra.mxu0 0
        %579 = vmatprep.subr.bf16.mxu0 0
        %580 = vmatpush1.bf16.msra.mxu0 0
        %581 = vmatprep.subr.bf16.mxu0 0
        %582 = vmatpush1.bf16.msra.mxu0 0
        %583 = vmatprep.subr.bf16.mxu0 0
        %584 = vmatpush1.bf16.msra.mxu0 0
        %585 = vmatprep.subr.bf16.mxu0 0
        %586 = vmatpush1.bf16.msra.mxu0 0
        %587 = vmatprep.subr.bf16.mxu0 0
        %588 = vmatpush1.bf16.msra.mxu0 0
        %589 = vmatprep.subr.bf16.mxu0 0
        %590 = vmatpush1.bf16.msra.mxu0 0
        %591 = vmatprep.subr.bf16.mxu0 0
        %592 = vmatpush1.bf16.msra.mxu0 0
        %593 = vmatprep.subr.bf16.mxu0 0
        %594 = vmatpush1.bf16.msra.mxu0 0
        %595 = vmatprep.subr.bf16.mxu0 0
        %596 = vmatpush1.bf16.msra.mxu0 0
        %597 = vmatprep.mubr.bf16.mxu0 0
        %598 = vmatmul.mubr.bf16.gmra.mrb[0].mxu0 %v538
        %v599 = vpop.f32.mrb[0].mxu0
        %v600 = vadd.f32 %v354, %v599
        %v601 = vpop.f32.mrb[0].mxu0
        %v602 = vadd.f32 %v354, %v601
        %v603 = vpop.f32.mrb[0].mxu0
        %v604 = vpop.f32.mrb[0].mxu0
        %605 = vdwg.mxu0
        %606 = vmatprep.subr.bf16.mxu0 %v467
        %607 = vmatpush1.bf16.msra.mxu0 %v466
        %608 = vmatprep.subr.bf16.mxu0 %v475
        %609 = vmatpush1.bf16.msra.mxu0 %v474
        %610 = vmatprep.subr.bf16.mxu0 %v483
        %611 = vmatpush1.bf16.msra.mxu0 %v482
        %612 = vmatprep.subr.bf16.mxu0 %v491
        %613 = vmatpush1.bf16.msra.mxu0 %v490
        %614 = vmatprep.subr.bf16.mxu0 %v551
        %615 = vmatpush1.bf16.msra.mxu0 %v548
        %616 = vmatprep.subr.bf16.mxu0 0
        %617 = vmatpush1.bf16.msra.mxu0 0
        %618 = vmatprep.subr.bf16.mxu0 0
        %619 = vmatpush1.bf16.msra.mxu0 0
        %620 = vmatprep.subr.bf16.mxu0 0
        %621 = vmatpush1.bf16.msra.mxu0 0
        %622 = vmatprep.subr.bf16.mxu0 0
        %623 = vmatpush1.bf16.msra.mxu0 0
        %624 = vmatprep.subr.bf16.mxu0 0
        %625 = vmatpush1.bf16.msra.mxu0 0
        %626 = vmatprep.subr.bf16.mxu0 0
        %627 = vmatpush1.bf16.msra.mxu0 0
        %628 = vmatprep.subr.bf16.mxu0 0
        %629 = vmatpush1.bf16.msra.mxu0 0
        %630 = vmatprep.subr.bf16.mxu0 0
        %631 = vmatpush1.bf16.msra.mxu0 0
        %632 = vmatprep.subr.bf16.mxu0 0
        %633 = vmatpush1.bf16.msra.mxu0 0
        %634 = vmatprep.subr.bf16.mxu0 0
        %635 = vmatpush1.bf16.msra.mxu0 0
        %636 = vmatprep.subr.bf16.mxu0 0
        %637 = vmatpush1.bf16.msra.mxu0 0
        %638 = vmatprep.mubr.bf16.mxu0 0
        %639 = vmatmul.mubr.bf16.gmra.mrb[0].mxu0 %v538
        %v640 = vpop.f32.mrb[0].mxu0
        %v641 = vadd.f32 %v354, %v640
        %v642 = vpop.f32.mrb[0].mxu0
        %v643 = vadd.f32 %v354, %v642
        %v644 = vpop.f32.mrb[0].mxu0
        %v645 = vpop.f32.mrb[0].mxu0
        %646 = vdwg.mxu0
        %647 = vmatprep.subr.bf16.mxu0 %v469
        %648 = vmatpush1.bf16.msra.mxu0 %v468
        %649 = vmatprep.subr.bf16.mxu0 %v477
        %650 = vmatpush1.bf16.msra.mxu0 %v476
        %651 = vmatprep.subr.bf16.mxu0 %v485
        %652 = vmatpush1.bf16.msra.mxu0 %v484
        %653 = vmatprep.subr.bf16.mxu0 %v493
        %654 = vmatpush1.bf16.msra.mxu0 %v492
        %655 = vmatprep.subr.bf16.mxu0 %v557
        %656 = vmatpush1.bf16.msra.mxu0 %v554
        %657 = vmatprep.subr.bf16.mxu0 0
        %658 = vmatpush1.bf16.msra.mxu0 0
        %659 = vmatprep.subr.bf16.mxu0 0
        %660 = vmatpush1.bf16.msra.mxu0 0
        %661 = vmatprep.subr.bf16.mxu0 0
        %662 = vmatpush1.bf16.msra.mxu0 0
        %663 = vmatprep.subr.bf16.mxu0 0
        %664 = vmatpush1.bf16.msra.mxu0 0
        %665 = vmatprep.subr.bf16.mxu0 0
        %666 = vmatpush1.bf16.msra.mxu0 0
        %667 = vmatprep.subr.bf16.mxu0 0
        %668 = vmatpush1.bf16.msra.mxu0 0
        %669 = vmatprep.subr.bf16.mxu0 0
        %670 = vmatpush1.bf16.msra.mxu0 0
        %671 = vmatprep.subr.bf16.mxu0 0
        %672 = vmatpush1.bf16.msra.mxu0 0
        %673 = vmatprep.subr.bf16.mxu0 0
        %674 = vmatpush1.bf16.msra.mxu0 0
        %675 = vmatprep.subr.bf16.mxu0 0
        %676 = vmatpush1.bf16.msra.mxu0 0
        %677 = vmatprep.subr.bf16.mxu0 0
        %678 = vmatpush1.bf16.msra.mxu0 0
        %679 = vmatprep.mubr.bf16.mxu0 0
        %680 = vmatmul.mubr.bf16.gmra.mrb[0].mxu0 %v538
        %v681 = vpop.f32.mrb[0].mxu0
        %v682 = vadd.f32 %v354, %v681
        %v683 = vpop.f32.mrb[0].mxu0
        %v684 = vadd.f32 %v354, %v683
        %v685 = vpop.f32.mrb[0].mxu0
        %v686 = vpop.f32.mrb[0].mxu0
        %687 = vdwg.mxu0
        %688 = vmatprep.subr.bf16.mxu0 %v471
        %689 = vmatpush1.bf16.msra.mxu0 %v470
        %690 = vmatprep.subr.bf16.mxu0 %v479
        %691 = vmatpush1.bf16.msra.mxu0 %v478
        %692 = vmatprep.subr.bf16.mxu0 %v487
        %693 = vmatpush1.bf16.msra.mxu0 %v486
        %694 = vmatprep.subr.bf16.mxu0 %v495
        %695 = vmatpush1.bf16.msra.mxu0 %v494
        %696 = vmatprep.subr.bf16.mxu0 %v563
        %697 = vmatpush1.bf16.msra.mxu0 %v560
        %698 = vmatprep.subr.bf16.mxu0 0
        %699 = vmatpush1.bf16.msra.mxu0 0
        %700 = vmatprep.subr.bf16.mxu0 0
        %701 = vmatpush1.bf16.msra.mxu0 0
        %702 = vmatprep.subr.bf16.mxu0 0
        %703 = vmatpush1.bf16.msra.mxu0 0
        %704 = vmatprep.subr.bf16.mxu0 0
        %705 = vmatpush1.bf16.msra.mxu0 0
        %706 = vmatprep.subr.bf16.mxu0 0
        %707 = vmatpush1.bf16.msra.mxu0 0
        %708 = vmatprep.subr.bf16.mxu0 0
        %709 = vmatpush1.bf16.msra.mxu0 0
        %710 = vmatprep.subr.bf16.mxu0 0
        %711 = vmatpush1.bf16.msra.mxu0 0
        %712 = vmatprep.subr.bf16.mxu0 0
        %713 = vmatpush1.bf16.msra.mxu0 0
        %714 = vmatprep.subr.bf16.mxu0 0
        %715 = vmatpush1.bf16.msra.mxu0 0
        %716 = vmatprep.subr.bf16.mxu0 0
        %717 = vmatpush1.bf16.msra.mxu0 0
        %718 = vmatprep.subr.bf16.mxu0 0
        %719 = vmatpush1.bf16.msra.mxu0 0
        %720 = vmatprep.mubr.bf16.mxu0 0
        %721 = vmatmul.mubr.bf16.gmra.mrb[0].mxu0 %v538
        %v722 = vpop.f32.mrb[0].mxu0
        %v723 = vadd.f32 %v354, %v722
        %v724 = vpop.f32.mrb[0].mxu0
        %v725 = vadd.f32 %v354, %v724
        %v726 = vpop.f32.mrb[0].mxu0
        %v727 = vpop.f32.mrb[0].mxu0
        %728 = vdwg.mxu0
        %v729 = vld [vmem:[%s304] sm:$0xff]
        %v730 = vld [vmem:[%s304 + $0x8] sm:$0xff]
        %v731 = vld [vmem:[%s304 + $0x10] sm:$0xff]
        %v732 = vld [vmem:[%s304 + $0x18] sm:$0xff]
        %v733 = vld [vmem:[%s304 + $0x20] sm:$0xff]
        %v734 = vld [vmem:[%s304 + $0x28] sm:$0xff]
        %v735 = vld [vmem:[%s304 + $0x30] sm:$0xff]
        %v736 = vld [vmem:[%s304 + $0x38] sm:$0xff]
        %v737 = vadd.f32 %v600, %v729
        %v738 = vadd.f32 %v602, %v730
        %v739 = vadd.f32 %v641, %v731
        %v740 = vadd.f32 %v643, %v732
        %v741 = vadd.f32 %v682, %v733
        %v742 = vadd.f32 %v684, %v734
        %v743 = vadd.f32 %v723, %v735
        %v744 = vadd.f32 %v725, %v736
        %v745 = vmul.f32 %v737, 0.01
        %v746 = vmul.f32 %v738, 0.01
        %v747 = vmul.f32 %v739, 0.01
        %v748 = vmul.f32 %v740, 0.01
        %v749 = vmul.f32 %v741, 0.01
        %v750 = vmul.f32 %v742, 0.01
        %v751 = vmul.f32 %v743, 0.01
        %v752 = vmul.f32 %v744, 0.01
        %v753 = vmax.f32 %v737, %v745
        %v754 = vmax.f32 %v738, %v746
        %v755 = vmax.f32 %v739, %v747
        %v756 = vmax.f32 %v740, %v748
        %v757 = vmax.f32 %v741, %v749
        %v758 = vmax.f32 %v742, %v750
        %v759 = vmax.f32 %v743, %v751
        %v760 = vmax.f32 %v744, %v752
        %761 = vst [vmem:[%s310] sm:$0xff] %v753
        %762 = vst [vmem:[%s310 + $0x8] sm:$0xff] %v754
        %763 = vst [vmem:[%s310 + $0x10] sm:$0xff] %v755
        %764 = vst [vmem:[%s310 + $0x18] sm:$0xff] %v756
        %765 = vst [vmem:[%s310 + $0x20] sm:$0xff] %v757
        %766 = vst [vmem:[%s310 + $0x28] sm:$0xff] %v758
        %767 = vst [vmem:[%s310 + $0x30] sm:$0xff] %v759
        %768 = vst [vmem:[%s310 + $0x38] sm:$0xff] %v760
        %s769 = smul.u32 8, %s15
        %p770 = scmp.lt.s32.totalorder %s769, 15
        %s771 = scalar_select %p770, %s769, 15
        %s772 = smul.addr %s771, 8
        %s773 = scalar_lea.vmem %s4, %s772
        // Predicated region
        $region60: #{custom_resnet_forward.12} parent=54 // pred_check
          %p774 = pneg %p127
        $region61: #{custom_resnet_forward.12} parent=54 // pred_check_branch
          %776 = sbr.rel (%p774) target = $region63
        $region62: #{custom_resnet_forward.12} parent=54 // pred_region
          %s777 = smul.u32 8, %s15
        $region63: #{custom_resnet_forward.12} parent=54 // pred_fallthru
          _
      $region55: #{custom_resnet_forward.12} parent=5 // pred_fallthru
        _
      %p778 = scmp.le.s32.totalorder 2, %s10
      // Predicated region
      $region64: #{custom_resnet_forward.12} parent=5 // pred_check
        %p779 = pneg %p778
      $region65: #{custom_resnet_forward.12} parent=5 // pred_check_branch
        %781 = sbr.rel (%p779) target = $region67
      $region66: #{custom_resnet_forward.12} parent=5 // pred_region
        %s782 = ssub.s32 %s10, 2
        // Predicated region
        $region68: #{custom_resnet_forward.12} parent=66 // pred_check
          %p783 = pneg %p133
        $region69: #{custom_resnet_forward.12} parent=66 // pred_check_branch
          %785 = sbr.rel (%p783) target = $region71
        $region70: #{custom_resnet_forward.12} parent=66 // pred_region
          %s786 = smul.u32 8, %s16
          %p787 = scmp.lt.s32.totalorder %s786, 15
          %s788 = scalar_select %p787, %s786, 15
          %s789 = smul.addr %s788, 8
          %s790 = scalar_lea.vmem %s4, %s789
        $region71: #{custom_resnet_forward.12} parent=66 // pred_fallthru
          _
      $region67: #{custom_resnet_forward.12} parent=5 // pred_fallthru
        _
    $region6: #{custom_resnet_forward.12} parent=1 // loop_footer
      %s14 = sadd.s32 1, %s10
    $region7: #{custom_resnet_forward.12} parent=1 // loop_footer_branch
      %9 = sbr.rel target = $region3
    $region8: #{custom_resnet_forward.12} parent=1 // loop_exit
      _

// kernel: custom_resnet_forward.13
$region0: #{custom_resnet_forward.13}
  #allocation0 [shape = 'u32[]', space=smem, size = 0x4, offset = 0x4, fixed_abs, tag = 'smem constant byte address 0x4 - core index']
  #allocation1 [shape = 'u32[144,128]{1,0:T(1,128)}', space=vmem, size = 0x12000, scoped, tag = 'internal scratch']
  %s0 = inlined_call_operand.vmem [shape: bf16[72,450], index: 0, kind: input, shape index: {}]
  %s1 = inlined_call_operand.vmem [shape: bf16[8,72], index: 1, kind: input, shape index: {}]
  %s2 = inlined_call_operand.vmem [shape: f32[8,1], index: 2, kind: input, shape index: {}]
  %s3 = inlined_call_operand.vmem [shape: f32[8,450], index: 3, kind: output, shape index: {}]
  %s4 = sld [smem:[#allocation0]]
  $region22: #{custom_resnet_forward.13} parent=0
    _
  %s6 = ssub.s32 1, %s4
  %s7 = scalar_select 0, %s6, %s4
  // Predicated region
  $region2: #{custom_resnet_forward.13} parent=0 // pred_check
    _
  $region3: #{custom_resnet_forward.13} parent=0 // pred_check_branch
    %9 = sbr.rel (0) target = $region5
  $region4: #{custom_resnet_forward.13} parent=0 // pred_region
    _
  $region5: #{custom_resnet_forward.13} parent=0 // pred_fallthru
    _
  // Predicated region
  $region6: #{custom_resnet_forward.13} parent=0 // pred_check
    _
  $region7: #{custom_resnet_forward.13} parent=0 // pred_check_branch
    %11 = sbr.rel (0) target = $region9
  $region8: #{custom_resnet_forward.13} parent=0 // pred_region
    _
  $region9: #{custom_resnet_forward.13} parent=0 // pred_fallthru
    _
  // Predicated region
  $region10: #{custom_resnet_forward.13} parent=0 // pred_check
    _
  $region11: #{custom_resnet_forward.13} parent=0 // pred_check_branch
    %13 = sbr.rel (0) target = $region13
  $region12: #{custom_resnet_forward.13} parent=0 // pred_region
    _
  $region13: #{custom_resnet_forward.13} parent=0 // pred_fallthru
    _
  %v15 = vld [vmem:[%s1] sm:$0xf]
  %v16 = vld [vmem:[%s0] sm:$0xff]
  %v17 = vld [vmem:[%s0 + $0x8] sm:$0xff]
  %v18 = vld [vmem:[%s0 + $0x10] sm:$0xff]
  %v19 = vld [vmem:[%s0 + $0x18] sm:$0xff]
  %v20 = vld [vmem:[%s0 + $0x20] sm:$0xff]
  %v21 = vld [vmem:[%s0 + $0x28] sm:$0xff]
  %v22 = vld [vmem:[%s0 + $0x30] sm:$0xff]
  %v23 = vld [vmem:[%s0 + $0x38] sm:$0xff]
  %v24 = vld [vmem:[%s0 + $0x40] sm:$0xff]
  %v25 = vld [vmem:[%s0 + $0x48] sm:$0xff]
  %v26 = vld [vmem:[%s0 + $0x50] sm:$0xff]
  %v27 = vld [vmem:[%s0 + $0x58] sm:$0xff]
  %v28 = vld [vmem:[%s0 + $0x60] sm:$0xff]
  %v29 = vld [vmem:[%s0 + $0x68] sm:$0xff]
  %v30 = vld [vmem:[%s0 + $0x70] sm:$0xff]
  %v31 = vld [vmem:[%s0 + $0x78] sm:$0xff]
  %v32 = vld [vmem:[%s0 + $0x80] sm:$0xff]
  %v33 = vld [vmem:[%s0 + $0x88] sm:$0xff]
  %v34 = vld [vmem:[%s2] sm:$0xff]
  %36 = vset.pattern.permute.xlu0 0
  %37 = vperm.xlu0 %36, %v34
  %v38 = vpop.permute.xlu0 %37
  %v58 = vunpack.c.l.b16 %v16
  %v59 = vunpack.c.h.b16 %v16
  %v60 = vunpack.c.l.b16 %v17
  %v61 = vunpack.c.h.b16 %v17
  %v62 = vunpack.c.l.b16 %v18
  %v63 = vunpack.c.h.b16 %v18
  %v64 = vunpack.c.l.b16 %v19
  %v65 = vunpack.c.h.b16 %v19
  %v66 = vunpack.c.l.b16 %v20
  %v67 = vunpack.c.h.b16 %v20
  %v68 = vunpack.c.l.b16 %v21
  %v69 = vunpack.c.h.b16 %v21
  %v70 = vunpack.c.l.b16 %v22
  %v71 = vunpack.c.h.b16 %v22
  %v72 = vunpack.c.l.b16 %v23
  %v73 = vunpack.c.h.b16 %v23
  %v74 = vunpack.c.l.b16 %v24
  %v75 = vunpack.c.h.b16 %v24
  %v76 = vunpack.c.l.b16 %v25
  %v77 = vunpack.c.h.b16 %v25
  %v78 = vunpack.c.l.b16 %v26
  %v79 = vunpack.c.h.b16 %v26
  %v80 = vunpack.c.l.b16 %v27
  %v81 = vunpack.c.h.b16 %v27
  %v82 = vunpack.c.l.b16 %v28
  %v83 = vunpack.c.h.b16 %v28
  %v84 = vunpack.c.l.b16 %v29
  %v85 = vunpack.c.h.b16 %v29
  %v86 = vunpack.c.l.b16 %v30
  %v87 = vunpack.c.h.b16 %v30
  %v88 = vunpack.c.l.b16 %v31
  %v89 = vunpack.c.h.b16 %v31
  %v90 = vunpack.c.l.b16 %v32
  %v91 = vunpack.c.h.b16 %v32
  %v92 = vunpack.c.l.b16 %v33
  %v93 = vunpack.c.h.b16 %v33
  %v94 = vpack.c.b16 %v62, %v58
  %v95 = vpack.c.b16 %v63, %v59
  %v96 = vpack.c.b16 %v64, %v60
  %v97 = vpack.c.b16 %v65, %v61
  %v98 = vpack.c.b16 %v70, %v66
  %v99 = vpack.c.b16 %v71, %v67
  %v100 = vpack.c.b16 %v72, %v68
  %v101 = vpack.c.b16 %v73, %v69
  %v102 = vpack.c.b16 %v78, %v74
  %v103 = vpack.c.b16 %v79, %v75
  %v104 = vpack.c.b16 %v80, %v76
  %v105 = vpack.c.b16 %v81, %v77
  %v106 = vpack.c.b16 %v86, %v82
  %v107 = vpack.c.b16 %v87, %v83
  %v108 = vpack.c.b16 %v88, %v84
  %v109 = vpack.c.b16 %v89, %v85
  %v110 = vpack.c.b16 %v90, %v90
  %v111 = vpack.c.b16 %v91, %v91
  %v112 = vpack.c.b16 %v92, %v92
  %v113 = vpack.c.b16 %v93, %v93
  %vm130 = vcmask 588800
  %v132 = vsel %vm130, %v15, 0
  %vm134 = vcmask 1043456
  %v136 = vsel %vm134, %v110, 0
  %v139 = vsel %vm134, %v111, 0
  %v142 = vsel %vm134, %v112, 0
  %v145 = vsel %vm134, %v113, 0
  %147 = vmatprep.subr.bf16.mxu0 %v95
  %148 = vmatpush1.bf16.msra.mxu0 %v94
  %149 = vmatprep.subr.bf16.mxu0 %v99
  %150 = vmatpush1.bf16.msra.mxu0 %v98
  %151 = vmatprep.subr.bf16.mxu0 %v103
  %152 = vmatpush1.bf16.msra.mxu0 %v102
  %153 = vmatprep.subr.bf16.mxu0 %v107
  %154 = vmatpush1.bf16.msra.mxu0 %v106
  %155 = vmatprep.subr.bf16.mxu0 %v139
  %156 = vmatpush1.bf16.msra.mxu0 %v136
  %157 = vmatprep.subr.bf16.mxu0 0
  %158 = vmatpush1.bf16.msra.mxu0 0
  %159 = vmatprep.subr.bf16.mxu0 0
  %160 = vmatpush1.bf16.msra.mxu0 0
  %161 = vmatprep.subr.bf16.mxu0 0
  %162 = vmatpush1.bf16.msra.mxu0 0
  %163 = vmatprep.subr.bf16.mxu0 0
  %164 = vmatpush1.bf16.msra.mxu0 0
  %165 = vmatprep.subr.bf16.mxu0 0
  %166 = vmatpush1.bf16.msra.mxu0 0
  %167 = vmatprep.subr.bf16.mxu0 0
  %168 = vmatpush1.bf16.msra.mxu0 0
  %169 = vmatprep.subr.bf16.mxu0 0
  %170 = vmatpush1.bf16.msra.mxu0 0
  %171 = vmatprep.subr.bf16.mxu0 0
  %172 = vmatpush1.bf16.msra.mxu0 0
  %173 = vmatprep.subr.bf16.mxu0 0
  %174 = vmatpush1.bf16.msra.mxu0 0
  %175 = vmatprep.subr.bf16.mxu0 0
  %176 = vmatpush1.bf16.msra.mxu0 0
  %177 = vmatprep.subr.bf16.mxu0 0
  %178 = vmatpush1.bf16.msra.mxu0 0
  %179 = vmatprep.mubr.bf16.mxu0 0
  %180 = vmatmul.mubr.bf16.gmra.mrb[0].mxu0 %v132
  %v181 = vpop.f32.mrb[0].mxu0
  %v182 = vadd.f32 %v38, %v181
  %v183 = vpop.f32.mrb[0].mxu0
  %v184 = vadd.f32 %v38, %v183
  %v185 = vpop.f32.mrb[0].mxu0
  %v186 = vpop.f32.mrb[0].mxu0
  %187 = vdwg.mxu0
  %188 = vmatprep.subr.bf16.mxu0 %v97
  %189 = vmatpush1.bf16.msra.mxu0 %v96
  %190 = vmatprep.subr.bf16.mxu0 %v101
  %191 = vmatpush1.bf16.msra.mxu0 %v100
  %192 = vmatprep.subr.bf16.mxu0 %v105
  %193 = vmatpush1.bf16.msra.mxu0 %v104
  %194 = vmatprep.subr.bf16.mxu0 %v109
  %195 = vmatpush1.bf16.msra.mxu0 %v108
  %196 = vmatprep.subr.bf16.mxu0 %v145
  %197 = vmatpush1.bf16.msra.mxu0 %v142
  %198 = vmatprep.subr.bf16.mxu0 0
  %199 = vmatpush1.bf16.msra.mxu0 0
  %200 = vmatprep.subr.bf16.mxu0 0
  %201 = vmatpush1.bf16.msra.mxu0 0
  %202 = vmatprep.subr.bf16.mxu0 0
  %203 = vmatpush1.bf16.msra.mxu0 0
  %204 = vmatprep.subr.bf16.mxu0 0
  %205 = vmatpush1.bf16.msra.mxu0 0
  %206 = vmatprep.subr.bf16.mxu0 0
  %207 = vmatpush1.bf16.msra.mxu0 0
  %208 = vmatprep.subr.bf16.mxu0 0
  %209 = vmatpush1.bf16.msra.mxu0 0
  %210 = vmatprep.subr.bf16.mxu0 0
  %211 = vmatpush1.bf16.msra.mxu0 0
  %212 = vmatprep.subr.bf16.mxu0 0
  %213 = vmatpush1.bf16.msra.mxu0 0
  %214 = vmatprep.subr.bf16.mxu0 0
  %215 = vmatpush1.bf16.msra.mxu0 0
  %216 = vmatprep.subr.bf16.mxu0 0
  %217 = vmatpush1.bf16.msra.mxu0 0
  %218 = vmatprep.subr.bf16.mxu0 0
  %219 = vmatpush1.bf16.msra.mxu0 0
  %220 = vmatprep.mubr.bf16.mxu0 0
  %221 = vmatmul.mubr.bf16.gmra.mrb[0].mxu0 %v132
  %v222 = vpop.f32.mrb[0].mxu0
  %v223 = vadd.f32 %v38, %v222
  %v224 = vpop.f32.mrb[0].mxu0
  %v225 = vadd.f32 %v38, %v224
  %v226 = vpop.f32.mrb[0].mxu0
  %v227 = vpop.f32.mrb[0].mxu0
  %228 = vdwg.mxu0
  %v229 = vmul.f32 %v182, 0.01
  %v230 = vmul.f32 %v184, 0.01
  %v231 = vmul.f32 %v223, 0.01
  %v232 = vmul.f32 %v225, 0.01
  %v233 = vmax.f32 %v182, %v229
  %v234 = vmax.f32 %v184, %v230
  %v235 = vmax.f32 %v223, %v231
  %v236 = vmax.f32 %v225, %v232
  %237 = vst [vmem:[%s3] sm:$0xff] %v233
  %238 = vst [vmem:[%s3 + $0x8] sm:$0xff] %v234
  %239 = vst [vmem:[%s3 + $0x10] sm:$0xff] %v235
  %vm240 = vcmask 539648
  %241 = vst.msk [vmem:[%s3 + $0x18] sm:$0xff] %vm240, %v236
  // Predicated region
  $region14: #{custom_resnet_forward.13} parent=0 // pred_check
    _
  $region15: #{custom_resnet_forward.13} parent=0 // pred_check_branch
    %243 = sbr.rel (0) target = $region17
  $region16: #{custom_resnet_forward.13} parent=0 // pred_region
    _
  $region17: #{custom_resnet_forward.13} parent=0 // pred_fallthru
    _
  // Predicated region
  $region18: #{custom_resnet_forward.13} parent=0 // pred_check
    _
  $region19: #{custom_resnet_forward.13} parent=0 // pred_check_branch
    %245 = sbr.rel (0) target = $region21
  $region20: #{custom_resnet_forward.13} parent=0 // pred_region
    _
  $region21: #{custom_resnet_forward.13} parent=0 // pred_fallthru
    _

// kernel: custom_resnet_forward.15
$region0: #{custom_resnet_forward.15}
  #allocation0 [shape = 'u32[]', space=smem, size = 0x4, offset = 0x4, fixed_abs, tag = 'smem constant byte address 0x4 - core index']
  #allocation1 [shape = 'u32[144,128]{1,0:T(1,128)}', space=vmem, size = 0x12000, scoped, tag = 'internal scratch']
  %s0 = inlined_call_operand.vmem [shape: bf16[72,450], index: 0, kind: input, shape index: {}]
  %s1 = inlined_call_operand.vmem [shape: bf16[8,72], index: 1, kind: input, shape index: {}]
  %s2 = inlined_call_operand.vmem [shape: f32[8,1], index: 2, kind: input, shape index: {}]
  %s3 = inlined_call_operand.vmem [shape: f32[8,450], index: 3, kind: input, shape index: {}]
  %s4 = inlined_call_operand.vmem [shape: f32[8,450], index: 4, kind: output, shape index: {}]
  %s5 = sld [smem:[#allocation0]]
  $region26: #{custom_resnet_forward.15} parent=0
    _
  %s7 = ssub.s32 1, %s5
  %s8 = scalar_select 0, %s7, %s5
  // Predicated region
  $region2: #{custom_resnet_forward.15} parent=0 // pred_check
    _
  $region3: #{custom_resnet_forward.15} parent=0 // pred_check_branch
    %10 = sbr.rel (0) target = $region5
  $region4: #{custom_resnet_forward.15} parent=0 // pred_region
    _
  $region5: #{custom_resnet_forward.15} parent=0 // pred_fallthru
    _
  // Predicated region
  $region6: #{custom_resnet_forward.15} parent=0 // pred_check
    _
  $region7: #{custom_resnet_forward.15} parent=0 // pred_check_branch
    %12 = sbr.rel (0) target = $region9
  $region8: #{custom_resnet_forward.15} parent=0 // pred_region
    _
  $region9: #{custom_resnet_forward.15} parent=0 // pred_fallthru
    _
  // Predicated region
  $region10: #{custom_resnet_forward.15} parent=0 // pred_check
    _
  $region11: #{custom_resnet_forward.15} parent=0 // pred_check_branch
    %14 = sbr.rel (0) target = $region13
  $region12: #{custom_resnet_forward.15} parent=0 // pred_region
    _
  $region13: #{custom_resnet_forward.15} parent=0 // pred_fallthru
    _
  // Predicated region
  $region14: #{custom_resnet_forward.15} parent=0 // pred_check
    _
  $region15: #{custom_resnet_forward.15} parent=0 // pred_check_branch
    %16 = sbr.rel (0) target = $region17
  $region16: #{custom_resnet_forward.15} parent=0 // pred_region
    _
  $region17: #{custom_resnet_forward.15} parent=0 // pred_fallthru
    _
  %v18 = vld [vmem:[%s1] sm:$0xf]
  %v19 = vld [vmem:[%s0] sm:$0xff]
  %v20 = vld [vmem:[%s0 + $0x8] sm:$0xff]
  %v21 = vld [vmem:[%s0 + $0x10] sm:$0xff]
  %v22 = vld [vmem:[%s0 + $0x18] sm:$0xff]
  %v23 = vld [vmem:[%s0 + $0x20] sm:$0xff]
  %v24 = vld [vmem:[%s0 + $0x28] sm:$0xff]
  %v25 = vld [vmem:[%s0 + $0x30] sm:$0xff]
  %v26 = vld [vmem:[%s0 + $0x38] sm:$0xff]
  %v27 = vld [vmem:[%s0 + $0x40] sm:$0xff]
  %v28 = vld [vmem:[%s0 + $0x48] sm:$0xff]
  %v29 = vld [vmem:[%s0 + $0x50] sm:$0xff]
  %v30 = vld [vmem:[%s0 + $0x58] sm:$0xff]
  %v31 = vld [vmem:[%s0 + $0x60] sm:$0xff]
  %v32 = vld [vmem:[%s0 + $0x68] sm:$0xff]
  %v33 = vld [vmem:[%s0 + $0x70] sm:$0xff]
  %v34 = vld [vmem:[%s0 + $0x78] sm:$0xff]
  %v35 = vld [vmem:[%s0 + $0x80] sm:$0xff]
  %v36 = vld [vmem:[%s0 + $0x88] sm:$0xff]
  %v37 = vld [vmem:[%s2] sm:$0xff]
  %39 = vset.pattern.permute.xlu0 0
  %40 = vperm.xlu0 %39, %v37
  %v41 = vpop.permute.xlu0 %40
  %v61 = vunpack.c.l.b16 %v19
  %v62 = vunpack.c.h.b16 %v19
  %v63 = vunpack.c.l.b16 %v20
  %v64 = vunpack.c.h.b16 %v20
  %v65 = vunpack.c.l.b16 %v21
  %v66 = vunpack.c.h.b16 %v21
  %v67 = vunpack.c.l.b16 %v22
  %v68 = vunpack.c.h.b16 %v22
  %v69 = vunpack.c.l.b16 %v23
  %v70 = vunpack.c.h.b16 %v23
  %v71 = vunpack.c.l.b16 %v24
  %v72 = vunpack.c.h.b16 %v24
  %v73 = vunpack.c.l.b16 %v25
  %v74 = vunpack.c.h.b16 %v25
  %v75 = vunpack.c.l.b16 %v26
  %v76 = vunpack.c.h.b16 %v26
  %v77 = vunpack.c.l.b16 %v27
  %v78 = vunpack.c.h.b16 %v27
  %v79 = vunpack.c.l.b16 %v28
  %v80 = vunpack.c.h.b16 %v28
  %v81 = vunpack.c.l.b16 %v29
  %v82 = vunpack.c.h.b16 %v29
  %v83 = vunpack.c.l.b16 %v30
  %v84 = vunpack.c.h.b16 %v30
  %v85 = vunpack.c.l.b16 %v31
  %v86 = vunpack.c.h.b16 %v31
  %v87 = vunpack.c.l.b16 %v32
  %v88 = vunpack.c.h.b16 %v32
  %v89 = vunpack.c.l.b16 %v33
  %v90 = vunpack.c.h.b16 %v33
  %v91 = vunpack.c.l.b16 %v34
  %v92 = vunpack.c.h.b16 %v34
  %v93 = vunpack.c.l.b16 %v35
  %v94 = vunpack.c.h.b16 %v35
  %v95 = vunpack.c.l.b16 %v36
  %v96 = vunpack.c.h.b16 %v36
  %v97 = vpack.c.b16 %v65, %v61
  %v98 = vpack.c.b16 %v66, %v62
  %v99 = vpack.c.b16 %v67, %v63
  %v100 = vpack.c.b16 %v68, %v64
  %v101 = vpack.c.b16 %v73, %v69
  %v102 = vpack.c.b16 %v74, %v70
  %v103 = vpack.c.b16 %v75, %v71
  %v104 = vpack.c.b16 %v76, %v72
  %v105 = vpack.c.b16 %v81, %v77
  %v106 = vpack.c.b16 %v82, %v78
  %v107 = vpack.c.b16 %v83, %v79
  %v108 = vpack.c.b16 %v84, %v80
  %v109 = vpack.c.b16 %v89, %v85
  %v110 = vpack.c.b16 %v90, %v86
  %v111 = vpack.c.b16 %v91, %v87
  %v112 = vpack.c.b16 %v92, %v88
  %v113 = vpack.c.b16 %v93, %v93
  %v114 = vpack.c.b16 %v94, %v94
  %v115 = vpack.c.b16 %v95, %v95
  %v116 = vpack.c.b16 %v96, %v96
  %vm133 = vcmask 588800
  %v135 = vsel %vm133, %v18, 0
  %vm137 = vcmask 1043456
  %v139 = vsel %vm137, %v113, 0
  %v142 = vsel %vm137, %v114, 0
  %v145 = vsel %vm137, %v115, 0
  %v148 = vsel %vm137, %v116, 0
  %150 = vmatprep.subr.bf16.mxu0 %v98
  %151 = vmatpush1.bf16.msra.mxu0 %v97
  %152 = vmatprep.subr.bf16.mxu0 %v102
  %153 = vmatpush1.bf16.msra.mxu0 %v101
  %154 = vmatprep.subr.bf16.mxu0 %v106
  %155 = vmatpush1.bf16.msra.mxu0 %v105
  %156 = vmatprep.subr.bf16.mxu0 %v110
  %157 = vmatpush1.bf16.msra.mxu0 %v109
  %158 = vmatprep.subr.bf16.mxu0 %v142
  %159 = vmatpush1.bf16.msra.mxu0 %v139
  %160 = vmatprep.subr.bf16.mxu0 0
  %161 = vmatpush1.bf16.msra.mxu0 0
  %162 = vmatprep.subr.bf16.mxu0 0
  %163 = vmatpush1.bf16.msra.mxu0 0
  %164 = vmatprep.subr.bf16.mxu0 0
  %165 = vmatpush1.bf16.msra.mxu0 0
  %166 = vmatprep.subr.bf16.mxu0 0
  %167 = vmatpush1.bf16.msra.mxu0 0
  %168 = vmatprep.subr.bf16.mxu0 0
  %169 = vmatpush1.bf16.msra.mxu0 0
  %170 = vmatprep.subr.bf16.mxu0 0
  %171 = vmatpush1.bf16.msra.mxu0 0
  %172 = vmatprep.subr.bf16.mxu0 0
  %173 = vmatpush1.bf16.msra.mxu0 0
  %174 = vmatprep.subr.bf16.mxu0 0
  %175 = vmatpush1.bf16.msra.mxu0 0
  %176 = vmatprep.subr.bf16.mxu0 0
  %177 = vmatpush1.bf16.msra.mxu0 0
  %178 = vmatprep.subr.bf16.mxu0 0
  %179 = vmatpush1.bf16.msra.mxu0 0
  %180 = vmatprep.subr.bf16.mxu0 0
  %181 = vmatpush1.bf16.msra.mxu0 0
  %182 = vmatprep.mubr.bf16.mxu0 0
  %183 = vmatmul.mubr.bf16.gmra.mrb[0].mxu0 %v135
  %v184 = vpop.f32.mrb[0].mxu0
  %v185 = vadd.f32 %v41, %v184
  %v186 = vpop.f32.mrb[0].mxu0
  %v187 = vadd.f32 %v41, %v186
  %v188 = vpop.f32.mrb[0].mxu0
  %v189 = vpop.f32.mrb[0].mxu0
  %190 = vdwg.mxu0
  %191 = vmatprep.subr.bf16.mxu0 %v100
  %192 = vmatpush1.bf16.msra.mxu0 %v99
  %193 = vmatprep.subr.bf16.mxu0 %v104
  %194 = vmatpush1.bf16.msra.mxu0 %v103
  %195 = vmatprep.subr.bf16.mxu0 %v108
  %196 = vmatpush1.bf16.msra.mxu0 %v107
  %197 = vmatprep.subr.bf16.mxu0 %v112
  %198 = vmatpush1.bf16.msra.mxu0 %v111
  %199 = vmatprep.subr.bf16.mxu0 %v148
  %200 = vmatpush1.bf16.msra.mxu0 %v145
  %201 = vmatprep.subr.bf16.mxu0 0
  %202 = vmatpush1.bf16.msra.mxu0 0
  %203 = vmatprep.subr.bf16.mxu0 0
  %204 = vmatpush1.bf16.msra.mxu0 0
  %205 = vmatprep.subr.bf16.mxu0 0
  %206 = vmatpush1.bf16.msra.mxu0 0
  %207 = vmatprep.subr.bf16.mxu0 0
  %208 = vmatpush1.bf16.msra.mxu0 0
  %209 = vmatprep.subr.bf16.mxu0 0
  %210 = vmatpush1.bf16.msra.mxu0 0
  %211 = vmatprep.subr.bf16.mxu0 0
  %212 = vmatpush1.bf16.msra.mxu0 0
  %213 = vmatprep.subr.bf16.mxu0 0
  %214 = vmatpush1.bf16.msra.mxu0 0
  %215 = vmatprep.subr.bf16.mxu0 0
  %216 = vmatpush1.bf16.msra.mxu0 0
  %217 = vmatprep.subr.bf16.mxu0 0
  %218 = vmatpush1.bf16.msra.mxu0 0
  %219 = vmatprep.subr.bf16.mxu0 0
  %220 = vmatpush1.bf16.msra.mxu0 0
  %221 = vmatprep.subr.bf16.mxu0 0
  %222 = vmatpush1.bf16.msra.mxu0 0
  %223 = vmatprep.mubr.bf16.mxu0 0
  %224 = vmatmul.mubr.bf16.gmra.mrb[0].mxu0 %v135
  %v225 = vpop.f32.mrb[0].mxu0
  %v226 = vadd.f32 %v41, %v225
  %v227 = vpop.f32.mrb[0].mxu0
  %v228 = vadd.f32 %v41, %v227
  %v229 = vpop.f32.mrb[0].mxu0
  %v230 = vpop.f32.mrb[0].mxu0
  %231 = vdwg.mxu0
  %v232 = vld [vmem:[%s3] sm:$0xff]
  %v233 = vld [vmem:[%s3 + $0x8] sm:$0xff]
  %v234 = vld [vmem:[%s3 + $0x10] sm:$0xff]
  %v235 = vld [vmem:[%s3 + $0x18] sm:$0xff]
  %v236 = vadd.f32 %v185, %v232
  %v237 = vadd.f32 %v187, %v233
  %v238 = vadd.f32 %v226, %v234
  %v239 = vadd.f32 %v228, %v235
  %v240 = vmul.f32 %v236, 0.01
  %v241 = vmul.f32 %v237, 0.01
  %v242 = vmul.f32 %v238, 0.01
  %v243 = vmul.f32 %v239, 0.01
  %v244 = vmax.f32 %v236, %v240
  %v245 = vmax.f32 %v237, %v241
  %v246 = vmax.f32 %v238, %v242
  %v247 = vmax.f32 %v239, %v243
  %248 = vst [vmem:[%s4] sm:$0xff] %v244
  %249 = vst [vmem:[%s4 + $0x8] sm:$0xff] %v245
  %250 = vst [vmem:[%s4 + $0x10] sm:$0xff] %v246
  %vm251 = vcmask 539648
  %252 = vst.msk [vmem:[%s4 + $0x18] sm:$0xff] %vm251, %v247
  // Predicated region
  $region18: #{custom_resnet_forward.15} parent=0 // pred_check
    _
  $region19: #{custom_resnet_forward.15} parent=0 // pred_check_branch
    %254 = sbr.rel (0) target = $region21
  $region20: #{custom_resnet_forward.15} parent=0 // pred_region
    _
  $region21: #{custom_resnet_forward.15} parent=0 // pred_fallthru
    _
  // Predicated region
  $region22: #{custom_resnet_forward.15} parent=0 // pred_check
    _
  $region23: #{custom_resnet_forward.15} parent=0 // pred_check_branch
    %256 = sbr.rel (0) target = $region25
  $region24: #{custom_resnet_forward.15} parent=0 // pred_region
    _
  $region25: #{custom_resnet_forward.15} parent=0 // pred_fallthru
    _

// kernel: custom_resnet_forward.16
$region0: #{custom_resnet_forward.16}
  #allocation0 [shape = 'u32[]', space=smem, size = 0x4, offset = 0x4, fixed_abs, tag = 'smem constant byte address 0x4 - core index']
  #allocation1 [shape = 'u32[144,128]{1,0:T(1,128)}', space=vmem, size = 0x12000, scoped, tag = 'internal scratch']
  %s0 = inlined_call_operand.vmem [shape: bf16[72,338], index: 0, kind: input, shape index: {}]
  %s1 = inlined_call_operand.vmem [shape: bf16[8,72], index: 1, kind: input, shape index: {}]
  %s2 = inlined_call_operand.vmem [shape: f32[8,1], index: 2, kind: input, shape index: {}]
  %s3 = inlined_call_operand.vmem [shape: f32[8,338], index: 3, kind: output, shape index: {}]
  %s4 = sld [smem:[#allocation0]]
  $region22: #{custom_resnet_forward.16} parent=0
    _
  %s6 = ssub.s32 1, %s4
  %s7 = scalar_select 0, %s6, %s4
  // Predicated region
  $region2: #{custom_resnet_forward.16} parent=0 // pred_check
    _
  $region3: #{custom_resnet_forward.16} parent=0 // pred_check_branch
    %9 = sbr.rel (0) target = $region5
  $region4: #{custom_resnet_forward.16} parent=0 // pred_region
    _
  $region5: #{custom_resnet_forward.16} parent=0 // pred_fallthru
    _
  // Predicated region
  $region6: #{custom_resnet_forward.16} parent=0 // pred_check
    _
  $region7: #{custom_resnet_forward.16} parent=0 // pred_check_branch
    %11 = sbr.rel (0) target = $region9
  $region8: #{custom_resnet_forward.16} parent=0 // pred_region
    _
  $region9: #{custom_resnet_forward.16} parent=0 // pred_fallthru
    _
  // Predicated region
  $region10: #{custom_resnet_forward.16} parent=0 // pred_check
    _
  $region11: #{custom_resnet_forward.16} parent=0 // pred_check_branch
    %13 = sbr.rel (0) target = $region13
  $region12: #{custom_resnet_forward.16} parent=0 // pred_region
    _
  $region13: #{custom_resnet_forward.16} parent=0 // pred_fallthru
    _
  %v15 = vld [vmem:[%s1] sm:$0xf]
  %v16 = vld [vmem:[%s0] sm:$0xff]
  %v17 = vld [vmem:[%s0 + $0x8] sm:$0xf]
  %v18 = vld [vmem:[%s0 + $0xc] sm:$0xff]
  %v19 = vld [vmem:[%s0 + $0x14] sm:$0xf]
  %v20 = vld [vmem:[%s0 + $0x18] sm:$0xff]
  %v21 = vld [vmem:[%s0 + $0x20] sm:$0xf]
  %v22 = vld [vmem:[%s0 + $0x24] sm:$0xff]
  %v23 = vld [vmem:[%s0 + $0x2c] sm:$0xf]
  %v24 = vld [vmem:[%s0 + $0x30] sm:$0xff]
  %v25 = vld [vmem:[%s0 + $0x38] sm:$0xf]
  %v26 = vld [vmem:[%s0 + $0x3c] sm:$0xff]
  %v27 = vld [vmem:[%s0 + $0x44] sm:$0xf]
  %v28 = vld [vmem:[%s0 + $0x48] sm:$0xff]
  %v29 = vld [vmem:[%s0 + $0x50] sm:$0xf]
  %v30 = vld [vmem:[%s0 + $0x54] sm:$0xff]
  %v31 = vld [vmem:[%s0 + $0x5c] sm:$0xf]
  %v32 = vld [vmem:[%s0 + $0x60] sm:$0xff]
  %v33 = vld [vmem:[%s0 + $0x68] sm:$0xf]
  %v34 = vld [vmem:[%s2] sm:$0xff]
  %36 = vset.pattern.permute.xlu0 0
  %37 = vperm.xlu0 %36, %v34
  %v38 = vpop.permute.xlu0 %37
  %v58 = vunpack.c.l.b16 %v16
  %v59 = vunpack.c.h.b16 %v16
  %v60 = vunpack.c.l.b16 %v17
  %v61 = vunpack.c.l.b16 %v18
  %v62 = vunpack.c.h.b16 %v18
  %v63 = vunpack.c.l.b16 %v19
  %v64 = vunpack.c.l.b16 %v20
  %v65 = vunpack.c.h.b16 %v20
  %v66 = vunpack.c.l.b16 %v21
  %v67 = vunpack.c.l.b16 %v22
  %v68 = vunpack.c.h.b16 %v22
  %v69 = vunpack.c.l.b16 %v23
  %v70 = vunpack.c.l.b16 %v24
  %v71 = vunpack.c.h.b16 %v24
  %v72 = vunpack.c.l.b16 %v25
  %v73 = vunpack.c.l.b16 %v26
  %v74 = vunpack.c.h.b16 %v26
  %v75 = vunpack.c.l.b16 %v27
  %v76 = vunpack.c.l.b16 %v28
  %v77 = vunpack.c.h.b16 %v28
  %v78 = vunpack.c.l.b16 %v29
  %v79 = vunpack.c.l.b16 %v30
  %v80 = vunpack.c.h.b16 %v30
  %v81 = vunpack.c.l.b16 %v31
  %v82 = vunpack.c.l.b16 %v32
  %v83 = vunpack.c.h.b16 %v32
  %v84 = vunpack.c.l.b16 %v33
  %v85 = vpack.c.b16 %v61, %v58
  %v86 = vpack.c.b16 %v62, %v59
  %v87 = vpack.c.b16 %v63, %v60
  %v88 = vpack.c.b16 %v67, %v64
  %v89 = vpack.c.b16 %v68, %v65
  %v90 = vpack.c.b16 %v69, %v66
  %v91 = vpack.c.b16 %v73, %v70
  %v92 = vpack.c.b16 %v74, %v71
  %v93 = vpack.c.b16 %v75, %v72
  %v94 = vpack.c.b16 %v79, %v76
  %v95 = vpack.c.b16 %v80, %v77
  %v96 = vpack.c.b16 %v81, %v78
  %v97 = vpack.c.b16 %v82, %v82
  %v98 = vpack.c.b16 %v83, %v83
  %v99 = vpack.c.b16 %v84, %v84
  %vm112 = vcmask 588800
  %v114 = vsel %vm112, %v15, 0
  %vm116 = vcmask 1043456
  %v118 = vsel %vm116, %v97, 0
  %v121 = vsel %vm116, %v98, 0
  %v124 = vsel %vm116, %v99, 0
  %126 = vmatprep.subr.bf16.mxu0 %v86
  %127 = vmatpush1.bf16.msra.mxu0 %v85
  %128 = vmatprep.subr.bf16.mxu0 %v89
  %129 = vmatpush1.bf16.msra.mxu0 %v88
  %130 = vmatprep.subr.bf16.mxu0 %v92
  %131 = vmatpush1.bf16.msra.mxu0 %v91
  %132 = vmatprep.subr.bf16.mxu0 %v95
  %133 = vmatpush1.bf16.msra.mxu0 %v94
  %134 = vmatprep.subr.bf16.mxu0 %v121
  %135 = vmatpush1.bf16.msra.mxu0 %v118
  %136 = vmatprep.subr.bf16.mxu0 0
  %137 = vmatpush1.bf16.msra.mxu0 0
  %138 = vmatprep.subr.bf16.mxu0 0
  %139 = vmatpush1.bf16.msra.mxu0 0
  %140 = vmatprep.subr.bf16.mxu0 0
  %141 = vmatpush1.bf16.msra.mxu0 0
  %142 = vmatprep.subr.bf16.mxu0 0
  %143 = vmatpush1.bf16.msra.mxu0 0
  %144 = vmatprep.subr.bf16.mxu0 0
  %145 = vmatpush1.bf16.msra.mxu0 0
  %146 = vmatprep.subr.bf16.mxu0 0
  %147 = vmatpush1.bf16.msra.mxu0 0
  %148 = vmatprep.subr.bf16.mxu0 0
  %149 = vmatpush1.bf16.msra.mxu0 0
  %150 = vmatprep.subr.bf16.mxu0 0
  %151 = vmatpush1.bf16.msra.mxu0 0
  %152 = vmatprep.subr.bf16.mxu0 0
  %153 = vmatpush1.bf16.msra.mxu0 0
  %154 = vmatprep.subr.bf16.mxu0 0
  %155 = vmatpush1.bf16.msra.mxu0 0
  %156 = vmatprep.subr.bf16.mxu0 0
  %157 = vmatpush1.bf16.msra.mxu0 0
  %158 = vmatprep.mubr.bf16.mxu0 0
  %159 = vmatmul.mubr.bf16.gmra.mrb[0].mxu0 %v114
  %v160 = vpop.f32.mrb[0].mxu0
  %v161 = vadd.f32 %v38, %v160
  %v162 = vpop.f32.mrb[0].mxu0
  %v163 = vadd.f32 %v38, %v162
  %v164 = vpop.f32.mrb[0].mxu0
  %v165 = vpop.f32.mrb[0].mxu0
  %166 = vdwg.mxu0
  %167 = vmatprep.subr.bf16.mxu0 0
  %168 = vmatpush1.bf16.msra.mxu0 %v87
  %169 = vmatprep.subr.bf16.mxu0 0
  %170 = vmatpush1.bf16.msra.mxu0 %v90
  %171 = vmatprep.subr.bf16.mxu0 0
  %172 = vmatpush1.bf16.msra.mxu0 %v93
  %173 = vmatprep.subr.bf16.mxu0 0
  %174 = vmatpush1.bf16.msra.mxu0 %v96
  %175 = vmatprep.subr.bf16.mxu0 0
  %176 = vmatpush1.bf16.msra.mxu0 %v124
  %177 = vmatprep.subr.bf16.mxu0 0
  %178 = vmatpush1.bf16.msra.mxu0 0
  %179 = vmatprep.subr.bf16.mxu0 0
  %180 = vmatpush1.bf16.msra.mxu0 0
  %181 = vmatprep.subr.bf16.mxu0 0
  %182 = vmatpush1.bf16.msra.mxu0 0
  %183 = vmatprep.subr.bf16.mxu0 0
  %184 = vmatpush1.bf16.msra.mxu0 0
  %185 = vmatprep.subr.bf16.mxu0 0
  %186 = vmatpush1.bf16.msra.mxu0 0
  %187 = vmatprep.subr.bf16.mxu0 0
  %188 = vmatpush1.bf16.msra.mxu0 0
  %189 = vmatprep.subr.bf16.mxu0 0
  %190 = vmatpush1.bf16.msra.mxu0 0
  %191 = vmatprep.subr.bf16.mxu0 0
  %192 = vmatpush1.bf16.msra.mxu0 0
  %193 = vmatprep.subr.bf16.mxu0 0
  %194 = vmatpush1.bf16.msra.mxu0 0
  %195 = vmatprep.subr.bf16.mxu0 0
  %196 = vmatpush1.bf16.msra.mxu0 0
  %197 = vmatprep.subr.bf16.mxu0 0
  %198 = vmatpush1.bf16.msra.mxu0 0
  %199 = vmatprep.mubr.bf16.mxu0 0
  %200 = vmatmul.mubr.bf16.gmra.mrb[0].mxu0 %v114
  %v201 = vpop.f32.mrb[0].mxu0
  %v202 = vadd.f32 %v38, %v201
  %v203 = vpop.f32.mrb[0].mxu0
  %v204 = vpop.f32.mrb[0].mxu0
  %v205 = vpop.f32.mrb[0].mxu0
  %206 = vdwg.mxu0
  %v207 = vmul.f32 %v161, 0.01
  %v208 = vmul.f32 %v163, 0.01
  %v209 = vmul.f32 %v202, 0.01
  %v210 = vmax.f32 %v161, %v207
  %v211 = vmax.f32 %v163, %v208
  %v212 = vmax.f32 %v202, %v209
  %213 = vst [vmem:[%s3] sm:$0xff] %v210
  %214 = vst [vmem:[%s3 + $0x8] sm:$0xff] %v211
  %vm215 = vcmask 670720
  %216 = vst.msk [vmem:[%s3 + $0x10] sm:$0xff] %vm215, %v212
  // Predicated region
  $region14: #{custom_resnet_forward.16} parent=0 // pred_check
    _
  $region15: #{custom_resnet_forward.16} parent=0 // pred_check_branch
    %218 = sbr.rel (0) target = $region17
  $region16: #{custom_resnet_forward.16} parent=0 // pred_region
    _
  $region17: #{custom_resnet_forward.16} parent=0 // pred_fallthru
    _
  // Predicated region
  $region18: #{custom_resnet_forward.16} parent=0 // pred_check
    _
  $region19: #{custom_resnet_forward.16} parent=0 // pred_check_branch
    %220 = sbr.rel (0) target = $region21
  $region20: #{custom_resnet_forward.16} parent=0 // pred_region
    _
  $region21: #{custom_resnet_forward.16} parent=0 // pred_fallthru
    _

// kernel: custom_resnet_forward.18
$region0: #{custom_resnet_forward.18}
  #allocation0 [shape = 'u32[]', space=smem, size = 0x4, offset = 0x4, fixed_abs, tag = 'smem constant byte address 0x4 - core index']
  #allocation1 [shape = 'u32[144,128]{1,0:T(1,128)}', space=vmem, size = 0x12000, scoped, tag = 'internal scratch']
  %s0 = inlined_call_operand.vmem [shape: bf16[72,338], index: 0, kind: input, shape index: {}]
  %s1 = inlined_call_operand.vmem [shape: bf16[8,72], index: 1, kind: input, shape index: {}]
  %s2 = inlined_call_operand.vmem [shape: f32[8,1], index: 2, kind: input, shape index: {}]
  %s3 = inlined_call_operand.vmem [shape: f32[8,338], index: 3, kind: input, shape index: {}]
  %s4 = inlined_call_operand.vmem [shape: f32[8,338], index: 4, kind: output, shape index: {}]
  %s5 = sld [smem:[#allocation0]]
  $region26: #{custom_resnet_forward.18} parent=0
    _
  %s7 = ssub.s32 1, %s5
  %s8 = scalar_select 0, %s7, %s5
  // Predicated region
  $region2: #{custom_resnet_forward.18} parent=0 // pred_check
    _
  $region3: #{custom_resnet_forward.18} parent=0 // pred_check_branch
    %10 = sbr.rel (0) target = $region5
  $region4: #{custom_resnet_forward.18} parent=0 // pred_region
    _
  $region5: #{custom_resnet_forward.18} parent=0 // pred_fallthru
    _
  // Predicated region
  $region6: #{custom_resnet_forward.18} parent=0 // pred_check
    _
  $region7: #{custom_resnet_forward.18} parent=0 // pred_check_branch
    %12 = sbr.rel (0) target = $region9
  $region8: #{custom_resnet_forward.18} parent=0 // pred_region
    _
  $region9: #{custom_resnet_forward.18} parent=0 // pred_fallthru
    _
  // Predicated region
  $region10: #{custom_resnet_forward.18} parent=0 // pred_check
    _
  $region11: #{custom_resnet_forward.18} parent=0 // pred_check_branch
    %14 = sbr.rel (0) target = $region13
  $region12: #{custom_resnet_forward.18} parent=0 // pred_region
    _
  $region13: #{custom_resnet_forward.18} parent=0 // pred_fallthru
    _
  // Predicated region
  $region14: #{custom_resnet_forward.18} parent=0 // pred_check
    _
  $region15: #{custom_resnet_forward.18} parent=0 // pred_check_branch
    %16 = sbr.rel (0) target = $region17
  $region16: #{custom_resnet_forward.18} parent=0 // pred_region
    _
  $region17: #{custom_resnet_forward.18} parent=0 // pred_fallthru
    _
  %v18 = vld [vmem:[%s1] sm:$0xf]
  %v19 = vld [vmem:[%s0] sm:$0xff]
  %v20 = vld [vmem:[%s0 + $0x8] sm:$0xf]
  %v21 = vld [vmem:[%s0 + $0xc] sm:$0xff]
  %v22 = vld [vmem:[%s0 + $0x14] sm:$0xf]
  %v23 = vld [vmem:[%s0 + $0x18] sm:$0xff]
  %v24 = vld [vmem:[%s0 + $0x20] sm:$0xf]
  %v25 = vld [vmem:[%s0 + $0x24] sm:$0xff]
  %v26 = vld [vmem:[%s0 + $0x2c] sm:$0xf]
  %v27 = vld [vmem:[%s0 + $0x30] sm:$0xff]
  %v28 = vld [vmem:[%s0 + $0x38] sm:$0xf]
  %v29 = vld [vmem:[%s0 + $0x3c] sm:$0xff]
  %v30 = vld [vmem:[%s0 + $0x44] sm:$0xf]
  %v31 = vld [vmem:[%s0 + $0x48] sm:$0xff]
  %v32 = vld [vmem:[%s0 + $0x50] sm:$0xf]
  %v33 = vld [vmem:[%s0 + $0x54] sm:$0xff]
  %v34 = vld [vmem:[%s0 + $0x5c] sm:$0xf]
  %v35 = vld [vmem:[%s0 + $0x60] sm:$0xff]
  %v36 = vld [vmem:[%s0 + $0x68] sm:$0xf]
  %v37 = vld [vmem:[%s2] sm:$0xff]
  %39 = vset.pattern.permute.xlu0 0
  %40 = vperm.xlu0 %39, %v37
  %v41 = vpop.permute.xlu0 %40
  %v61 = vunpack.c.l.b16 %v19
  %v62 = vunpack.c.h.b16 %v19
  %v63 = vunpack.c.l.b16 %v20
  %v64 = vunpack.c.l.b16 %v21
  %v65 = vunpack.c.h.b16 %v21
  %v66 = vunpack.c.l.b16 %v22
  %v67 = vunpack.c.l.b16 %v23
  %v68 = vunpack.c.h.b16 %v23
  %v69 = vunpack.c.l.b16 %v24
  %v70 = vunpack.c.l.b16 %v25
  %v71 = vunpack.c.h.b16 %v25
  %v72 = vunpack.c.l.b16 %v26
  %v73 = vunpack.c.l.b16 %v27
  %v74 = vunpack.c.h.b16 %v27
  %v75 = vunpack.c.l.b16 %v28
  %v76 = vunpack.c.l.b16 %v29
  %v77 = vunpack.c.h.b16 %v29
  %v78 = vunpack.c.l.b16 %v30
  %v79 = vunpack.c.l.b16 %v31
  %v80 = vunpack.c.h.b16 %v31
  %v81 = vunpack.c.l.b16 %v32
  %v82 = vunpack.c.l.b16 %v33
  %v83 = vunpack.c.h.b16 %v33
  %v84 = vunpack.c.l.b16 %v34
  %v85 = vunpack.c.l.b16 %v35
  %v86 = vunpack.c.h.b16 %v35
  %v87 = vunpack.c.l.b16 %v36
  %v88 = vpack.c.b16 %v64, %v61
  %v89 = vpack.c.b16 %v65, %v62
  %v90 = vpack.c.b16 %v66, %v63
  %v91 = vpack.c.b16 %v70, %v67
  %v92 = vpack.c.b16 %v71, %v68
  %v93 = vpack.c.b16 %v72, %v69
  %v94 = vpack.c.b16 %v76, %v73
  %v95 = vpack.c.b16 %v77, %v74
  %v96 = vpack.c.b16 %v78, %v75
  %v97 = vpack.c.b16 %v82, %v79
  %v98 = vpack.c.b16 %v83, %v80
  %v99 = vpack.c.b16 %v84, %v81
  %v100 = vpack.c.b16 %v85, %v85
  %v101 = vpack.c.b16 %v86, %v86
  %v102 = vpack.c.b16 %v87, %v87
  %vm115 = vcmask 588800
  %v117 = vsel %vm115, %v18, 0
  %vm119 = vcmask 1043456
  %v121 = vsel %vm119, %v100, 0
  %v124 = vsel %vm119, %v101, 0
  %v127 = vsel %vm119, %v102, 0
  %129 = vmatprep.subr.bf16.mxu0 %v89
  %130 = vmatpush1.bf16.msra.mxu0 %v88
  %131 = vmatprep.subr.bf16.mxu0 %v92
  %132 = vmatpush1.bf16.msra.mxu0 %v91
  %133 = vmatprep.subr.bf16.mxu0 %v95
  %134 = vmatpush1.bf16.msra.mxu0 %v94
  %135 = vmatprep.subr.bf16.mxu0 %v98
  %136 = vmatpush1.bf16.msra.mxu0 %v97
  %137 = vmatprep.subr.bf16.mxu0 %v124
  %138 = vmatpush1.bf16.msra.mxu0 %v121
  %139 = vmatprep.subr.bf16.mxu0 0
  %140 = vmatpush1.bf16.msra.mxu0 0
  %141 = vmatprep.subr.bf16.mxu0 0
  %142 = vmatpush1.bf16.msra.mxu0 0
  %143 = vmatprep.subr.bf16.mxu0 0
  %144 = vmatpush1.bf16.msra.mxu0 0
  %145 = vmatprep.subr.bf16.mxu0 0
  %146 = vmatpush1.bf16.msra.mxu0 0
  %147 = vmatprep.subr.bf16.mxu0 0
  %148 = vmatpush1.bf16.msra.mxu0 0
  %149 = vmatprep.subr.bf16.mxu0 0
  %150 = vmatpush1.bf16.msra.mxu0 0
  %151 = vmatprep.subr.bf16.mxu0 0
  %152 = vmatpush1.bf16.msra.mxu0 0
  %153 = vmatprep.subr.bf16.mxu0 0
  %154 = vmatpush1.bf16.msra.mxu0 0
  %155 = vmatprep.subr.bf16.mxu0 0
  %156 = vmatpush1.bf16.msra.mxu0 0
  %157 = vmatprep.subr.bf16.mxu0 0
  %158 = vmatpush1.bf16.msra.mxu0 0
  %159 = vmatprep.subr.bf16.mxu0 0
  %160 = vmatpush1.bf16.msra.mxu0 0
  %161 = vmatprep.mubr.bf16.mxu0 0
  %162 = vmatmul.mubr.bf16.gmra.mrb[0].mxu0 %v117
  %v163 = vpop.f32.mrb[0].mxu0
  %v164 = vadd.f32 %v41, %v163
  %v165 = vpop.f32.mrb[0].mxu0
  %v166 = vadd.f32 %v41, %v165
  %v167 = vpop.f32.mrb[0].mxu0
  %v168 = vpop.f32.mrb[0].mxu0
  %169 = vdwg.mxu0
  %170 = vmatprep.subr.bf16.mxu0 0
  %171 = vmatpush1.bf16.msra.mxu0 %v90
  %172 = vmatprep.subr.bf16.mxu0 0
  %173 = vmatpush1.bf16.msra.mxu0 %v93
  %174 = vmatprep.subr.bf16.mxu0 0
  %175 = vmatpush1.bf16.msra.mxu0 %v96
  %176 = vmatprep.subr.bf16.mxu0 0
  %177 = vmatpush1.bf16.msra.mxu0 %v99
  %178 = vmatprep.subr.bf16.mxu0 0
  %179 = vmatpush1.bf16.msra.mxu0 %v127
  %180 = vmatprep.subr.bf16.mxu0 0
  %181 = vmatpush1.bf16.msra.mxu0 0
  %182 = vmatprep.subr.bf16.mxu0 0
  %183 = vmatpush1.bf16.msra.mxu0 0
  %184 = vmatprep.subr.bf16.mxu0 0
  %185 = vmatpush1.bf16.msra.mxu0 0
  %186 = vmatprep.subr.bf16.mxu0 0
  %187 = vmatpush1.bf16.msra.mxu0 0
  %188 = vmatprep.subr.bf16.mxu0 0
  %189 = vmatpush1.bf16.msra.mxu0 0
  %190 = vmatprep.subr.bf16.mxu0 0
  %191 = vmatpush1.bf16.msra.mxu0 0
  %192 = vmatprep.subr.bf16.mxu0 0
  %193 = vmatpush1.bf16.msra.mxu0 0
  %194 = vmatprep.subr.bf16.mxu0 0
  %195 = vmatpush1.bf16.msra.mxu0 0
  %196 = vmatprep.subr.bf16.mxu0 0
  %197 = vmatpush1.bf16.msra.mxu0 0
  %198 = vmatprep.subr.bf16.mxu0 0
  %199 = vmatpush1.bf16.msra.mxu0 0
  %200 = vmatprep.subr.bf16.mxu0 0
  %201 = vmatpush1.bf16.msra.mxu0 0
  %202 = vmatprep.mubr.bf16.mxu0 0
  %203 = vmatmul.mubr.bf16.gmra.mrb[0].mxu0 %v117
  %v204 = vpop.f32.mrb[0].mxu0
  %v205 = vadd.f32 %v41, %v204
  %v206 = vpop.f32.mrb[0].mxu0
  %v207 = vpop.f32.mrb[0].mxu0
  %v208 = vpop.f32.mrb[0].mxu0
  %209 = vdwg.mxu0
  %v210 = vld [vmem:[%s3] sm:$0xff]
  %v211 = vld [vmem:[%s3 + $0x8] sm:$0xff]
  %v212 = vld [vmem:[%s3 + $0x10] sm:$0xff]
  %v213 = vadd.f32 %v164, %v210
  %v214 = vadd.f32 %v166, %v211
  %v215 = vadd.f32 %v205, %v212
  %v216 = vmul.f32 %v213, 0.01
  %v217 = vmul.f32 %v214, 0.01
  %v218 = vmul.f32 %v215, 0.01
  %v219 = vmax.f32 %v213, %v216
  %v220 = vmax.f32 %v214, %v217
  %v221 = vmax.f32 %v215, %v218
  %222 = vst [vmem:[%s4] sm:$0xff] %v219
  %223 = vst [vmem:[%s4 + $0x8] sm:$0xff] %v220
  %vm224 = vcmask 670720
  %225 = vst.msk [vmem:[%s4 + $0x10] sm:$0xff] %vm224, %v221
  // Predicated region
  $region18: #{custom_resnet_forward.18} parent=0 // pred_check
    _
  $region19: #{custom_resnet_forward.18} parent=0 // pred_check_branch
    %227 = sbr.rel (0) target = $region21
  $region20: #{custom_resnet_forward.18} parent=0 // pred_region
    _
  $region21: #{custom_resnet_forward.18} parent=0 // pred_fallthru
    _
  // Predicated region
  $region22: #{custom_resnet_forward.18} parent=0 // pred_check
    _
  $region23: #{custom_resnet_forward.18} parent=0 // pred_check_branch
    %229 = sbr.rel (0) target = $region25
  $region24: #{custom_resnet_forward.18} parent=0 // pred_region
    _
  $region25: #{custom_resnet_forward.18} parent=0 // pred_fallthru
    _

// kernel: custom_resnet_forward.19
$region0: #{custom_resnet_forward.19}
  #allocation0 [shape = 'u32[]', space=smem, size = 0x4, offset = 0x4, fixed_abs, tag = 'smem constant byte address 0x4 - core index']
  #allocation1 [shape = 'u32[144,128]{1,0:T(1,128)}', space=vmem, size = 0x12000, scoped, tag = 'internal scratch']
  %s0 = inlined_call_operand.vmem [shape: bf16[72,72], index: 0, kind: input, shape index: {}]
  %s1 = inlined_call_operand.vmem [shape: bf16[8,72], index: 1, kind: input, shape index: {}]
  %s2 = inlined_call_operand.vmem [shape: f32[8,1], index: 2, kind: input, shape index: {}]
  %s3 = inlined_call_operand.vmem [shape: f32[8,72], index: 3, kind: output, shape index: {}]
  %s4 = sld [smem:[#allocation0]]
  $region22: #{custom_resnet_forward.19} parent=0
    _
  %s6 = ssub.s32 1, %s4
  %s7 = scalar_select 0, %s6, %s4
  // Predicated region
  $region2: #{custom_resnet_forward.19} parent=0 // pred_check
    _
  $region3: #{custom_resnet_forward.19} parent=0 // pred_check_branch
    %9 = sbr.rel (0) target = $region5
  $region4: #{custom_resnet_forward.19} parent=0 // pred_region
    _
  $region5: #{custom_resnet_forward.19} parent=0 // pred_fallthru
    _
  // Predicated region
  $region6: #{custom_resnet_forward.19} parent=0 // pred_check
    _
  $region7: #{custom_resnet_forward.19} parent=0 // pred_check_branch
    %11 = sbr.rel (0) target = $region9
  $region8: #{custom_resnet_forward.19} parent=0 // pred_region
    _
  $region9: #{custom_resnet_forward.19} parent=0 // pred_fallthru
    _
  // Predicated region
  $region10: #{custom_resnet_forward.19} parent=0 // pred_check
    _
  $region11: #{custom_resnet_forward.19} parent=0 // pred_check_branch
    %13 = sbr.rel (0) target = $region13
  $region12: #{custom_resnet_forward.19} parent=0 // pred_region
    _
  $region13: #{custom_resnet_forward.19} parent=0 // pred_fallthru
    _
  %v15 = vld [vmem:[%s1] sm:$0xf]
  %v16 = vld [vmem:[%s0] sm:$0xf]
  %v17 = vld [vmem:[%s0 + $0x4] sm:$0xf]
  %v18 = vld [vmem:[%s0 + $0x8] sm:$0xf]
  %v19 = vld [vmem:[%s0 + $0xc] sm:$0xf]
  %v20 = vld [vmem:[%s0 + $0x10] sm:$0xf]
  %v21 = vld [vmem:[%s0 + $0x14] sm:$0xf]
  %v22 = vld [vmem:[%s0 + $0x18] sm:$0xf]
  %v23 = vld [vmem:[%s0 + $0x1c] sm:$0xf]
  %v24 = vld [vmem:[%s0 + $0x20] sm:$0xf]
  %v25 = vld [vmem:[%s2] sm:$0xff]
  %27 = vset.pattern.permute.xlu0 0
  %28 = vperm.xlu0 %27, %v25
  %v29 = vpop.permute.xlu0 %28
  %v40 = vunpack.c.l.b16 %v16
  %v41 = vunpack.c.l.b16 %v17
  %v42 = vunpack.c.l.b16 %v18
  %v43 = vunpack.c.l.b16 %v19
  %v44 = vunpack.c.l.b16 %v20
  %v45 = vunpack.c.l.b16 %v21
  %v46 = vunpack.c.l.b16 %v22
  %v47 = vunpack.c.l.b16 %v23
  %v48 = vunpack.c.l.b16 %v24
  %v49 = vpack.c.b16 %v41, %v40
  %v50 = vpack.c.b16 %v43, %v42
  %v51 = vpack.c.b16 %v45, %v44
  %v52 = vpack.c.b16 %v47, %v46
  %v53 = vpack.c.b16 %v48, %v48
  %vm58 = vcmask 588800
  %v60 = vsel %vm58, %v15, 0
  %vm62 = vcmask 1043456
  %v64 = vsel %vm62, %v53, 0
  %66 = vmatprep.subr.bf16.mxu0 0
  %67 = vmatpush1.bf16.msra.mxu0 %v49
  %68 = vmatprep.subr.bf16.mxu0 0
  %69 = vmatpush1.bf16.msra.mxu0 %v50
  %70 = vmatprep.subr.bf16.mxu0 0
  %71 = vmatpush1.bf16.msra.mxu0 %v51
  %72 = vmatprep.subr.bf16.mxu0 0
  %73 = vmatpush1.bf16.msra.mxu0 %v52
  %74 = vmatprep.subr.bf16.mxu0 0
  %75 = vmatpush1.bf16.msra.mxu0 %v64
  %76 = vmatprep.subr.bf16.mxu0 0
  %77 = vmatpush1.bf16.msra.mxu0 0
  %78 = vmatprep.subr.bf16.mxu0 0
  %79 = vmatpush1.bf16.msra.mxu0 0
  %80 = vmatprep.subr.bf16.mxu0 0
  %81 = vmatpush1.bf16.msra.mxu0 0
  %82 = vmatprep.subr.bf16.mxu0 0
  %83 = vmatpush1.bf16.msra.mxu0 0
  %84 = vmatprep.subr.bf16.mxu0 0
  %85 = vmatpush1.bf16.msra.mxu0 0
  %86 = vmatprep.subr.bf16.mxu0 0
  %87 = vmatpush1.bf16.msra.mxu0 0
  %88 = vmatprep.subr.bf16.mxu0 0
  %89 = vmatpush1.bf16.msra.mxu0 0
  %90 = vmatprep.subr.bf16.mxu0 0
  %91 = vmatpush1.bf16.msra.mxu0 0
  %92 = vmatprep.subr.bf16.mxu0 0
  %93 = vmatpush1.bf16.msra.mxu0 0
  %94 = vmatprep.subr.bf16.mxu0 0
  %95 = vmatpush1.bf16.msra.mxu0 0
  %96 = vmatprep.subr.bf16.mxu0 0
  %97 = vmatpush1.bf16.msra.mxu0 0
  %98 = vmatprep.mubr.bf16.mxu0 0
  %99 = vmatmul.mubr.bf16.gmra.mrb[0].mxu0 %v60
  %v100 = vpop.f32.mrb[0].mxu0
  %v101 = vadd.f32 %v29, %v100
  %v102 = vpop.f32.mrb[0].mxu0
  %v103 = vpop.f32.mrb[0].mxu0
  %v104 = vpop.f32.mrb[0].mxu0
  %105 = vdwg.mxu0
  %v106 = vmul.f32 %v101, 0.01
  %v107 = vmax.f32 %v101, %v106
  %108 = vst.msk [vmem:[%s3] sm:$0xff] %vm58, %v107
  // Predicated region
  $region14: #{custom_resnet_forward.19} parent=0 // pred_check
    _
  $region15: #{custom_resnet_forward.19} parent=0 // pred_check_branch
    %110 = sbr.rel (0) target = $region17
  $region16: #{custom_resnet_forward.19} parent=0 // pred_region
    _
  $region17: #{custom_resnet_forward.19} parent=0 // pred_fallthru
    _
  // Predicated region
  $region18: #{custom_resnet_forward.19} parent=0 // pred_check
    _
  $region19: #{custom_resnet_forward.19} parent=0 // pred_check_branch
    %112 = sbr.rel (0) target = $region21
  $region20: #{custom_resnet_forward.19} parent=0 // pred_region
    _
  $region21: #{custom_resnet_forward.19} parent=0 // pred_fallthru
    _

</llo_original>
